<compile_context>
chip_gen: v7x
topology: tpu7x:2x2x1
jax: 0.10.0
libtpu: 0.0.40
codegen_flags: <defaults>
</compile_context>

<pallas_src>
import functools

import jax
import jax.numpy as jnp
from jax.experimental import pallas as pl
from jax.experimental.pallas import tpu as pltpu


# ------------------------------- helpers -------------------------------------

def _round_up(x, m):
    return (x + m - 1) // m * m


def _pad_to(arr, shape, dtype):
    arr = arr.astype(dtype)
    if tuple(arr.shape) == tuple(shape):
        return arr
    out = jnp.zeros(shape, dtype)
    return out.at[tuple(slice(0, s) for s in arr.shape)].set(arr)


_VMEM_LIMIT = 32 * 1024 * 1024  # explicit scoped-VMEM cap (safe on v5e/v6e/v7x)


# --------------------- fused, tiled matmul (bias/act/resid) -------------------

def _matmul_kernel(a_ref, b_ref, bias_ref, o_ref, acc_ref, *, activation):
    @pl.when(pl.program_id(2) == 0)
    def _init():
        acc_ref[...] = jnp.zeros_like(acc_ref)

    acc_ref[...] += jnp.dot(a_ref[...], b_ref[...],
                            preferred_element_type=jnp.float32)

    @pl.when(pl.program_id(2) == pl.num_programs(2) - 1)
    def _fin():
        out = acc_ref[...] + bias_ref[...]
        if activation == "relu":
            out = jnp.maximum(out, 0.0)
        o_ref[...] = out.astype(o_ref.dtype)


def _matmul_resid_kernel(a_ref, b_ref, bias_ref, r_ref, o_ref, acc_ref, *,
                         activation):
    @pl.when(pl.program_id(2) == 0)
    def _init():
        acc_ref[...] = jnp.zeros_like(acc_ref)

    acc_ref[...] += jnp.dot(a_ref[...], b_ref[...],
                            preferred_element_type=jnp.float32)

    @pl.when(pl.program_id(2) == pl.num_programs(2) - 1)
    def _fin():
        out = acc_ref[...] + bias_ref[...] + r_ref[...].astype(jnp.float32)
        if activation == "relu":
            out = jnp.maximum(out, 0.0)
        o_ref[...] = out.astype(o_ref.dtype)


def matmul_fused(a, b, bias, resid=None, activation="none",
                 out_dtype=jnp.float32, tm=256, tn=256, tk=512):
    """out = act(a @ b + bias [+ resid]); bf16 MXU operands, f32 accumulate."""
    M, K = a.shape
    K2, N = b.shape
    assert K == K2
    tm = min(tm, _round_up(M, 8))
    tn = min(tn, _round_up(N, 128))
    tk = min(tk, _round_up(K, 128))
    Mp, Kp, Np = _round_up(M, tm), _round_up(K, tk), _round_up(N, tn)

    a_p = _pad_to(a, (Mp, Kp), jnp.bfloat16)
    b_p = _pad_to(b, (Kp, Np), jnp.bfloat16)
    bias_p = _pad_to(bias.reshape(1, N), (1, Np), jnp.float32)

    in_specs = [
        pl.BlockSpec((tm, tk), lambda i, j, k: (i, k)),
        pl.BlockSpec((tk, tn), lambda i, j, k: (k, j)),
        pl.BlockSpec((1, tn), lambda i, j, k: (0, j)),
    ]
    operands = [a_p, b_p, bias_p]
    if resid is not None:
        r_p = _pad_to(resid, (Mp, Np), jnp.float32)
        in_specs.append(pl.BlockSpec((tm, tn), lambda i, j, k: (i, j)))
        operands.append(r_p)
        kernel = functools.partial(_matmul_resid_kernel, activation=activation)
    else:
        kernel = functools.partial(_matmul_kernel, activation=activation)

    out = pl.pallas_call(
        kernel,
        out_shape=jax.ShapeDtypeStruct((Mp, Np), out_dtype),
        grid=(Mp // tm, Np // tn, Kp // tk),
        in_specs=in_specs,
        out_specs=pl.BlockSpec((tm, tn), lambda i, j, k: (i, j)),
        scratch_shapes=[pltpu.VMEM((tm, tn), jnp.float32)],
        compiler_params=pltpu.CompilerParams(
            dimension_semantics=("parallel", "parallel", "arbitrary"),
            vmem_limit_bytes=_VMEM_LIMIT),
    )(*operands)
    return out[:M, :N]


# -------------------- LayerNorm fused into the fc1 matmul ---------------------

def _ln_matmul_kernel(x_ref, g_ref, bt_ref, w_ref, bias_ref, o_ref, *,
                      activation, eps):
    x = x_ref[...].astype(jnp.float32)
    mu = jnp.mean(x, axis=-1, keepdims=True)
    xc = x - mu
    var = jnp.mean(xc * xc, axis=-1, keepdims=True)
    xn = xc * jax.lax.rsqrt(var + eps) * g_ref[...] + bt_ref[...]
    acc = jnp.dot(xn.astype(jnp.bfloat16), w_ref[...],
                  preferred_element_type=jnp.float32)
    acc = acc + bias_ref[...]
    if activation == "relu":
        acc = jnp.maximum(acc, 0.0)
    o_ref[...] = acc.astype(o_ref.dtype)


def ln_matmul_fused(x, gamma, beta, w, bias, activation="none",
                    out_dtype=jnp.float32, eps=1e-5, tm=256, tn=256):
    """out = act(LayerNorm(x) @ w + bias). LN needs full rows -> full-K tiles."""
    M, K = x.shape
    K2, N = w.shape
    assert K == K2
    tm = min(tm, _round_up(M, 8))
    tn = min(tn, _round_up(N, 128))
    Mp, Np = _round_up(M, tm), _round_up(N, tn)

    x_p = _pad_to(x, (Mp, K), jnp.float32)
    w_p = _pad_to(w, (K, Np), jnp.bfloat16)
    bias_p = _pad_to(bias.reshape(1, N), (1, Np), jnp.float32)
    g2 = gamma.reshape(1, K).astype(jnp.float32)
    b2 = beta.reshape(1, K).astype(jnp.float32)

    out = pl.pallas_call(
        functools.partial(_ln_matmul_kernel, activation=activation, eps=eps),
        out_shape=jax.ShapeDtypeStruct((Mp, Np), out_dtype),
        grid=(Mp // tm, Np // tn),
        in_specs=[
            pl.BlockSpec((tm, K), lambda i, j: (i, 0)),
            pl.BlockSpec((1, K), lambda i, j: (0, 0)),
            pl.BlockSpec((1, K), lambda i, j: (0, 0)),
            pl.BlockSpec((K, tn), lambda i, j: (0, j)),
            pl.BlockSpec((1, tn), lambda i, j: (0, j)),
        ],
        out_specs=pl.BlockSpec((tm, tn), lambda i, j: (i, j)),
        compiler_params=pltpu.CompilerParams(
            dimension_semantics=("parallel", "parallel"),
            vmem_limit_bytes=_VMEM_LIMIT),
    )(x_p, g2, b2, w_p, bias_p)
    return out[:M, :N]


# ----------------- attention: all heads per batch, merged output --------------

def _attention_kernel(q_ref, k_ref, v_ref, o_ref, *, scale, nh, hd):
    q = q_ref[0]          # (N, C) bf16
    k = k_ref[0]          # (M, C) bf16
    v = v_ref[0]          # (M, C) bf16
    outs = []
    for hh in range(nh):
        sl = slice(hh * hd, (hh + 1) * hd)
        # fold the softmax scale into q (N*hd mults instead of N*M)
        qh = (q[:, sl].astype(jnp.float32) * scale).astype(jnp.bfloat16)
        kh = k[:, sl]
        vh = v[:, sl]
        # contract over head_dim without transposing k (trans_b form)
        s = jax.lax.dot_general(qh, kh, (((1,), (1,)), ((), ())),
                                preferred_element_type=jnp.float32)  # (N, M)
        s = s - jnp.max(s, axis=-1, keepdims=True)
        p = jnp.exp(s)
        p = p * pl.reciprocal(jnp.sum(p, axis=-1, keepdims=True), approx=True)
        outs.append(jnp.dot(p.astype(jnp.bfloat16), vh,
                            preferred_element_type=jnp.float32))
    # single lane-dense store in merged-head layout (N, C)
    o_ref[0] = jnp.concatenate(outs, axis=-1).astype(o_ref.dtype)


def attention(q, k, v, scale, num_heads):
    B, N, C = q.shape
    _, M, _ = k.shape
    hd = C // num_heads
    return pl.pallas_call(
        functools.partial(_attention_kernel, scale=scale, nh=num_heads, hd=hd),
        out_shape=jax.ShapeDtypeStruct((B, N, C), jnp.float32),
        grid=(B,),
        in_specs=[
            pl.BlockSpec((1, N, C), lambda i: (i, 0, 0)),
            pl.BlockSpec((1, M, C), lambda i: (i, 0, 0)),
            pl.BlockSpec((1, M, C), lambda i: (i, 0, 0)),
        ],
        out_specs=pl.BlockSpec((1, N, C), lambda i: (i, 0, 0)),
        compiler_params=pltpu.CompilerParams(
            dimension_semantics=("parallel",),
            vmem_limit_bytes=_VMEM_LIMIT),
    )(q, k, v)


# ------------------------------ conv glue -------------------------------------

def im2col(x_img, stride):
    """x_img: (B, H, W, Cin) NHWC (bf16), 3x3 kernel, padding=1."""
    B, H, W, Cin = x_img.shape
    xp = jnp.pad(x_img, ((0, 0), (1, 1), (1, 1), (0, 0)))
    Ho = (H - 1) // stride + 1
    Wo = (W - 1) // stride + 1
    cols = []
    for dy in range(3):
        for dx in range(3):
            cols.append(xp[:, dy:dy + stride * Ho:stride,
                           dx:dx + stride * Wo:stride, :])
    patches = jnp.concatenate(cols, axis=-1)          # (B, Ho, Wo, 9*Cin)
    return patches.reshape(B * Ho * Wo, 9 * Cin), Ho, Wo


def conv_bn(x_img, w_flat, bias, stride):
    """Conv2d(3x3, pad=1, no bias) + folded BatchNorm2d + 'b c h w -> b (h w) c'."""
    patches, Ho, Wo = im2col(x_img, stride)
    out = matmul_fused(patches, w_flat, bias, out_dtype=jnp.bfloat16)
    B = x_img.shape[0]
    return out.reshape(B, Ho * Wo, w_flat.shape[1])


# ------------------------------ parameters ------------------------------------

def make_proj_params(key, cin, cout, eps=1e-5):
    k1, k2, k3, k4, k5 = jax.random.split(key, 5)
    w = jax.random.normal(k1, (3, 3, cin, cout), jnp.float32) * 0.05
    gamma = 1.0 + 0.1 * jax.random.normal(k2, (cout,), jnp.float32)
    beta = 0.1 * jax.random.normal(k3, (cout,), jnp.float32)
    rmean = 0.1 * jax.random.normal(k4, (cout,), jnp.float32)
    rvar = jnp.abs(1.0 + 0.1 * jax.random.normal(k5, (cout,), jnp.float32))
    scale = gamma / jnp.sqrt(rvar + eps)
    w_folded = (w * scale).reshape(9 * cin, cout)     # fold BN into conv weight
    b_folded = beta - rmean * scale
    return (w_folded, b_folded)


def make_linear_params(key, cin, cout):
    k1, k2 = jax.random.split(key)
    w = jax.random.normal(k1, (cin, cout), jnp.float32) * 0.05
    b = 0.05 * jax.random.normal(k2, (cout,), jnp.float32)
    return w, b


def make_block_params(key, dim, mlp_ratio=4.0):
    keys = jax.random.split(key, 14)
    hidden = int(dim * mlp_ratio)
    p = {
        "query1": make_proj_params(keys[0], dim, dim),
        "query2": make_proj_params(keys[1], dim, dim),
        "key1": make_proj_params(keys[2], dim, dim),
        "key2": make_proj_params(keys[3], dim, dim),
        "value1": make_proj_params(keys[4], dim, dim),
        "value2": make_proj_params(keys[5], dim, dim),
    }
    p["proj_en_w"], p["proj_en_b"] = make_linear_params(keys[6], dim, dim)
    p["proj_de_w"], p["proj_de_b"] = make_linear_params(keys[7], dim, dim)
    p["fc1_w"], p["fc1_b"] = make_linear_params(keys[8], dim, hidden)
    p["fc2_w"], p["fc2_b"] = make_linear_params(keys[9], hidden, dim)
    p["ln1_g"] = 1.0 + 0.1 * jax.random.normal(keys[10], (dim,), jnp.float32)
    p["ln1_b"] = 0.1 * jax.random.normal(keys[11], (dim,), jnp.float32)
    p["ln2_g"] = 1.0 + 0.1 * jax.random.normal(keys[12], (dim,), jnp.float32)
    p["ln2_b"] = 0.1 * jax.random.normal(keys[13], (dim,), jnp.float32)
    return p


# ------------------------------ Block forward ---------------------------------

def block_forward(params, x, y, *, num_heads, h, w):
    """num_heads / h / w are STATIC python ints (fixed via functools.partial)."""
    B, N, C = x.shape
    assert C % num_heads == 0 and h * w == N and h % 2 == 0 and w % 2 == 0
    scale = float(C) ** (-0.5)            # reference: self.scale = dim_out ** -0.5

    # 'b (h w) c -> b c h w' == NHWC image view; bf16 to halve im2col traffic.
    x_img = x.reshape(B, h, w, C).astype(jnp.bfloat16)
    y_img = y.reshape(B, h, w, C).astype(jnp.bfloat16)

    q_dec = conv_bn(x_img, *params["query1"], stride=1)   # (B, N, C) bf16
    q_enc = conv_bn(y_img, *params["query2"], stride=1)
    k_dec = conv_bn(x_img, *params["key1"], stride=2)      # (B, N//4, C) bf16
    k_enc = conv_bn(y_img, *params["key2"], stride=2)
    v_dec = conv_bn(x_img, *params["value1"], stride=2)
    v_enc = conv_bn(y_img, *params["value2"], stride=2)

    # q_decoder attends to k/v_encoder (-> encoder branch) and vice versa.
    attn_x = attention(q_dec, k_enc, v_enc, scale, num_heads)   # (B, N, C) f32
    attn_y = attention(q_enc, k_dec, v_dec, scale, num_heads)

    x2d = x.reshape(B * N, C)
    y2d = y.reshape(B * N, C)

    # output projection with residual add fused (drop_path/dropout = identity)
    x1 = matmul_fused(attn_x.reshape(B * N, C), params["proj_en_w"],
                      params["proj_en_b"], resid=x2d)
    y1 = matmul_fused(attn_y.reshape(B * N, C), params["proj_de_w"],
                      params["proj_de_b"], resid=y2d)

    # MLP (shared fc1/fc2, per-branch LayerNorm): LN fused into fc1,
    # residual fused into fc2 epilogue.
    hx = ln_matmul_fused(x1, params["ln1_g"], params["ln1_b"],
                         params["fc1_w"], params["fc1_b"],
                         activation="relu", out_dtype=jnp.bfloat16)
    x2 = matmul_fused(hx, params["fc2_w"], params["fc2_b"], resid=x1)

    hy = ln_matmul_fused(y1, params["ln2_g"], params["ln2_b"],
                         params["fc1_w"], params["fc1_b"],
                         activation="relu", out_dtype=jnp.bfloat16)
    y2 = matmul_fused(hy, params["fc2_w"], params["fc2_b"], resid=y1)

    return x2.reshape(B, N, C), y2.reshape(B, N, C)


# ---------------------------------- main --------------------------------------

if __name__ == "__main__":
    # Small shapes consistent with the module: dim_in == dim_out (residuals),
    # k_v_stride == 2 (k/v reshaped to N//4 tokens), h*w == N.
    B, C, nh = 2, 32, 4
    h = w = 8
    N = h * w

    key = jax.random.PRNGKey(0)
    kx, ky, kp = jax.random.split(key, 3)
    x = jax.random.normal(kx, (B, N, C), jnp.float32)
    y = jax.random.normal(ky, (B, N, C), jnp.float32)
    params = make_block_params(kp, C, mlp_ratio=4.0)

    # num_heads / h / w are static (python ints), not traced -> fixes the
    # previous "JitTracer in reshape" failure.
    fwd = jax.jit(functools.partial(block_forward, num_heads=nh, h=h, w=w))
    out_x, out_y = fwd(params, x, y)
    jax.block_until_ready((out_x, out_y))

    assert out_x.shape == (B, N, C) and out_y.shape == (B, N, C)
    assert jnp.all(jnp.isfinite(out_x)) and jnp.all(jnp.isfinite(out_y))
    print("KERNEL_OK")
</pallas_src>

<mosaic_0001>
module attributes {stable_mosaic.version = 11 : i64} {
  func.func @_matmul_kernel(%arg0: i32, %arg1: i32, %arg2: i32, %arg3: memref<128x384xbf16, #tpu.memory_space<vmem>>, %arg4: memref<384x128xbf16, #tpu.memory_space<vmem>>, %arg5: memref<1x128xf32, #tpu.memory_space<vmem>>, %arg6: memref<128x128xbf16, #tpu.memory_space<vmem>>, %arg7: memref<128x128xf32, #tpu.memory_space<vmem>>) attributes {dimension_semantics = [#tpu.dimension_semantics<parallel>, #tpu.dimension_semantics<parallel>, #tpu.dimension_semantics<arbitrary>], iteration_bounds = array<i64: 1, 1, 1>, scalar_prefetch = 0 : i64, scratch_operands = 1 : i64, tpu.core_type = #tpu.core_type<tc>, window_params = [{transform_indices = @transform_0, window_bounds = array<i64: 128, 384>}, {transform_indices = @transform_1, window_bounds = array<i64: 384, 128>}, {transform_indices = @transform_2, window_bounds = array<i64: 1, 128>}, {transform_indices = @transform_3, window_bounds = array<i64: 128, 128>}]} {
    %c0_i32 = arith.constant 0 : i32
    %0 = arith.cmpi eq, %arg2, %c0_i32 : i32
    %1 = arith.extui %0 : i1 to i32
    %c0_i32_0 = arith.constant 0 : i32
    %2 = arith.cmpi ne, %1, %c0_i32_0 : i32
    scf.if %2 {
      %cst_10 = arith.constant 0.000000e+00 : f32
      %12 = vector.broadcast %cst_10 : f32 to vector<128x128xf32>
      %c0_11 = arith.constant 0 : index
      %c0_12 = arith.constant 0 : index
      %13 = vector.load %arg7[%c0_11, %c0_12] : memref<128x128xf32, #tpu.memory_space<vmem>>, vector<128x128xf32>
      tpu.vector_store %arg7[%c0_11, %c0_12], %12 {strides = array<i32>} : memref<128x128xf32, #tpu.memory_space<vmem>>, vector<128x128xf32>,
    } else {
    }
    %c0 = arith.constant 0 : index
    %c0_1 = arith.constant 0 : index
    %3 = vector.load %arg7[%c0, %c0_1] : memref<128x128xf32, #tpu.memory_space<vmem>>, vector<128x128xf32>
    %c0_2 = arith.constant 0 : index
    %c0_3 = arith.constant 0 : index
    %4 = vector.load %arg3[%c0_2, %c0_3] : memref<128x384xbf16, #tpu.memory_space<vmem>>, vector<128x384xbf16>
    %c0_4 = arith.constant 0 : index
    %c0_5 = arith.constant 0 : index
    %5 = vector.load %arg4[%c0_4, %c0_5] : memref<384x128xbf16, #tpu.memory_space<vmem>>, vector<384x128xbf16>
    %cst = arith.constant dense<0.000000e+00> : vector<128x128xf32>
    %6 = tpu.matmul %4, %5, %cst {dimension_numbers = #tpu.dot_dimension_numbers<[1], [0], [0], [1], [0, 0, 1, 1], [], []>} : vector<128x384xbf16>, vector<384x128xbf16>, vector<128x128xf32> -> vector<128x128xf32>
    %7 = arith.addf %3, %6 : vector<128x128xf32>
    %c0_6 = arith.constant 0 : index
    %c0_7 = arith.constant 0 : index
    %8 = vector.load %arg7[%c0_6, %c0_7] : memref<128x128xf32, #tpu.memory_space<vmem>>, vector<128x128xf32>
    tpu.vector_store %arg7[%c0_6, %c0_7], %7 {strides = array<i32>} : memref<128x128xf32, #tpu.memory_space<vmem>>, vector<128x128xf32>,
    %c0_i32_8 = arith.constant 0 : i32
    %9 = arith.cmpi eq, %arg2, %c0_i32_8 : i32
    %10 = arith.extui %9 : i1 to i32
    %c0_i32_9 = arith.constant 0 : i32
    %11 = arith.cmpi ne, %10, %c0_i32_9 : i32
    scf.if %11 {
      %c0_10 = arith.constant 0 : index
      %c0_11 = arith.constant 0 : index
      %12 = vector.load %arg7[%c0_10, %c0_11] : memref<128x128xf32, #tpu.memory_space<vmem>>, vector<128x128xf32>
      %c0_12 = arith.constant 0 : index
      %c0_13 = arith.constant 0 : index
      %13 = vector.load %arg5[%c0_12, %c0_13] : memref<1x128xf32, #tpu.memory_space<vmem>>, vector<1x128xf32>
      %14 = vector.broadcast %13 : vector<1x128xf32> to vector<128x128xf32>
      %15 = arith.addf %12, %14 : vector<128x128xf32>
      %16 = arith.truncf %15 : vector<128x128xf32> to vector<128x128xbf16>
      %c0_14 = arith.constant 0 : index
      %c0_15 = arith.constant 0 : index
      %17 = vector.load %arg6[%c0_14, %c0_15] : memref<128x128xbf16, #tpu.memory_space<vmem>>, vector<128x128xbf16>
      tpu.vector_store %arg6[%c0_14, %c0_15], %16 {strides = array<i32>} : memref<128x128xbf16, #tpu.memory_space<vmem>>, vector<128x128xbf16>,
    } else {
    }
    return
  }
  func.func @transform_0(%arg0: i32, %arg1: i32, %arg2: i32) -> (i32, i32) {
    %c0_i32 = arith.constant 0 : i32
    return %arg0, %arg2 : i32, i32
  }
  func.func @transform_1(%arg0: i32, %arg1: i32, %arg2: i32) -> (i32, i32) {
    %c0_i32 = arith.constant 0 : i32
    return %arg2, %arg1 : i32, i32
  }
  func.func @transform_2(%arg0: i32, %arg1: i32, %arg2: i32) -> (i32, i32) {
    %c0_i32 = arith.constant 0 : i32
    %c0_i32_0 = arith.constant 0 : i32
    return %c0_i32, %arg1 : i32, i32
  }
  func.func @transform_3(%arg0: i32, %arg1: i32, %arg2: i32) -> (i32, i32) {
    %c0_i32 = arith.constant 0 : i32
    return %arg0, %arg1 : i32, i32
  }
}

module attributes {stable_mosaic.version = 11 : i64} {
  func.func @_matmul_kernel(%arg0: i32, %arg1: i32, %arg2: i32, %arg3: memref<32x384xbf16, #tpu.memory_space<vmem>>, %arg4: memref<384x128xbf16, #tpu.memory_space<vmem>>, %arg5: memref<1x128xf32, #tpu.memory_space<vmem>>, %arg6: memref<32x128xbf16, #tpu.memory_space<vmem>>, %arg7: memref<32x128xf32, #tpu.memory_space<vmem>>) attributes {dimension_semantics = [#tpu.dimension_semantics<parallel>, #tpu.dimension_semantics<parallel>, #tpu.dimension_semantics<arbitrary>], iteration_bounds = array<i64: 1, 1, 1>, scalar_prefetch = 0 : i64, scratch_operands = 1 : i64, tpu.core_type = #tpu.core_type<tc>, window_params = [{transform_indices = @transform_0, window_bounds = array<i64: 32, 384>}, {transform_indices = @transform_1, window_bounds = array<i64: 384, 128>}, {transform_indices = @transform_2, window_bounds = array<i64: 1, 128>}, {transform_indices = @transform_3, window_bounds = array<i64: 32, 128>}]} {
    %c0_i32 = arith.constant 0 : i32
    %0 = arith.cmpi eq, %arg2, %c0_i32 : i32
    %1 = arith.extui %0 : i1 to i32
    %c0_i32_0 = arith.constant 0 : i32
    %2 = arith.cmpi ne, %1, %c0_i32_0 : i32
    scf.if %2 {
      %cst_10 = arith.constant 0.000000e+00 : f32
      %12 = vector.broadcast %cst_10 : f32 to vector<32x128xf32>
      %c0_11 = arith.constant 0 : index
      %c0_12 = arith.constant 0 : index
      %13 = vector.load %arg7[%c0_11, %c0_12] : memref<32x128xf32, #tpu.memory_space<vmem>>, vector<32x128xf32>
      tpu.vector_store %arg7[%c0_11, %c0_12], %12 {strides = array<i32>} : memref<32x128xf32, #tpu.memory_space<vmem>>, vector<32x128xf32>,
    } else {
    }
    %c0 = arith.constant 0 : index
    %c0_1 = arith.constant 0 : index
    %3 = vector.load %arg7[%c0, %c0_1] : memref<32x128xf32, #tpu.memory_space<vmem>>, vector<32x128xf32>
    %c0_2 = arith.constant 0 : index
    %c0_3 = arith.constant 0 : index
    %4 = vector.load %arg3[%c0_2, %c0_3] : memref<32x384xbf16, #tpu.memory_space<vmem>>, vector<32x384xbf16>
    %c0_4 = arith.constant 0 : index
    %c0_5 = arith.constant 0 : index
    %5 = vector.load %arg4[%c0_4, %c0_5] : memref<384x128xbf16, #tpu.memory_space<vmem>>, vector<384x128xbf16>
    %cst = arith.constant dense<0.000000e+00> : vector<32x128xf32>
    %6 = tpu.matmul %4, %5, %cst {dimension_numbers = #tpu.dot_dimension_numbers<[1], [0], [0], [1], [0, 0, 1, 1], [], []>} : vector<32x384xbf16>, vector<384x128xbf16>, vector<32x128xf32> -> vector<32x128xf32>
    %7 = arith.addf %3, %6 : vector<32x128xf32>
    %c0_6 = arith.constant 0 : index
    %c0_7 = arith.constant 0 : index
    %8 = vector.load %arg7[%c0_6, %c0_7] : memref<32x128xf32, #tpu.memory_space<vmem>>, vector<32x128xf32>
    tpu.vector_store %arg7[%c0_6, %c0_7], %7 {strides = array<i32>} : memref<32x128xf32, #tpu.memory_space<vmem>>, vector<32x128xf32>,
    %c0_i32_8 = arith.constant 0 : i32
    %9 = arith.cmpi eq, %arg2, %c0_i32_8 : i32
    %10 = arith.extui %9 : i1 to i32
    %c0_i32_9 = arith.constant 0 : i32
    %11 = arith.cmpi ne, %10, %c0_i32_9 : i32
    scf.if %11 {
      %c0_10 = arith.constant 0 : index
      %c0_11 = arith.constant 0 : index
      %12 = vector.load %arg7[%c0_10, %c0_11] : memref<32x128xf32, #tpu.memory_space<vmem>>, vector<32x128xf32>
      %c0_12 = arith.constant 0 : index
      %c0_13 = arith.constant 0 : index
      %13 = vector.load %arg5[%c0_12, %c0_13] : memref<1x128xf32, #tpu.memory_space<vmem>>, vector<1x128xf32>
      %14 = vector.broadcast %13 : vector<1x128xf32> to vector<32x128xf32>
      %15 = arith.addf %12, %14 : vector<32x128xf32>
      %16 = arith.truncf %15 : vector<32x128xf32> to vector<32x128xbf16>
      %c0_14 = arith.constant 0 : index
      %c0_15 = arith.constant 0 : index
      %17 = vector.load %arg6[%c0_14, %c0_15] : memref<32x128xbf16, #tpu.memory_space<vmem>>, vector<32x128xbf16>
      tpu.vector_store %arg6[%c0_14, %c0_15], %16 {strides = array<i32>} : memref<32x128xbf16, #tpu.memory_space<vmem>>, vector<32x128xbf16>,
    } else {
    }
    return
  }
  func.func @transform_0(%arg0: i32, %arg1: i32, %arg2: i32) -> (i32, i32) {
    %c0_i32 = arith.constant 0 : i32
    return %arg0, %arg2 : i32, i32
  }
  func.func @transform_1(%arg0: i32, %arg1: i32, %arg2: i32) -> (i32, i32) {
    %c0_i32 = arith.constant 0 : i32
    return %arg2, %arg1 : i32, i32
  }
  func.func @transform_2(%arg0: i32, %arg1: i32, %arg2: i32) -> (i32, i32) {
    %c0_i32 = arith.constant 0 : i32
    %c0_i32_0 = arith.constant 0 : i32
    return %c0_i32, %arg1 : i32, i32
  }
  func.func @transform_3(%arg0: i32, %arg1: i32, %arg2: i32) -> (i32, i32) {
    %c0_i32 = arith.constant 0 : i32
    return %arg0, %arg1 : i32, i32
  }
}

module attributes {stable_mosaic.version = 11 : i64} {
  func.func @_attention_kernel(%arg0: i32, %arg1: memref<1x64x32xbf16, #tpu.memory_space<vmem>>, %arg2: memref<1x16x32xbf16, #tpu.memory_space<vmem>>, %arg3: memref<1x16x32xbf16, #tpu.memory_space<vmem>>, %arg4: memref<1x64x32xf32, #tpu.memory_space<vmem>>) attributes {dimension_semantics = [#tpu.dimension_semantics<parallel>], iteration_bounds = array<i64: 2>, scalar_prefetch = 0 : i64, scratch_operands = 0 : i64, tpu.core_type = #tpu.core_type<tc>, window_params = [{transform_indices = @transform_0, window_bounds = array<i64: 1, 64, 32>}, {transform_indices = @transform_1, window_bounds = array<i64: 1, 16, 32>}, {transform_indices = @transform_2, window_bounds = array<i64: 1, 16, 32>}, {transform_indices = @transform_3, window_bounds = array<i64: 1, 64, 32>}]} {
    %c0 = arith.constant 0 : index
    %c0_0 = arith.constant 0 : index
    %c0_1 = arith.constant 0 : index
    %0 = vector.load %arg1[%c0, %c0_0, %c0_1] : memref<1x64x32xbf16, #tpu.memory_space<vmem>>, vector<1x64x32xbf16>
    %1 = vector.shape_cast %0 : vector<1x64x32xbf16> to vector<64x32xbf16>
    %c0_2 = arith.constant 0 : index
    %c0_3 = arith.constant 0 : index
    %c0_4 = arith.constant 0 : index
    %2 = vector.load %arg2[%c0_2, %c0_3, %c0_4] : memref<1x16x32xbf16, #tpu.memory_space<vmem>>, vector<1x16x32xbf16>
    %3 = vector.shape_cast %2 : vector<1x16x32xbf16> to vector<16x32xbf16>
    %c0_5 = arith.constant 0 : index
    %c0_6 = arith.constant 0 : index
    %c0_7 = arith.constant 0 : index
    %4 = vector.load %arg3[%c0_5, %c0_6, %c0_7] : memref<1x16x32xbf16, #tpu.memory_space<vmem>>, vector<1x16x32xbf16>
    %5 = vector.shape_cast %4 : vector<1x16x32xbf16> to vector<16x32xbf16>
    %6 = vector.extract_strided_slice %1 {offsets = [0, 0], sizes = [64, 8], strides = [1, 1]} : vector<64x32xbf16> to vector<64x8xbf16>
    %7 = arith.extf %6 : vector<64x8xbf16> to vector<64x8xf32>
    %cst = arith.constant 0.176776692 : f32
    %8 = vector.broadcast %cst : f32 to vector<64x8xf32>
    %9 = arith.mulf %7, %8 : vector<64x8xf32>
    %10 = arith.truncf %9 : vector<64x8xf32> to vector<64x8xbf16>
    %11 = vector.extract_strided_slice %3 {offsets = [0, 0], sizes = [16, 8], strides = [1, 1]} : vector<16x32xbf16> to vector<16x8xbf16>
    %12 = vector.extract_strided_slice %5 {offsets = [0, 0], sizes = [16, 8], strides = [1, 1]} : vector<16x32xbf16> to vector<16x8xbf16>
    %cst_8 = arith.constant dense<0.000000e+00> : vector<64x16xf32>
    %13 = tpu.matmul %10, %11, %cst_8 {dimension_numbers = #tpu.dot_dimension_numbers<[1], [1], [0], [0], [0, 0, 1, 0], [], []>} : vector<64x8xbf16>, vector<16x8xbf16>, vector<64x16xf32> -> vector<64x16xf32>
    %cst_9 = arith.constant dense<0xFF800000> : vector<64xf32>
    %14 = vector.multi_reduction <maximumf>, %13, %cst_9 [1] : vector<64x16xf32> to vector<64xf32>
    %15 = vector.shape_cast %14 : vector<64xf32> to vector<64x1xf32>
    %16 = vector.broadcast %15 : vector<64x1xf32> to vector<64x16xf32>
    %17 = arith.subf %13, %16 : vector<64x16xf32>
    %18 = math.exp %17 : vector<64x16xf32>
    %cst_10 = arith.constant dense<0.000000e+00> : vector<64xf32>
    %19 = vector.multi_reduction <add>, %18, %cst_10 [1] : vector<64x16xf32> to vector<64xf32>
    %20 = vector.shape_cast %19 : vector<64xf32> to vector<64x1xf32>
    %21 = tpu.reciprocal %20 {approx = true} : vector<64x1xf32> -> vector<64x1xf32>
    %22 = vector.broadcast %21 : vector<64x1xf32> to vector<64x16xf32>
    %23 = arith.mulf %18, %22 : vector<64x16xf32>
    %24 = arith.truncf %23 : vector<64x16xf32> to vector<64x16xbf16>
    %cst_11 = arith.constant dense<0.000000e+00> : vector<64x8xf32>
    %25 = tpu.matmul %24, %12, %cst_11 {dimension_numbers = #tpu.dot_dimension_numbers<[1], [0], [0], [1], [0, 0, 1, 1], [], []>} : vector<64x16xbf16>, vector<16x8xbf16>, vector<64x8xf32> -> vector<64x8xf32>
    %26 = vector.extract_strided_slice %1 {offsets = [0, 8], sizes = [64, 8], strides = [1, 1]} : vector<64x32xbf16> to vector<64x8xbf16>
    %27 = arith.extf %26 : vector<64x8xbf16> to vector<64x8xf32>
    %cst_12 = arith.constant 0.176776692 : f32
    %28 = vector.broadcast %cst_12 : f32 to vector<64x8xf32>
    %29 = arith.mulf %27, %28 : vector<64x8xf32>
    %30 = arith.truncf %29 : vector<64x8xf32> to vector<64x8xbf16>
    %31 = vector.extract_strided_slice %3 {offsets = [0, 8], sizes = [16, 8], strides = [1, 1]} : vector<16x32xbf16> to vector<16x8xbf16>
    %32 = vector.extract_strided_slice %5 {offsets = [0, 8], sizes = [16, 8], strides = [1, 1]} : vector<16x32xbf16> to vector<16x8xbf16>
    %cst_13 = arith.constant dense<0.000000e+00> : vector<64x16xf32>
    %33 = tpu.matmul %30, %31, %cst_13 {dimension_numbers = #tpu.dot_dimension_numbers<[1], [1], [0], [0], [0, 0, 1, 0], [], []>} : vector<64x8xbf16>, vector<16x8xbf16>, vector<64x16xf32> -> vector<64x16xf32>
    %cst_14 = arith.constant dense<0xFF800000> : vector<64xf32>
    %34 = vector.multi_reduction <maximumf>, %33, %cst_14 [1] : vector<64x16xf32> to vector<64xf32>
    %35 = vector.shape_cast %34 : vector<64xf32> to vector<64x1xf32>
    %36 = vector.broadcast %35 : vector<64x1xf32> to vector<64x16xf32>
    %37 = arith.subf %33, %36 : vector<64x16xf32>
    %38 = math.exp %37 : vector<64x16xf32>
    %cst_15 = arith.constant dense<0.000000e+00> : vector<64xf32>
    %39 = vector.multi_reduction <add>, %38, %cst_15 [1] : vector<64x16xf32> to vector<64xf32>
    %40 = vector.shape_cast %39 : vector<64xf32> to vector<64x1xf32>
    %41 = tpu.reciprocal %40 {approx = true} : vector<64x1xf32> -> vector<64x1xf32>
    %42 = vector.broadcast %41 : vector<64x1xf32> to vector<64x16xf32>
    %43 = arith.mulf %38, %42 : vector<64x16xf32>
    %44 = arith.truncf %43 : vector<64x16xf32> to vector<64x16xbf16>
    %cst_16 = arith.constant dense<0.000000e+00> : vector<64x8xf32>
    %45 = tpu.matmul %44, %32, %cst_16 {dimension_numbers = #tpu.dot_dimension_numbers<[1], [0], [0], [1], [0, 0, 1, 1], [], []>} : vector<64x16xbf16>, vector<16x8xbf16>, vector<64x8xf32> -> vector<64x8xf32>
    %46 = vector.extract_strided_slice %1 {offsets = [0, 16], sizes = [64, 8], strides = [1, 1]} : vector<64x32xbf16> to vector<64x8xbf16>
    %47 = arith.extf %46 : vector<64x8xbf16> to vector<64x8xf32>
    %cst_17 = arith.constant 0.176776692 : f32
    %48 = vector.broadcast %cst_17 : f32 to vector<64x8xf32>
    %49 = arith.mulf %47, %48 : vector<64x8xf32>
    %50 = arith.truncf %49 : vector<64x8xf32> to vector<64x8xbf16>
    %51 = vector.extract_strided_slice %3 {offsets = [0, 16], sizes = [16, 8], strides = [1, 1]} : vector<16x32xbf16> to vector<16x8xbf16>
    %52 = vector.extract_strided_slice %5 {offsets = [0, 16], sizes = [16, 8], strides = [1, 1]} : vector<16x32xbf16> to vector<16x8xbf16>
    %cst_18 = arith.constant dense<0.000000e+00> : vector<64x16xf32>
    %53 = tpu.matmul %50, %51, %cst_18 {dimension_numbers = #tpu.dot_dimension_numbers<[1], [1], [0], [0], [0, 0, 1, 0], [], []>} : vector<64x8xbf16>, vector<16x8xbf16>, vector<64x16xf32> -> vector<64x16xf32>
    %cst_19 = arith.constant dense<0xFF800000> : vector<64xf32>
    %54 = vector.multi_reduction <maximumf>, %53, %cst_19 [1] : vector<64x16xf32> to vector<64xf32>
    %55 = vector.shape_cast %54 : vector<64xf32> to vector<64x1xf32>
    %56 = vector.broadcast %55 : vector<64x1xf32> to vector<64x16xf32>
    %57 = arith.subf %53, %56 : vector<64x16xf32>
    %58 = math.exp %57 : vector<64x16xf32>
    %cst_20 = arith.constant dense<0.000000e+00> : vector<64xf32>
    %59 = vector.multi_reduction <add>, %58, %cst_20 [1] : vector<64x16xf32> to vector<64xf32>
    %60 = vector.shape_cast %59 : vector<64xf32> to vector<64x1xf32>
    %61 = tpu.reciprocal %60 {approx = true} : vector<64x1xf32> -> vector<64x1xf32>
    %62 = vector.broadcast %61 : vector<64x1xf32> to vector<64x16xf32>
    %63 = arith.mulf %58, %62 : vector<64x16xf32>
    %64 = arith.truncf %63 : vector<64x16xf32> to vector<64x16xbf16>
    %cst_21 = arith.constant dense<0.000000e+00> : vector<64x8xf32>
    %65 = tpu.matmul %64, %52, %cst_21 {dimension_numbers = #tpu.dot_dimension_numbers<[1], [0], [0], [1], [0, 0, 1, 1], [], []>} : vector<64x16xbf16>, vector<16x8xbf16>, vector<64x8xf32> -> vector<64x8xf32>
    %66 = vector.extract_strided_slice %1 {offsets = [0, 24], sizes = [64, 8], strides = [1, 1]} : vector<64x32xbf16> to vector<64x8xbf16>
    %67 = arith.extf %66 : vector<64x8xbf16> to vector<64x8xf32>
    %cst_22 = arith.constant 0.176776692 : f32
    %68 = vector.broadcast %cst_22 : f32 to vector<64x8xf32>
    %69 = arith.mulf %67, %68 : vector<64x8xf32>
    %70 = arith.truncf %69 : vector<64x8xf32> to vector<64x8xbf16>
    %71 = vector.extract_strided_slice %3 {offsets = [0, 24], sizes = [16, 8], strides = [1, 1]} : vector<16x32xbf16> to vector<16x8xbf16>
    %72 = vector.extract_strided_slice %5 {offsets = [0, 24], sizes = [16, 8], strides = [1, 1]} : vector<16x32xbf16> to vector<16x8xbf16>
    %cst_23 = arith.constant dense<0.000000e+00> : vector<64x16xf32>
    %73 = tpu.matmul %70, %71, %cst_23 {dimension_numbers = #tpu.dot_dimension_numbers<[1], [1], [0], [0], [0, 0, 1, 0], [], []>} : vector<64x8xbf16>, vector<16x8xbf16>, vector<64x16xf32> -> vector<64x16xf32>
    %cst_24 = arith.constant dense<0xFF800000> : vector<64xf32>
    %74 = vector.multi_reduction <maximumf>, %73, %cst_24 [1] : vector<64x16xf32> to vector<64xf32>
    %75 = vector.shape_cast %74 : vector<64xf32> to vector<64x1xf32>
    %76 = vector.broadcast %75 : vector<64x1xf32> to vector<64x16xf32>
    %77 = arith.subf %73, %76 : vector<64x16xf32>
    %78 = math.exp %77 : vector<64x16xf32>
    %cst_25 = arith.constant dense<0.000000e+00> : vector<64xf32>
    %79 = vector.multi_reduction <add>, %78, %cst_25 [1] : vector<64x16xf32> to vector<64xf32>
    %80 = vector.shape_cast %79 : vector<64xf32> to vector<64x1xf32>
    %81 = tpu.reciprocal %80 {approx = true} : vector<64x1xf32> -> vector<64x1xf32>
    %82 = vector.broadcast %81 : vector<64x1xf32> to vector<64x16xf32>
    %83 = arith.mulf %78, %82 : vector<64x16xf32>
    %84 = arith.truncf %83 : vector<64x16xf32> to vector<64x16xbf16>
    %cst_26 = arith.constant dense<0.000000e+00> : vector<64x8xf32>
    %85 = tpu.matmul %84, %72, %cst_26 {dimension_numbers = #tpu.dot_dimension_numbers<[1], [0], [0], [1], [0, 0, 1, 1], [], []>} : vector<64x16xbf16>, vector<16x8xbf16>, vector<64x8xf32> -> vector<64x8xf32>
    %86 = tpu.concatenate %25, %45, %65, %85 in 1 : vector<64x8xf32>, vector<64x8xf32>, vector<64x8xf32>, vector<64x8xf32> -> vector<64x32xf32>
    %c0_27 = arith.constant 0 : index
    %c0_28 = arith.constant 0 : index
    %c0_29 = arith.constant 0 : index
    %87 = vector.load %arg4[%c0_27, %c0_28, %c0_29] : memref<1x64x32xf32, #tpu.memory_space<vmem>>, vector<1x64x32xf32>
    %88 = vector.shape_cast %87 : vector<1x64x32xf32> to vector<64x32xf32>
    %89 = vector.shape_cast %86 : vector<64x32xf32> to vector<1x64x32xf32>
    tpu.vector_store %arg4[%c0_27, %c0_28, %c0_29], %89 {strides = array<i32>} : memref<1x64x32xf32, #tpu.memory_space<vmem>>, vector<1x64x32xf32>,
    return
  }
  func.func @transform_0(%arg0: i32) -> (i32, i32, i32) {
    %c0_i32 = arith.constant 0 : i32
    %c0_i32_0 = arith.constant 0 : i32
    %c0_i32_1 = arith.constant 0 : i32
    return %arg0, %c0_i32, %c0_i32_0 : i32, i32, i32
  }
  func.func @transform_1(%arg0: i32) -> (i32, i32, i32) {
    %c0_i32 = arith.constant 0 : i32
    %c0_i32_0 = arith.constant 0 : i32
    %c0_i32_1 = arith.constant 0 : i32
    return %arg0, %c0_i32, %c0_i32_0 : i32, i32, i32
  }
  func.func @transform_2(%arg0: i32) -> (i32, i32, i32) {
    %c0_i32 = arith.constant 0 : i32
    %c0_i32_0 = arith.constant 0 : i32
    %c0_i32_1 = arith.constant 0 : i32
    return %arg0, %c0_i32, %c0_i32_0 : i32, i32, i32
  }
  func.func @transform_3(%arg0: i32) -> (i32, i32, i32) {
    %c0_i32 = arith.constant 0 : i32
    %c0_i32_0 = arith.constant 0 : i32
    %c0_i32_1 = arith.constant 0 : i32
    return %arg0, %c0_i32, %c0_i32_0 : i32, i32, i32
  }
}

module attributes {stable_mosaic.version = 11 : i64} {
  func.func @_matmul_resid_kernel(%arg0: i32, %arg1: i32, %arg2: i32, %arg3: memref<128x128xbf16, #tpu.memory_space<vmem>>, %arg4: memref<128x128xbf16, #tpu.memory_space<vmem>>, %arg5: memref<1x128xf32, #tpu.memory_space<vmem>>, %arg6: memref<128x128xf32, #tpu.memory_space<vmem>>, %arg7: memref<128x128xf32, #tpu.memory_space<vmem>>, %arg8: memref<128x128xf32, #tpu.memory_space<vmem>>) attributes {dimension_semantics = [#tpu.dimension_semantics<parallel>, #tpu.dimension_semantics<parallel>, #tpu.dimension_semantics<arbitrary>], iteration_bounds = array<i64: 1, 1, 1>, scalar_prefetch = 0 : i64, scratch_operands = 1 : i64, tpu.core_type = #tpu.core_type<tc>, window_params = [{transform_indices = @transform_0, window_bounds = array<i64: 128, 128>}, {transform_indices = @transform_1, window_bounds = array<i64: 128, 128>}, {transform_indices = @transform_2, window_bounds = array<i64: 1, 128>}, {transform_indices = @transform_3, window_bounds = array<i64: 128, 128>}, {transform_indices = @transform_4, window_bounds = array<i64: 128, 128>}]} {
    %c0_i32 = arith.constant 0 : i32
    %0 = arith.cmpi eq, %arg2, %c0_i32 : i32
    %1 = arith.extui %0 : i1 to i32
    %c0_i32_0 = arith.constant 0 : i32
    %2 = arith.cmpi ne, %1, %c0_i32_0 : i32
    scf.if %2 {
      %cst_10 = arith.constant 0.000000e+00 : f32
      %12 = vector.broadcast %cst_10 : f32 to vector<128x128xf32>
      %c0_11 = arith.constant 0 : index
      %c0_12 = arith.constant 0 : index
      %13 = vector.load %arg8[%c0_11, %c0_12] : memref<128x128xf32, #tpu.memory_space<vmem>>, vector<128x128xf32>
      tpu.vector_store %arg8[%c0_11, %c0_12], %12 {strides = array<i32>} : memref<128x128xf32, #tpu.memory_space<vmem>>, vector<128x128xf32>,
    } else {
    }
    %c0 = arith.constant 0 : index
    %c0_1 = arith.constant 0 : index
    %3 = vector.load %arg8[%c0, %c0_1] : memref<128x128xf32, #tpu.memory_space<vmem>>, vector<128x128xf32>
    %c0_2 = arith.constant 0 : index
    %c0_3 = arith.constant 0 : index
    %4 = vector.load %arg3[%c0_2, %c0_3] : memref<128x128xbf16, #tpu.memory_space<vmem>>, vector<128x128xbf16>
    %c0_4 = arith.constant 0 : index
    %c0_5 = arith.constant 0 : index
    %5 = vector.load %arg4[%c0_4, %c0_5] : memref<128x128xbf16, #tpu.memory_space<vmem>>, vector<128x128xbf16>
    %cst = arith.constant dense<0.000000e+00> : vector<128x128xf32>
    %6 = tpu.matmul %4, %5, %cst {dimension_numbers = #tpu.dot_dimension_numbers<[1], [0], [0], [1], [0, 0, 1, 1], [], []>} : vector<128x128xbf16>, vector<128x128xbf16>, vector<128x128xf32> -> vector<128x128xf32>
    %7 = arith.addf %3, %6 : vector<128x128xf32>
    %c0_6 = arith.constant 0 : index
    %c0_7 = arith.constant 0 : index
    %8 = vector.load %arg8[%c0_6, %c0_7] : memref<128x128xf32, #tpu.memory_space<vmem>>, vector<128x128xf32>
    tpu.vector_store %arg8[%c0_6, %c0_7], %7 {strides = array<i32>} : memref<128x128xf32, #tpu.memory_space<vmem>>, vector<128x128xf32>,
    %c0_i32_8 = arith.constant 0 : i32
    %9 = arith.cmpi eq, %arg2, %c0_i32_8 : i32
    %10 = arith.extui %9 : i1 to i32
    %c0_i32_9 = arith.constant 0 : i32
    %11 = arith.cmpi ne, %10, %c0_i32_9 : i32
    scf.if %11 {
      %c0_10 = arith.constant 0 : index
      %c0_11 = arith.constant 0 : index
      %12 = vector.load %arg8[%c0_10, %c0_11] : memref<128x128xf32, #tpu.memory_space<vmem>>, vector<128x128xf32>
      %c0_12 = arith.constant 0 : index
      %c0_13 = arith.constant 0 : index
      %13 = vector.load %arg5[%c0_12, %c0_13] : memref<1x128xf32, #tpu.memory_space<vmem>>, vector<1x128xf32>
      %14 = vector.broadcast %13 : vector<1x128xf32> to vector<128x128xf32>
      %15 = arith.addf %12, %14 : vector<128x128xf32>
      %c0_14 = arith.constant 0 : index
      %c0_15 = arith.constant 0 : index
      %16 = vector.load %arg6[%c0_14, %c0_15] : memref<128x128xf32, #tpu.memory_space<vmem>>, vector<128x128xf32>
      %17 = arith.addf %15, %16 : vector<128x128xf32>
      %c0_16 = arith.constant 0 : index
      %c0_17 = arith.constant 0 : index
      %18 = vector.load %arg7[%c0_16, %c0_17] : memref<128x128xf32, #tpu.memory_space<vmem>>, vector<128x128xf32>
      tpu.vector_store %arg7[%c0_16, %c0_17], %17 {strides = array<i32>} : memref<128x128xf32, #tpu.memory_space<vmem>>, vector<128x128xf32>,
    } else {
    }
    return
  }
  func.func @transform_0(%arg0: i32, %arg1: i32, %arg2: i32) -> (i32, i32) {
    %c0_i32 = arith.constant 0 : i32
    return %arg0, %arg2 : i32, i32
  }
  func.func @transform_1(%arg0: i32, %arg1: i32, %arg2: i32) -> (i32, i32) {
    %c0_i32 = arith.constant 0 : i32
    return %arg2, %arg1 : i32, i32
  }
  func.func @transform_2(%arg0: i32, %arg1: i32, %arg2: i32) -> (i32, i32) {
    %c0_i32 = arith.constant 0 : i32
    %c0_i32_0 = arith.constant 0 : i32
    return %c0_i32, %arg1 : i32, i32
  }
  func.func @transform_3(%arg0: i32, %arg1: i32, %arg2: i32) -> (i32, i32) {
    %c0_i32 = arith.constant 0 : i32
    return %arg0, %arg1 : i32, i32
  }
  func.func @transform_4(%arg0: i32, %arg1: i32, %arg2: i32) -> (i32, i32) {
    %c0_i32 = arith.constant 0 : i32
    return %arg0, %arg1 : i32, i32
  }
}

module attributes {stable_mosaic.version = 11 : i64} {
  func.func @_ln_matmul_kernel(%arg0: i32, %arg1: i32, %arg2: memref<128x32xf32, #tpu.memory_space<vmem>>, %arg3: memref<1x32xf32, #tpu.memory_space<vmem>>, %arg4: memref<1x32xf32, #tpu.memory_space<vmem>>, %arg5: memref<32x128xbf16, #tpu.memory_space<vmem>>, %arg6: memref<1x128xf32, #tpu.memory_space<vmem>>, %arg7: memref<128x128xbf16, #tpu.memory_space<vmem>>) attributes {dimension_semantics = [#tpu.dimension_semantics<parallel>, #tpu.dimension_semantics<parallel>], iteration_bounds = array<i64: 1, 1>, scalar_prefetch = 0 : i64, scratch_operands = 0 : i64, tpu.core_type = #tpu.core_type<tc>, window_params = [{transform_indices = @transform_0, window_bounds = array<i64: 128, 32>}, {pipeline_mode = #tpu.pipeline_mode<synchronous>, transform_indices = @transform_1, window_bounds = array<i64: 1, 32>}, {pipeline_mode = #tpu.pipeline_mode<synchronous>, transform_indices = @transform_2, window_bounds = array<i64: 1, 32>}, {transform_indices = @transform_3, window_bounds = array<i64: 32, 128>}, {transform_indices = @transform_4, window_bounds = array<i64: 1, 128>}, {transform_indices = @transform_5, window_bounds = array<i64: 128, 128>}]} {
    %c0 = arith.constant 0 : index
    %c0_0 = arith.constant 0 : index
    %0 = vector.load %arg2[%c0, %c0_0] : memref<128x32xf32, #tpu.memory_space<vmem>>, vector<128x32xf32>
    %cst = arith.constant dense<0.000000e+00> : vector<128xf32>
    %1 = vector.multi_reduction <add>, %0, %cst [1] : vector<128x32xf32> to vector<128xf32>
    %2 = vector.shape_cast %1 : vector<128xf32> to vector<128x1xf32>
    %cst_1 = arith.constant 3.200000e+01 : f32
    %3 = vector.broadcast %cst_1 : f32 to vector<128x1xf32>
    %4 = arith.divf %2, %3 : vector<128x1xf32>
    %5 = vector.broadcast %4 : vector<128x1xf32> to vector<128x32xf32>
    %6 = arith.subf %0, %5 : vector<128x32xf32>
    %7 = arith.mulf %6, %6 : vector<128x32xf32>
    %cst_2 = arith.constant dense<0.000000e+00> : vector<128xf32>
    %8 = vector.multi_reduction <add>, %7, %cst_2 [1] : vector<128x32xf32> to vector<128xf32>
    %9 = vector.shape_cast %8 : vector<128xf32> to vector<128x1xf32>
    %cst_3 = arith.constant 3.200000e+01 : f32
    %10 = vector.broadcast %cst_3 : f32 to vector<128x1xf32>
    %11 = arith.divf %9, %10 : vector<128x1xf32>
    %cst_4 = arith.constant 9.99999974E-6 : f32
    %12 = vector.broadcast %cst_4 : f32 to vector<128x1xf32>
    %13 = arith.addf %11, %12 : vector<128x1xf32>
    %14 = math.rsqrt %13 : vector<128x1xf32>
    %15 = vector.broadcast %14 : vector<128x1xf32> to vector<128x32xf32>
    %16 = arith.mulf %6, %15 : vector<128x32xf32>
    %c0_5 = arith.constant 0 : index
    %c0_6 = arith.constant 0 : index
    %17 = vector.load %arg3[%c0_5, %c0_6] : memref<1x32xf32, #tpu.memory_space<vmem>>, vector<1x32xf32>
    %18 = vector.broadcast %17 : vector<1x32xf32> to vector<128x32xf32>
    %19 = arith.mulf %16, %18 : vector<128x32xf32>
    %c0_7 = arith.constant 0 : index
    %c0_8 = arith.constant 0 : index
    %20 = vector.load %arg4[%c0_7, %c0_8] : memref<1x32xf32, #tpu.memory_space<vmem>>, vector<1x32xf32>
    %21 = vector.broadcast %20 : vector<1x32xf32> to vector<128x32xf32>
    %22 = arith.addf %19, %21 : vector<128x32xf32>
    %23 = arith.truncf %22 : vector<128x32xf32> to vector<128x32xbf16>
    %c0_9 = arith.constant 0 : index
    %c0_10 = arith.constant 0 : index
    %24 = vector.load %arg5[%c0_9, %c0_10] : memref<32x128xbf16, #tpu.memory_space<vmem>>, vector<32x128xbf16>
    %cst_11 = arith.constant dense<0.000000e+00> : vector<128x128xf32>
    %25 = tpu.matmul %23, %24, %cst_11 {dimension_numbers = #tpu.dot_dimension_numbers<[1], [0], [0], [1], [0, 0, 1, 1], [], []>} : vector<128x32xbf16>, vector<32x128xbf16>, vector<128x128xf32> -> vector<128x128xf32>
    %c0_12 = arith.constant 0 : index
    %c0_13 = arith.constant 0 : index
    %26 = vector.load %arg6[%c0_12, %c0_13] : memref<1x128xf32, #tpu.memory_space<vmem>>, vector<1x128xf32>
    %27 = vector.broadcast %26 : vector<1x128xf32> to vector<128x128xf32>
    %28 = arith.addf %25, %27 : vector<128x128xf32>
    %cst_14 = arith.constant 0.000000e+00 : f32
    %29 = vector.broadcast %cst_14 : f32 to vector<128x128xf32>
    %30 = arith.maximumf %28, %29 : vector<128x128xf32>
    %31 = arith.truncf %30 : vector<128x128xf32> to vector<128x128xbf16>
    %c0_15 = arith.constant 0 : index
    %c0_16 = arith.constant 0 : index
    %32 = vector.load %arg7[%c0_15, %c0_16] : memref<128x128xbf16, #tpu.memory_space<vmem>>, vector<128x128xbf16>
    tpu.vector_store %arg7[%c0_15, %c0_16], %31 {strides = array<i32>} : memref<128x128xbf16, #tpu.memory_space<vmem>>, vector<128x128xbf16>,
    return
  }
  func.func @transform_0(%arg0: i32, %arg1: i32) -> (i32, i32) {
    %c0_i32 = arith.constant 0 : i32
    %c0_i32_0 = arith.constant 0 : i32
    return %arg0, %c0_i32 : i32, i32
  }
  func.func @transform_1(%arg0: i32, %arg1: i32) -> (i32, i32) {
    %c0_i32 = arith.constant 0 : i32
    %c0_i32_0 = arith.constant 0 : i32
    %c0_i32_1 = arith.constant 0 : i32
    return %c0_i32, %c0_i32_0 : i32, i32
  }
  func.func @transform_2(%arg0: i32, %arg1: i32) -> (i32, i32) {
    %c0_i32 = arith.constant 0 : i32
    %c0_i32_0 = arith.constant 0 : i32
    %c0_i32_1 = arith.constant 0 : i32
    return %c0_i32, %c0_i32_0 : i32, i32
  }
  func.func @transform_3(%arg0: i32, %arg1: i32) -> (i32, i32) {
    %c0_i32 = arith.constant 0 : i32
    %c0_i32_0 = arith.constant 0 : i32
    return %c0_i32, %arg1 : i32, i32
  }
  func.func @transform_4(%arg0: i32, %arg1: i32) -> (i32, i32) {
    %c0_i32 = arith.constant 0 : i32
    %c0_i32_0 = arith.constant 0 : i32
    return %c0_i32, %arg1 : i32, i32
  }
  func.func @transform_5(%arg0: i32, %arg1: i32) -> (i32, i32) {
    %c0_i32 = arith.constant 0 : i32
    return %arg0, %arg1 : i32, i32
  }
}

</mosaic_0001>

<llo_original>
// kernel: block_forward.14
$region0: #{block_forward.14}
  #allocation0 [shape = 'u32[]', space=smem, size = 0x4, offset = 0x4, fixed_abs, tag = 'smem constant byte address 0x4 - core index']
  #allocation1 [shape = 'u32[144,128]{1,0:T(1,128)}', space=vmem, size = 0x12000, scoped, tag = 'internal scratch']
  #allocation2 [shape = 'f32[128,128]{1,0:T(8,128)}', space=vmem, size = 0x10000, scoped, tag = 'scratch operand']
  %s0 = inlined_call_operand.vmem [shape: bf16[128,384], index: 0, kind: input, shape index: {}]
  %s1 = inlined_call_operand.vmem [shape: bf16[384,128], index: 1, kind: input, shape index: {}]
  %s2 = inlined_call_operand.vmem [shape: f32[1,128], index: 2, kind: input, shape index: {}]
  %s3 = inlined_call_operand.vmem [shape: bf16[128,128], index: 3, kind: output, shape index: {}]
  %s4 = sld [smem:[#allocation0]]
  $region30: #{block_forward.14} parent=0
    _
  %s6 = ssub.s32 1, %s4
  %s7 = scalar_select 0, %s6, %s4
  // Predicated region
  $region2: #{block_forward.14} parent=0 // pred_check
    _
  $region3: #{block_forward.14} parent=0 // pred_check_branch
    %9 = sbr.rel (0) target = $region5
  $region4: #{block_forward.14} parent=0 // pred_region
    _
  $region5: #{block_forward.14} parent=0 // pred_fallthru
    _
  // Predicated region
  $region6: #{block_forward.14} parent=0 // pred_check
    _
  $region7: #{block_forward.14} parent=0 // pred_check_branch
    %11 = sbr.rel (0) target = $region9
  $region8: #{block_forward.14} parent=0 // pred_region
    _
  $region9: #{block_forward.14} parent=0 // pred_fallthru
    _
  // Predicated region
  $region10: #{block_forward.14} parent=0 // pred_check
    _
  $region11: #{block_forward.14} parent=0 // pred_check_branch
    %13 = sbr.rel (0) target = $region13
  $region12: #{block_forward.14} parent=0 // pred_region
    _
  $region13: #{block_forward.14} parent=0 // pred_fallthru
    _
  %p15 = scmp.eq.s32.totalorder 0, 0
  // Predicated region
  $region14: #{block_forward.14} parent=0 // pred_check
    %p16 = pneg %p15
  $region15: #{block_forward.14} parent=0 // pred_check_branch
    %18 = sbr.rel (%p16) target = $region17
  $region16: #{block_forward.14} parent=0 // pred_region
    %19 = vst [vmem:[#allocation2] sm:$0xff] 0.0
    %20 = vst [vmem:[#allocation2 + $0x8] sm:$0xff] 0.0
    %21 = vst [vmem:[#allocation2 + $0x10] sm:$0xff] 0.0
    %22 = vst [vmem:[#allocation2 + $0x18] sm:$0xff] 0.0
    %23 = vst [vmem:[#allocation2 + $0x20] sm:$0xff] 0.0
    %24 = vst [vmem:[#allocation2 + $0x28] sm:$0xff] 0.0
    %25 = vst [vmem:[#allocation2 + $0x30] sm:$0xff] 0.0
    %26 = vst [vmem:[#allocation2 + $0x38] sm:$0xff] 0.0
    %27 = vst [vmem:[#allocation2 + $0x40] sm:$0xff] 0.0
    %28 = vst [vmem:[#allocation2 + $0x48] sm:$0xff] 0.0
    %29 = vst [vmem:[#allocation2 + $0x50] sm:$0xff] 0.0
    %30 = vst [vmem:[#allocation2 + $0x58] sm:$0xff] 0.0
    %31 = vst [vmem:[#allocation2 + $0x60] sm:$0xff] 0.0
    %32 = vst [vmem:[#allocation2 + $0x68] sm:$0xff] 0.0
    %33 = vst [vmem:[#allocation2 + $0x70] sm:$0xff] 0.0
    %34 = vst [vmem:[#allocation2 + $0x78] sm:$0xff] 0.0
  $region17: #{block_forward.14} parent=0 // pred_fallthru
    _
  %v35 = vld [vmem:[#allocation2] sm:$0xff]
  %v36 = vld [vmem:[#allocation2 + $0x8] sm:$0xff]
  %v37 = vld [vmem:[#allocation2 + $0x10] sm:$0xff]
  %v38 = vld [vmem:[#allocation2 + $0x18] sm:$0xff]
  %v39 = vld [vmem:[#allocation2 + $0x20] sm:$0xff]
  %v40 = vld [vmem:[#allocation2 + $0x28] sm:$0xff]
  %v41 = vld [vmem:[#allocation2 + $0x30] sm:$0xff]
  %v42 = vld [vmem:[#allocation2 + $0x38] sm:$0xff]
  %v43 = vld [vmem:[#allocation2 + $0x40] sm:$0xff]
  %v44 = vld [vmem:[#allocation2 + $0x48] sm:$0xff]
  %v45 = vld [vmem:[#allocation2 + $0x50] sm:$0xff]
  %v46 = vld [vmem:[#allocation2 + $0x58] sm:$0xff]
  %v47 = vld [vmem:[#allocation2 + $0x60] sm:$0xff]
  %v48 = vld [vmem:[#allocation2 + $0x68] sm:$0xff]
  %v49 = vld [vmem:[#allocation2 + $0x70] sm:$0xff]
  %v50 = vld [vmem:[#allocation2 + $0x78] sm:$0xff]
  %v51 = vld [vmem:[%s0] sm:$0xff]
  %v52 = vld [vmem:[%s0 + $0x8] sm:$0xf]
  %v53 = vld [vmem:[%s0 + $0xc] sm:$0xff]
  %v54 = vld [vmem:[%s0 + $0x14] sm:$0xf]
  %v55 = vld [vmem:[%s0 + $0x18] sm:$0xff]
  %v56 = vld [vmem:[%s0 + $0x20] sm:$0xf]
  %v57 = vld [vmem:[%s0 + $0x24] sm:$0xff]
  %v58 = vld [vmem:[%s0 + $0x2c] sm:$0xf]
  %v59 = vld [vmem:[%s0 + $0x30] sm:$0xff]
  %v60 = vld [vmem:[%s0 + $0x38] sm:$0xf]
  %v61 = vld [vmem:[%s0 + $0x3c] sm:$0xff]
  %v62 = vld [vmem:[%s0 + $0x44] sm:$0xf]
  %v63 = vld [vmem:[%s0 + $0x48] sm:$0xff]
  %v64 = vld [vmem:[%s0 + $0x50] sm:$0xf]
  %v65 = vld [vmem:[%s0 + $0x54] sm:$0xff]
  %v66 = vld [vmem:[%s0 + $0x5c] sm:$0xf]
  %v67 = vld [vmem:[%s0 + $0x60] sm:$0xff]
  %v68 = vld [vmem:[%s0 + $0x68] sm:$0xf]
  %v69 = vld [vmem:[%s0 + $0x6c] sm:$0xff]
  %v70 = vld [vmem:[%s0 + $0x74] sm:$0xf]
  %v71 = vld [vmem:[%s0 + $0x78] sm:$0xff]
  %v72 = vld [vmem:[%s0 + $0x80] sm:$0xf]
  %v73 = vld [vmem:[%s0 + $0x84] sm:$0xff]
  %v74 = vld [vmem:[%s0 + $0x8c] sm:$0xf]
  %v75 = vld [vmem:[%s0 + $0x90] sm:$0xff]
  %v76 = vld [vmem:[%s0 + $0x98] sm:$0xf]
  %v77 = vld [vmem:[%s0 + $0x9c] sm:$0xff]
  %v78 = vld [vmem:[%s0 + $0xa4] sm:$0xf]
  %v79 = vld [vmem:[%s0 + $0xa8] sm:$0xff]
  %v80 = vld [vmem:[%s0 + $0xb0] sm:$0xf]
  %v81 = vld [vmem:[%s0 + $0xb4] sm:$0xff]
  %v82 = vld [vmem:[%s0 + $0xbc] sm:$0xf]
  %v83 = vld [vmem:[%s1] sm:$0xf]
  %v84 = vld [vmem:[%s1 + $0x4] sm:$0xf]
  %v85 = vld [vmem:[%s1 + $0x8] sm:$0xf]
  %v86 = vld [vmem:[%s1 + $0xc] sm:$0xf]
  %v87 = vld [vmem:[%s1 + $0x10] sm:$0xf]
  %v88 = vld [vmem:[%s1 + $0x14] sm:$0xf]
  %v89 = vld [vmem:[%s1 + $0x18] sm:$0xf]
  %v90 = vld [vmem:[%s1 + $0x1c] sm:$0xf]
  %v91 = vld [vmem:[%s1 + $0x20] sm:$0xf]
  %v92 = vld [vmem:[%s1 + $0x24] sm:$0xf]
  %v93 = vld [vmem:[%s1 + $0x28] sm:$0xf]
  %v94 = vld [vmem:[%s1 + $0x2c] sm:$0xf]
  %v95 = vld [vmem:[%s1 + $0x30] sm:$0xf]
  %v96 = vld [vmem:[%s1 + $0x34] sm:$0xf]
  %v97 = vld [vmem:[%s1 + $0x38] sm:$0xf]
  %v98 = vld [vmem:[%s1 + $0x3c] sm:$0xf]
  %v99 = vld [vmem:[%s1 + $0x40] sm:$0xf]
  %v100 = vld [vmem:[%s1 + $0x44] sm:$0xf]
  %v101 = vld [vmem:[%s1 + $0x48] sm:$0xf]
  %v102 = vld [vmem:[%s1 + $0x4c] sm:$0xf]
  %v103 = vld [vmem:[%s1 + $0x50] sm:$0xf]
  %v104 = vld [vmem:[%s1 + $0x54] sm:$0xf]
  %v105 = vld [vmem:[%s1 + $0x58] sm:$0xf]
  %v106 = vld [vmem:[%s1 + $0x5c] sm:$0xf]
  %v107 = vld [vmem:[%s1 + $0x60] sm:$0xf]
  %v108 = vld [vmem:[%s1 + $0x64] sm:$0xf]
  %v109 = vld [vmem:[%s1 + $0x68] sm:$0xf]
  %v110 = vld [vmem:[%s1 + $0x6c] sm:$0xf]
  %v111 = vld [vmem:[%s1 + $0x70] sm:$0xf]
  %v112 = vld [vmem:[%s1 + $0x74] sm:$0xf]
  %v113 = vld [vmem:[%s1 + $0x78] sm:$0xf]
  %v114 = vld [vmem:[%s1 + $0x7c] sm:$0xf]
  %v115 = vld [vmem:[%s1 + $0x80] sm:$0xf]
  %v116 = vld [vmem:[%s1 + $0x84] sm:$0xf]
  %v117 = vld [vmem:[%s1 + $0x88] sm:$0xf]
  %v118 = vld [vmem:[%s1 + $0x8c] sm:$0xf]
  %v119 = vld [vmem:[%s1 + $0x90] sm:$0xf]
  %v120 = vld [vmem:[%s1 + $0x94] sm:$0xf]
  %v121 = vld [vmem:[%s1 + $0x98] sm:$0xf]
  %v122 = vld [vmem:[%s1 + $0x9c] sm:$0xf]
  %v123 = vld [vmem:[%s1 + $0xa0] sm:$0xf]
  %v124 = vld [vmem:[%s1 + $0xa4] sm:$0xf]
  %v125 = vld [vmem:[%s1 + $0xa8] sm:$0xf]
  %v126 = vld [vmem:[%s1 + $0xac] sm:$0xf]
  %v127 = vld [vmem:[%s1 + $0xb0] sm:$0xf]
  %v128 = vld [vmem:[%s1 + $0xb4] sm:$0xf]
  %v129 = vld [vmem:[%s1 + $0xb8] sm:$0xf]
  %v130 = vld [vmem:[%s1 + $0xbc] sm:$0xf]
  %v163 = vunpack.c.l.b16 %v51
  %v164 = vunpack.c.h.b16 %v51
  %v165 = vunpack.c.l.b16 %v52
  %v166 = vunpack.c.l.b16 %v53
  %v167 = vunpack.c.h.b16 %v53
  %v168 = vunpack.c.l.b16 %v54
  %v169 = vunpack.c.l.b16 %v55
  %v170 = vunpack.c.h.b16 %v55
  %v171 = vunpack.c.l.b16 %v56
  %v172 = vunpack.c.l.b16 %v57
  %v173 = vunpack.c.h.b16 %v57
  %v174 = vunpack.c.l.b16 %v58
  %v175 = vunpack.c.l.b16 %v59
  %v176 = vunpack.c.h.b16 %v59
  %v177 = vunpack.c.l.b16 %v60
  %v178 = vunpack.c.l.b16 %v61
  %v179 = vunpack.c.h.b16 %v61
  %v180 = vunpack.c.l.b16 %v62
  %v181 = vunpack.c.l.b16 %v63
  %v182 = vunpack.c.h.b16 %v63
  %v183 = vunpack.c.l.b16 %v64
  %v184 = vunpack.c.l.b16 %v65
  %v185 = vunpack.c.h.b16 %v65
  %v186 = vunpack.c.l.b16 %v66
  %v187 = vunpack.c.l.b16 %v67
  %v188 = vunpack.c.h.b16 %v67
  %v189 = vunpack.c.l.b16 %v68
  %v190 = vunpack.c.l.b16 %v69
  %v191 = vunpack.c.h.b16 %v69
  %v192 = vunpack.c.l.b16 %v70
  %v193 = vunpack.c.l.b16 %v71
  %v194 = vunpack.c.h.b16 %v71
  %v195 = vunpack.c.l.b16 %v72
  %v196 = vunpack.c.l.b16 %v73
  %v197 = vunpack.c.h.b16 %v73
  %v198 = vunpack.c.l.b16 %v74
  %v199 = vunpack.c.l.b16 %v75
  %v200 = vunpack.c.h.b16 %v75
  %v201 = vunpack.c.l.b16 %v76
  %v202 = vunpack.c.l.b16 %v77
  %v203 = vunpack.c.h.b16 %v77
  %v204 = vunpack.c.l.b16 %v78
  %v205 = vunpack.c.l.b16 %v79
  %v206 = vunpack.c.h.b16 %v79
  %v207 = vunpack.c.l.b16 %v80
  %v208 = vunpack.c.l.b16 %v81
  %v209 = vunpack.c.h.b16 %v81
  %v210 = vunpack.c.l.b16 %v82
  %v211 = vpack.c.b16 %v166, %v163
  %v212 = vpack.c.b16 %v167, %v164
  %v213 = vpack.c.b16 %v168, %v165
  %v214 = vpack.c.b16 %v172, %v169
  %v215 = vpack.c.b16 %v173, %v170
  %v216 = vpack.c.b16 %v174, %v171
  %v217 = vpack.c.b16 %v178, %v175
  %v218 = vpack.c.b16 %v179, %v176
  %v219 = vpack.c.b16 %v180, %v177
  %v220 = vpack.c.b16 %v184, %v181
  %v221 = vpack.c.b16 %v185, %v182
  %v222 = vpack.c.b16 %v186, %v183
  %v223 = vpack.c.b16 %v190, %v187
  %v224 = vpack.c.b16 %v191, %v188
  %v225 = vpack.c.b16 %v192, %v189
  %v226 = vpack.c.b16 %v196, %v193
  %v227 = vpack.c.b16 %v197, %v194
  %v228 = vpack.c.b16 %v198, %v195
  %v229 = vpack.c.b16 %v202, %v199
  %v230 = vpack.c.b16 %v203, %v200
  %v231 = vpack.c.b16 %v204, %v201
  %v232 = vpack.c.b16 %v208, %v205
  %v233 = vpack.c.b16 %v209, %v206
  %v234 = vpack.c.b16 %v210, %v207
  %v307 = vunpack.c.l.b16 %v83
  %v308 = vunpack.c.l.b16 %v84
  %v309 = vunpack.c.l.b16 %v85
  %v310 = vunpack.c.l.b16 %v86
  %v311 = vunpack.c.l.b16 %v87
  %v312 = vunpack.c.l.b16 %v88
  %v313 = vunpack.c.l.b16 %v89
  %v314 = vunpack.c.l.b16 %v90
  %v315 = vunpack.c.l.b16 %v91
  %v316 = vunpack.c.l.b16 %v92
  %v317 = vunpack.c.l.b16 %v93
  %v318 = vunpack.c.l.b16 %v94
  %v319 = vunpack.c.l.b16 %v95
  %v320 = vunpack.c.l.b16 %v96
  %v321 = vunpack.c.l.b16 %v97
  %v322 = vunpack.c.l.b16 %v98
  %v323 = vunpack.c.l.b16 %v99
  %v324 = vunpack.c.l.b16 %v100
  %v325 = vunpack.c.l.b16 %v101
  %v326 = vunpack.c.l.b16 %v102
  %v327 = vunpack.c.l.b16 %v103
  %v328 = vunpack.c.l.b16 %v104
  %v329 = vunpack.c.l.b16 %v105
  %v330 = vunpack.c.l.b16 %v106
  %v331 = vunpack.c.l.b16 %v107
  %v332 = vunpack.c.l.b16 %v108
  %v333 = vunpack.c.l.b16 %v109
  %v334 = vunpack.c.l.b16 %v110
  %v335 = vunpack.c.l.b16 %v111
  %v336 = vunpack.c.l.b16 %v112
  %v337 = vunpack.c.l.b16 %v113
  %v338 = vunpack.c.l.b16 %v114
  %v339 = vunpack.c.l.b16 %v115
  %v340 = vunpack.c.l.b16 %v116
  %v341 = vunpack.c.l.b16 %v117
  %v342 = vunpack.c.l.b16 %v118
  %v343 = vunpack.c.l.b16 %v119
  %v344 = vunpack.c.l.b16 %v120
  %v345 = vunpack.c.l.b16 %v121
  %v346 = vunpack.c.l.b16 %v122
  %v347 = vunpack.c.l.b16 %v123
  %v348 = vunpack.c.l.b16 %v124
  %v349 = vunpack.c.l.b16 %v125
  %v350 = vunpack.c.l.b16 %v126
  %v351 = vunpack.c.l.b16 %v127
  %v352 = vunpack.c.l.b16 %v128
  %v353 = vunpack.c.l.b16 %v129
  %v354 = vunpack.c.l.b16 %v130
  %v355 = vpack.c.b16 %v308, %v307
  %v356 = vpack.c.b16 %v310, %v309
  %v357 = vpack.c.b16 %v312, %v311
  %v358 = vpack.c.b16 %v314, %v313
  %v359 = vpack.c.b16 %v316, %v315
  %v360 = vpack.c.b16 %v318, %v317
  %v361 = vpack.c.b16 %v320, %v319
  %v362 = vpack.c.b16 %v322, %v321
  %v363 = vpack.c.b16 %v324, %v323
  %v364 = vpack.c.b16 %v326, %v325
  %v365 = vpack.c.b16 %v328, %v327
  %v366 = vpack.c.b16 %v330, %v329
  %v367 = vpack.c.b16 %v332, %v331
  %v368 = vpack.c.b16 %v334, %v333
  %v369 = vpack.c.b16 %v336, %v335
  %v370 = vpack.c.b16 %v338, %v337
  %v371 = vpack.c.b16 %v340, %v339
  %v372 = vpack.c.b16 %v342, %v341
  %v373 = vpack.c.b16 %v344, %v343
  %v374 = vpack.c.b16 %v346, %v345
  %v375 = vpack.c.b16 %v348, %v347
  %v376 = vpack.c.b16 %v350, %v349
  %v377 = vpack.c.b16 %v352, %v351
  %v378 = vpack.c.b16 %v354, %v353
  %403 = vmatprep.subr.bf16.mxu0 0
  %404 = vmatpush1.bf16.msra.mxu0 %v355
  %405 = vmatprep.subr.bf16.mxu0 0
  %406 = vmatpush1.bf16.msra.mxu0 %v356
  %407 = vmatprep.subr.bf16.mxu0 0
  %408 = vmatpush1.bf16.msra.mxu0 %v357
  %409 = vmatprep.subr.bf16.mxu0 0
  %410 = vmatpush1.bf16.msra.mxu0 %v358
  %411 = vmatprep.subr.bf16.mxu0 0
  %412 = vmatpush1.bf16.msra.mxu0 %v359
  %413 = vmatprep.subr.bf16.mxu0 0
  %414 = vmatpush1.bf16.msra.mxu0 %v360
  %415 = vmatprep.subr.bf16.mxu0 0
  %416 = vmatpush1.bf16.msra.mxu0 %v361
  %417 = vmatprep.subr.bf16.mxu0 0
  %418 = vmatpush1.bf16.msra.mxu0 %v362
  %419 = vmatprep.subr.bf16.mxu0 0
  %420 = vmatpush1.bf16.msra.mxu0 %v363
  %421 = vmatprep.subr.bf16.mxu0 0
  %422 = vmatpush1.bf16.msra.mxu0 %v364
  %423 = vmatprep.subr.bf16.mxu0 0
  %424 = vmatpush1.bf16.msra.mxu0 %v365
  %425 = vmatprep.subr.bf16.mxu0 0
  %426 = vmatpush1.bf16.msra.mxu0 %v366
  %427 = vmatprep.subr.bf16.mxu0 0
  %428 = vmatpush1.bf16.msra.mxu0 %v367
  %429 = vmatprep.subr.bf16.mxu0 0
  %430 = vmatpush1.bf16.msra.mxu0 %v368
  %431 = vmatprep.subr.bf16.mxu0 0
  %432 = vmatpush1.bf16.msra.mxu0 %v369
  %433 = vmatprep.subr.bf16.mxu0 0
  %434 = vmatpush1.bf16.msra.mxu0 %v370
  %435 = vmatprep.mubr.bf16.mxu0 %v212
  %436 = vmatmul.mubr.bf16.gmra.mrb[0].mxu0 %v211
  %v437 = vpop.f32.mrb[0].mxu0
  %v438 = vadd.f32 0.0, %v437
  %v439 = vpop.f32.mrb[0].mxu0
  %v440 = vpop.f32.mrb[0].mxu0
  %v441 = vadd.f32 0.0, %v440
  %v442 = vpop.f32.mrb[0].mxu0
  %443 = vmatprep.mubr.bf16.mxu0 %v215
  %444 = vmatmul.mubr.bf16.gmra.mrb[0].mxu0 %v214
  %v445 = vpop.f32.mrb[0].mxu0
  %v446 = vadd.f32 0.0, %v445
  %v447 = vpop.f32.mrb[0].mxu0
  %v448 = vpop.f32.mrb[0].mxu0
  %v449 = vadd.f32 0.0, %v448
  %v450 = vpop.f32.mrb[0].mxu0
  %451 = vmatprep.mubr.bf16.mxu0 %v218
  %452 = vmatmul.mubr.bf16.gmra.mrb[0].mxu0 %v217
  %v453 = vpop.f32.mrb[0].mxu0
  %v454 = vadd.f32 0.0, %v453
  %v455 = vpop.f32.mrb[0].mxu0
  %v456 = vpop.f32.mrb[0].mxu0
  %v457 = vadd.f32 0.0, %v456
  %v458 = vpop.f32.mrb[0].mxu0
  %459 = vmatprep.mubr.bf16.mxu0 %v221
  %460 = vmatmul.mubr.bf16.gmra.mrb[0].mxu0 %v220
  %v461 = vpop.f32.mrb[0].mxu0
  %v462 = vadd.f32 0.0, %v461
  %v463 = vpop.f32.mrb[0].mxu0
  %v464 = vpop.f32.mrb[0].mxu0
  %v465 = vadd.f32 0.0, %v464
  %v466 = vpop.f32.mrb[0].mxu0
  %467 = vmatprep.mubr.bf16.mxu0 %v224
  %468 = vmatmul.mubr.bf16.gmra.mrb[0].mxu0 %v223
  %v469 = vpop.f32.mrb[0].mxu0
  %v470 = vadd.f32 0.0, %v469
  %v471 = vpop.f32.mrb[0].mxu0
  %v472 = vpop.f32.mrb[0].mxu0
  %v473 = vadd.f32 0.0, %v472
  %v474 = vpop.f32.mrb[0].mxu0
  %475 = vmatprep.mubr.bf16.mxu0 %v227
  %476 = vmatmul.mubr.bf16.gmra.mrb[0].mxu0 %v226
  %v477 = vpop.f32.mrb[0].mxu0
  %v478 = vadd.f32 0.0, %v477
  %v479 = vpop.f32.mrb[0].mxu0
  %v480 = vpop.f32.mrb[0].mxu0
  %v481 = vadd.f32 0.0, %v480
  %v482 = vpop.f32.mrb[0].mxu0
  %483 = vmatprep.mubr.bf16.mxu0 %v230
  %484 = vmatmul.mubr.bf16.gmra.mrb[0].mxu0 %v229
  %v485 = vpop.f32.mrb[0].mxu0
  %v486 = vadd.f32 0.0, %v485
  %v487 = vpop.f32.mrb[0].mxu0
  %v488 = vpop.f32.mrb[0].mxu0
  %v489 = vadd.f32 0.0, %v488
  %v490 = vpop.f32.mrb[0].mxu0
  %491 = vmatprep.mubr.bf16.mxu0 %v233
  %492 = vmatmul.mubr.bf16.gmra.mrb[0].mxu0 %v232
  %v493 = vpop.f32.mrb[0].mxu0
  %v494 = vadd.f32 0.0, %v493
  %v495 = vpop.f32.mrb[0].mxu0
  %v496 = vpop.f32.mrb[0].mxu0
  %v497 = vadd.f32 0.0, %v496
  %v498 = vpop.f32.mrb[0].mxu0
  %499 = vdwg.mxu0
  %500 = vmatprep.subr.bf16.mxu0 0
  %501 = vmatpush1.bf16.msra.mxu0 %v371
  %502 = vmatprep.subr.bf16.mxu0 0
  %503 = vmatpush1.bf16.msra.mxu0 %v372
  %504 = vmatprep.subr.bf16.mxu0 0
  %505 = vmatpush1.bf16.msra.mxu0 %v373
  %506 = vmatprep.subr.bf16.mxu0 0
  %507 = vmatpush1.bf16.msra.mxu0 %v374
  %508 = vmatprep.subr.bf16.mxu0 0
  %509 = vmatpush1.bf16.msra.mxu0 %v375
  %510 = vmatprep.subr.bf16.mxu0 0
  %511 = vmatpush1.bf16.msra.mxu0 %v376
  %512 = vmatprep.subr.bf16.mxu0 0
  %513 = vmatpush1.bf16.msra.mxu0 %v377
  %514 = vmatprep.subr.bf16.mxu0 0
  %515 = vmatpush1.bf16.msra.mxu0 %v378
  %516 = vmatprep.subr.bf16.mxu0 0
  %517 = vmatpush1.bf16.msra.mxu0 0
  %518 = vmatprep.subr.bf16.mxu0 0
  %519 = vmatpush1.bf16.msra.mxu0 0
  %520 = vmatprep.subr.bf16.mxu0 0
  %521 = vmatpush1.bf16.msra.mxu0 0
  %522 = vmatprep.subr.bf16.mxu0 0
  %523 = vmatpush1.bf16.msra.mxu0 0
  %524 = vmatprep.subr.bf16.mxu0 0
  %525 = vmatpush1.bf16.msra.mxu0 0
  %526 = vmatprep.subr.bf16.mxu0 0
  %527 = vmatpush1.bf16.msra.mxu0 0
  %528 = vmatprep.subr.bf16.mxu0 0
  %529 = vmatpush1.bf16.msra.mxu0 0
  %530 = vmatprep.subr.bf16.mxu0 0
  %531 = vmatpush1.bf16.msra.mxu0 0
  %532 = vmatprep.mubr.bf16.mxu0 0
  %533 = vmatmul.mubr.bf16.gmra.mrb[0].mxu0 %v213
  %v534 = vpop.f32.mrb[0].mxu0
  %v535 = vadd.f32 %v438, %v534
  %v536 = vpop.f32.mrb[0].mxu0
  %v537 = vpop.f32.mrb[0].mxu0
  %v538 = vadd.f32 %v441, %v537
  %v539 = vpop.f32.mrb[0].mxu0
  %540 = vmatprep.mubr.bf16.mxu0 0
  %541 = vmatmul.mubr.bf16.gmra.mrb[0].mxu0 %v216
  %v542 = vpop.f32.mrb[0].mxu0
  %v543 = vadd.f32 %v446, %v542
  %v544 = vpop.f32.mrb[0].mxu0
  %v545 = vpop.f32.mrb[0].mxu0
  %v546 = vadd.f32 %v449, %v545
  %v547 = vpop.f32.mrb[0].mxu0
  %548 = vmatprep.mubr.bf16.mxu0 0
  %549 = vmatmul.mubr.bf16.gmra.mrb[0].mxu0 %v219
  %v550 = vpop.f32.mrb[0].mxu0
  %v551 = vadd.f32 %v454, %v550
  %v552 = vpop.f32.mrb[0].mxu0
  %v553 = vpop.f32.mrb[0].mxu0
  %v554 = vadd.f32 %v457, %v553
  %v555 = vpop.f32.mrb[0].mxu0
  %556 = vmatprep.mubr.bf16.mxu0 0
  %557 = vmatmul.mubr.bf16.gmra.mrb[0].mxu0 %v222
  %v558 = vpop.f32.mrb[0].mxu0
  %v559 = vadd.f32 %v462, %v558
  %v560 = vpop.f32.mrb[0].mxu0
  %v561 = vpop.f32.mrb[0].mxu0
  %v562 = vadd.f32 %v465, %v561
  %v563 = vpop.f32.mrb[0].mxu0
  %564 = vmatprep.mubr.bf16.mxu0 0
  %565 = vmatmul.mubr.bf16.gmra.mrb[0].mxu0 %v225
  %v566 = vpop.f32.mrb[0].mxu0
  %v567 = vadd.f32 %v470, %v566
  %v568 = vpop.f32.mrb[0].mxu0
  %v569 = vpop.f32.mrb[0].mxu0
  %v570 = vadd.f32 %v473, %v569
  %v571 = vpop.f32.mrb[0].mxu0
  %572 = vmatprep.mubr.bf16.mxu0 0
  %573 = vmatmul.mubr.bf16.gmra.mrb[0].mxu0 %v228
  %v574 = vpop.f32.mrb[0].mxu0
  %v575 = vadd.f32 %v478, %v574
  %v576 = vpop.f32.mrb[0].mxu0
  %v577 = vpop.f32.mrb[0].mxu0
  %v578 = vadd.f32 %v481, %v577
  %v579 = vpop.f32.mrb[0].mxu0
  %580 = vmatprep.mubr.bf16.mxu0 0
  %581 = vmatmul.mubr.bf16.gmra.mrb[0].mxu0 %v231
  %v582 = vpop.f32.mrb[0].mxu0
  %v583 = vadd.f32 %v486, %v582
  %v584 = vpop.f32.mrb[0].mxu0
  %v585 = vpop.f32.mrb[0].mxu0
  %v586 = vadd.f32 %v489, %v585
  %v587 = vpop.f32.mrb[0].mxu0
  %588 = vmatprep.mubr.bf16.mxu0 0
  %589 = vmatmul.mubr.bf16.gmra.mrb[0].mxu0 %v234
  %v590 = vpop.f32.mrb[0].mxu0
  %v591 = vadd.f32 %v494, %v590
  %v592 = vpop.f32.mrb[0].mxu0
  %v593 = vpop.f32.mrb[0].mxu0
  %v594 = vadd.f32 %v497, %v593
  %v595 = vpop.f32.mrb[0].mxu0
  %596 = vdwg.mxu0
  %v597 = vadd.f32 %v35, %v535
  %v598 = vadd.f32 %v36, %v538
  %v599 = vadd.f32 %v37, %v543
  %v600 = vadd.f32 %v38, %v546
  %v601 = vadd.f32 %v39, %v551
  %v602 = vadd.f32 %v40, %v554
  %v603 = vadd.f32 %v41, %v559
  %v604 = vadd.f32 %v42, %v562
  %v605 = vadd.f32 %v43, %v567
  %v606 = vadd.f32 %v44, %v570
  %v607 = vadd.f32 %v45, %v575
  %v608 = vadd.f32 %v46, %v578
  %v609 = vadd.f32 %v47, %v583
  %v610 = vadd.f32 %v48, %v586
  %v611 = vadd.f32 %v49, %v591
  %v612 = vadd.f32 %v50, %v594
  %613 = vst [vmem:[#allocation2] sm:$0xff] %v597
  %614 = vst [vmem:[#allocation2 + $0x8] sm:$0xff] %v598
  %615 = vst [vmem:[#allocation2 + $0x10] sm:$0xff] %v599
  %616 = vst [vmem:[#allocation2 + $0x18] sm:$0xff] %v600
  %617 = vst [vmem:[#allocation2 + $0x20] sm:$0xff] %v601
  %618 = vst [vmem:[#allocation2 + $0x28] sm:$0xff] %v602
  %619 = vst [vmem:[#allocation2 + $0x30] sm:$0xff] %v603
  %620 = vst [vmem:[#allocation2 + $0x38] sm:$0xff] %v604
  %621 = vst [vmem:[#allocation2 + $0x40] sm:$0xff] %v605
  %622 = vst [vmem:[#allocation2 + $0x48] sm:$0xff] %v606
  %623 = vst [vmem:[#allocation2 + $0x50] sm:$0xff] %v607
  %624 = vst [vmem:[#allocation2 + $0x58] sm:$0xff] %v608
  %625 = vst [vmem:[#allocation2 + $0x60] sm:$0xff] %v609
  %626 = vst [vmem:[#allocation2 + $0x68] sm:$0xff] %v610
  %627 = vst [vmem:[#allocation2 + $0x70] sm:$0xff] %v611
  %628 = vst [vmem:[#allocation2 + $0x78] sm:$0xff] %v612
  // Predicated region
  $region18: #{block_forward.14} parent=0 // pred_check
    %p629 = pneg %p15
  $region19: #{block_forward.14} parent=0 // pred_check_branch
    %631 = sbr.rel (%p629) target = $region21
  $region20: #{block_forward.14} parent=0 // pred_region
    %v632 = vld [vmem:[#allocation2] sm:$0xff]
    %v633 = vld [vmem:[#allocation2 + $0x8] sm:$0xff]
    %v634 = vld [vmem:[#allocation2 + $0x10] sm:$0xff]
    %v635 = vld [vmem:[#allocation2 + $0x18] sm:$0xff]
    %v636 = vld [vmem:[#allocation2 + $0x20] sm:$0xff]
    %v637 = vld [vmem:[#allocation2 + $0x28] sm:$0xff]
    %v638 = vld [vmem:[#allocation2 + $0x30] sm:$0xff]
    %v639 = vld [vmem:[#allocation2 + $0x38] sm:$0xff]
    %v640 = vld [vmem:[#allocation2 + $0x40] sm:$0xff]
    %v641 = vld [vmem:[#allocation2 + $0x48] sm:$0xff]
    %v642 = vld [vmem:[#allocation2 + $0x50] sm:$0xff]
    %v643 = vld [vmem:[#allocation2 + $0x58] sm:$0xff]
    %v644 = vld [vmem:[#allocation2 + $0x60] sm:$0xff]
    %v645 = vld [vmem:[#allocation2 + $0x68] sm:$0xff]
    %v646 = vld [vmem:[#allocation2 + $0x70] sm:$0xff]
    %v647 = vld [vmem:[#allocation2 + $0x78] sm:$0xff]
    %v648 = vld [vmem:[%s2] sm:$0x1]
    %v650 = vlaneseq
    %v651 = vshrl.u32 %v650, 7
    %v652 = vsub.s32 0, %v651
    %v653 = vrot.slane %v648, %v652
    %v655 = vadd.f32 %v632, %v653
    %v656 = vadd.f32 %v633, %v653
    %v657 = vadd.f32 %v634, %v653
    %v658 = vadd.f32 %v635, %v653
    %v659 = vadd.f32 %v636, %v653
    %v660 = vadd.f32 %v637, %v653
    %v661 = vadd.f32 %v638, %v653
    %v662 = vadd.f32 %v639, %v653
    %v663 = vadd.f32 %v640, %v653
    %v664 = vadd.f32 %v641, %v653
    %v665 = vadd.f32 %v642, %v653
    %v666 = vadd.f32 %v643, %v653
    %v667 = vadd.f32 %v644, %v653
    %v668 = vadd.f32 %v645, %v653
    %v669 = vadd.f32 %v646, %v653
    %v670 = vadd.f32 %v647, %v653
    %v671 = vpack.c.bf16 %v656, %v655
    %v672 = vpack.c.bf16 %v658, %v657
    %v673 = vpack.c.bf16 %v660, %v659
    %v674 = vpack.c.bf16 %v662, %v661
    %v675 = vpack.c.bf16 %v664, %v663
    %v676 = vpack.c.bf16 %v666, %v665
    %v677 = vpack.c.bf16 %v668, %v667
    %v678 = vpack.c.bf16 %v670, %v669
    %v687 = vunpack.c.l.b16 %v671
    %v688 = vunpack.c.h.b16 %v671
    %v689 = vunpack.c.l.b16 %v672
    %v690 = vunpack.c.h.b16 %v672
    %v691 = vunpack.c.l.b16 %v673
    %v692 = vunpack.c.h.b16 %v673
    %v693 = vunpack.c.l.b16 %v674
    %v694 = vunpack.c.h.b16 %v674
    %v695 = vunpack.c.l.b16 %v675
    %v696 = vunpack.c.h.b16 %v675
    %v697 = vunpack.c.l.b16 %v676
    %v698 = vunpack.c.h.b16 %v676
    %v699 = vunpack.c.l.b16 %v677
    %v700 = vunpack.c.h.b16 %v677
    %v701 = vunpack.c.l.b16 %v678
    %v702 = vunpack.c.h.b16 %v678
    %v703 = vpack.c.b16 %v687, %v687
    %v704 = vpack.c.b16 %v688, %v688
    %v705 = vpack.c.b16 %v689, %v689
    %v706 = vpack.c.b16 %v690, %v690
    %v707 = vpack.c.b16 %v691, %v691
    %v708 = vpack.c.b16 %v692, %v692
    %v709 = vpack.c.b16 %v693, %v693
    %v710 = vpack.c.b16 %v694, %v694
    %v711 = vpack.c.b16 %v695, %v695
    %v712 = vpack.c.b16 %v696, %v696
    %v713 = vpack.c.b16 %v697, %v697
    %v714 = vpack.c.b16 %v698, %v698
    %v715 = vpack.c.b16 %v699, %v699
    %v716 = vpack.c.b16 %v700, %v700
    %v717 = vpack.c.b16 %v701, %v701
    %v718 = vpack.c.b16 %v702, %v702
    %735 = vst [vmem:[%s3] sm:$0xf] %v703
    %736 = vst [vmem:[%s3 + $0x4] sm:$0xf] %v704
    %737 = vst [vmem:[%s3 + $0x8] sm:$0xf] %v705
    %738 = vst [vmem:[%s3 + $0xc] sm:$0xf] %v706
    %739 = vst [vmem:[%s3 + $0x10] sm:$0xf] %v707
    %740 = vst [vmem:[%s3 + $0x14] sm:$0xf] %v708
    %741 = vst [vmem:[%s3 + $0x18] sm:$0xf] %v709
    %742 = vst [vmem:[%s3 + $0x1c] sm:$0xf] %v710
    %743 = vst [vmem:[%s3 + $0x20] sm:$0xf] %v711
    %744 = vst [vmem:[%s3 + $0x24] sm:$0xf] %v712
    %745 = vst [vmem:[%s3 + $0x28] sm:$0xf] %v713
    %746 = vst [vmem:[%s3 + $0x2c] sm:$0xf] %v714
    %747 = vst [vmem:[%s3 + $0x30] sm:$0xf] %v715
    %748 = vst [vmem:[%s3 + $0x34] sm:$0xf] %v716
    %749 = vst [vmem:[%s3 + $0x38] sm:$0xf] %v717
    %750 = vst [vmem:[%s3 + $0x3c] sm:$0xf] %v718
  $region21: #{block_forward.14} parent=0 // pred_fallthru
    _
  // Predicated region
  $region22: #{block_forward.14} parent=0 // pred_check
    _
  $region23: #{block_forward.14} parent=0 // pred_check_branch
    %752 = sbr.rel (0) target = $region25
  $region24: #{block_forward.14} parent=0 // pred_region
    _
  $region25: #{block_forward.14} parent=0 // pred_fallthru
    _
  // Predicated region
  $region26: #{block_forward.14} parent=0 // pred_check
    _
  $region27: #{block_forward.14} parent=0 // pred_check_branch
    %754 = sbr.rel (0) target = $region29
  $region28: #{block_forward.14} parent=0 // pred_region
    _
  $region29: #{block_forward.14} parent=0 // pred_fallthru
    _

// kernel: block_forward.17
$region0: #{block_forward.17}
  #allocation0 [shape = 'u32[]', space=smem, size = 0x4, offset = 0x4, fixed_abs, tag = 'smem constant byte address 0x4 - core index']
  #allocation1 [shape = 'u32[144,128]{1,0:T(1,128)}', space=vmem, size = 0x12000, scoped, tag = 'internal scratch']
  #allocation2 [shape = 'f32[32,128]{1,0:T(8,128)}', space=vmem, size = 0x4000, scoped, tag = 'scratch operand']
  %s0 = inlined_call_operand.vmem [shape: bf16[32,384], index: 0, kind: input, shape index: {}]
  %s1 = inlined_call_operand.vmem [shape: bf16[384,128], index: 1, kind: input, shape index: {}]
  %s2 = inlined_call_operand.vmem [shape: f32[1,128], index: 2, kind: input, shape index: {}]
  %s3 = inlined_call_operand.vmem [shape: bf16[32,128], index: 3, kind: output, shape index: {}]
  %s4 = sld [smem:[#allocation0]]
  $region30: #{block_forward.17} parent=0
    _
  %s6 = ssub.s32 1, %s4
  %s7 = scalar_select 0, %s6, %s4
  // Predicated region
  $region2: #{block_forward.17} parent=0 // pred_check
    _
  $region3: #{block_forward.17} parent=0 // pred_check_branch
    %9 = sbr.rel (0) target = $region5
  $region4: #{block_forward.17} parent=0 // pred_region
    _
  $region5: #{block_forward.17} parent=0 // pred_fallthru
    _
  // Predicated region
  $region6: #{block_forward.17} parent=0 // pred_check
    _
  $region7: #{block_forward.17} parent=0 // pred_check_branch
    %11 = sbr.rel (0) target = $region9
  $region8: #{block_forward.17} parent=0 // pred_region
    _
  $region9: #{block_forward.17} parent=0 // pred_fallthru
    _
  // Predicated region
  $region10: #{block_forward.17} parent=0 // pred_check
    _
  $region11: #{block_forward.17} parent=0 // pred_check_branch
    %13 = sbr.rel (0) target = $region13
  $region12: #{block_forward.17} parent=0 // pred_region
    _
  $region13: #{block_forward.17} parent=0 // pred_fallthru
    _
  %p15 = scmp.eq.s32.totalorder 0, 0
  // Predicated region
  $region14: #{block_forward.17} parent=0 // pred_check
    %p16 = pneg %p15
  $region15: #{block_forward.17} parent=0 // pred_check_branch
    %18 = sbr.rel (%p16) target = $region17
  $region16: #{block_forward.17} parent=0 // pred_region
    %19 = vst [vmem:[#allocation2] sm:$0xff] 0.0
    %20 = vst [vmem:[#allocation2 + $0x8] sm:$0xff] 0.0
    %21 = vst [vmem:[#allocation2 + $0x10] sm:$0xff] 0.0
    %22 = vst [vmem:[#allocation2 + $0x18] sm:$0xff] 0.0
  $region17: #{block_forward.17} parent=0 // pred_fallthru
    _
  %v23 = vld [vmem:[#allocation2] sm:$0xff]
  %v24 = vld [vmem:[#allocation2 + $0x8] sm:$0xff]
  %v25 = vld [vmem:[#allocation2 + $0x10] sm:$0xff]
  %v26 = vld [vmem:[#allocation2 + $0x18] sm:$0xff]
  %v27 = vld [vmem:[%s0] sm:$0xff]
  %v28 = vld [vmem:[%s0 + $0x8] sm:$0xf]
  %v29 = vld [vmem:[%s0 + $0xc] sm:$0xff]
  %v30 = vld [vmem:[%s0 + $0x14] sm:$0xf]
  %v31 = vld [vmem:[%s0 + $0x18] sm:$0xff]
  %v32 = vld [vmem:[%s0 + $0x20] sm:$0xf]
  %v33 = vld [vmem:[%s0 + $0x24] sm:$0xff]
  %v34 = vld [vmem:[%s0 + $0x2c] sm:$0xf]
  %v35 = vld [vmem:[%s1] sm:$0xf]
  %v36 = vld [vmem:[%s1 + $0x4] sm:$0xf]
  %v37 = vld [vmem:[%s1 + $0x8] sm:$0xf]
  %v38 = vld [vmem:[%s1 + $0xc] sm:$0xf]
  %v39 = vld [vmem:[%s1 + $0x10] sm:$0xf]
  %v40 = vld [vmem:[%s1 + $0x14] sm:$0xf]
  %v41 = vld [vmem:[%s1 + $0x18] sm:$0xf]
  %v42 = vld [vmem:[%s1 + $0x1c] sm:$0xf]
  %v43 = vld [vmem:[%s1 + $0x20] sm:$0xf]
  %v44 = vld [vmem:[%s1 + $0x24] sm:$0xf]
  %v45 = vld [vmem:[%s1 + $0x28] sm:$0xf]
  %v46 = vld [vmem:[%s1 + $0x2c] sm:$0xf]
  %v47 = vld [vmem:[%s1 + $0x30] sm:$0xf]
  %v48 = vld [vmem:[%s1 + $0x34] sm:$0xf]
  %v49 = vld [vmem:[%s1 + $0x38] sm:$0xf]
  %v50 = vld [vmem:[%s1 + $0x3c] sm:$0xf]
  %v51 = vld [vmem:[%s1 + $0x40] sm:$0xf]
  %v52 = vld [vmem:[%s1 + $0x44] sm:$0xf]
  %v53 = vld [vmem:[%s1 + $0x48] sm:$0xf]
  %v54 = vld [vmem:[%s1 + $0x4c] sm:$0xf]
  %v55 = vld [vmem:[%s1 + $0x50] sm:$0xf]
  %v56 = vld [vmem:[%s1 + $0x54] sm:$0xf]
  %v57 = vld [vmem:[%s1 + $0x58] sm:$0xf]
  %v58 = vld [vmem:[%s1 + $0x5c] sm:$0xf]
  %v59 = vld [vmem:[%s1 + $0x60] sm:$0xf]
  %v60 = vld [vmem:[%s1 + $0x64] sm:$0xf]
  %v61 = vld [vmem:[%s1 + $0x68] sm:$0xf]
  %v62 = vld [vmem:[%s1 + $0x6c] sm:$0xf]
  %v63 = vld [vmem:[%s1 + $0x70] sm:$0xf]
  %v64 = vld [vmem:[%s1 + $0x74] sm:$0xf]
  %v65 = vld [vmem:[%s1 + $0x78] sm:$0xf]
  %v66 = vld [vmem:[%s1 + $0x7c] sm:$0xf]
  %v67 = vld [vmem:[%s1 + $0x80] sm:$0xf]
  %v68 = vld [vmem:[%s1 + $0x84] sm:$0xf]
  %v69 = vld [vmem:[%s1 + $0x88] sm:$0xf]
  %v70 = vld [vmem:[%s1 + $0x8c] sm:$0xf]
  %v71 = vld [vmem:[%s1 + $0x90] sm:$0xf]
  %v72 = vld [vmem:[%s1 + $0x94] sm:$0xf]
  %v73 = vld [vmem:[%s1 + $0x98] sm:$0xf]
  %v74 = vld [vmem:[%s1 + $0x9c] sm:$0xf]
  %v75 = vld [vmem:[%s1 + $0xa0] sm:$0xf]
  %v76 = vld [vmem:[%s1 + $0xa4] sm:$0xf]
  %v77 = vld [vmem:[%s1 + $0xa8] sm:$0xf]
  %v78 = vld [vmem:[%s1 + $0xac] sm:$0xf]
  %v79 = vld [vmem:[%s1 + $0xb0] sm:$0xf]
  %v80 = vld [vmem:[%s1 + $0xb4] sm:$0xf]
  %v81 = vld [vmem:[%s1 + $0xb8] sm:$0xf]
  %v82 = vld [vmem:[%s1 + $0xbc] sm:$0xf]
  %v91 = vunpack.c.l.b16 %v27
  %v92 = vunpack.c.h.b16 %v27
  %v93 = vunpack.c.l.b16 %v28
  %v94 = vunpack.c.l.b16 %v29
  %v95 = vunpack.c.h.b16 %v29
  %v96 = vunpack.c.l.b16 %v30
  %v97 = vunpack.c.l.b16 %v31
  %v98 = vunpack.c.h.b16 %v31
  %v99 = vunpack.c.l.b16 %v32
  %v100 = vunpack.c.l.b16 %v33
  %v101 = vunpack.c.h.b16 %v33
  %v102 = vunpack.c.l.b16 %v34
  %v103 = vpack.c.b16 %v94, %v91
  %v104 = vpack.c.b16 %v95, %v92
  %v105 = vpack.c.b16 %v96, %v93
  %v106 = vpack.c.b16 %v100, %v97
  %v107 = vpack.c.b16 %v101, %v98
  %v108 = vpack.c.b16 %v102, %v99
  %v163 = vunpack.c.l.b16 %v35
  %v164 = vunpack.c.l.b16 %v36
  %v165 = vunpack.c.l.b16 %v37
  %v166 = vunpack.c.l.b16 %v38
  %v167 = vunpack.c.l.b16 %v39
  %v168 = vunpack.c.l.b16 %v40
  %v169 = vunpack.c.l.b16 %v41
  %v170 = vunpack.c.l.b16 %v42
  %v171 = vunpack.c.l.b16 %v43
  %v172 = vunpack.c.l.b16 %v44
  %v173 = vunpack.c.l.b16 %v45
  %v174 = vunpack.c.l.b16 %v46
  %v175 = vunpack.c.l.b16 %v47
  %v176 = vunpack.c.l.b16 %v48
  %v177 = vunpack.c.l.b16 %v49
  %v178 = vunpack.c.l.b16 %v50
  %v179 = vunpack.c.l.b16 %v51
  %v180 = vunpack.c.l.b16 %v52
  %v181 = vunpack.c.l.b16 %v53
  %v182 = vunpack.c.l.b16 %v54
  %v183 = vunpack.c.l.b16 %v55
  %v184 = vunpack.c.l.b16 %v56
  %v185 = vunpack.c.l.b16 %v57
  %v186 = vunpack.c.l.b16 %v58
  %v187 = vunpack.c.l.b16 %v59
  %v188 = vunpack.c.l.b16 %v60
  %v189 = vunpack.c.l.b16 %v61
  %v190 = vunpack.c.l.b16 %v62
  %v191 = vunpack.c.l.b16 %v63
  %v192 = vunpack.c.l.b16 %v64
  %v193 = vunpack.c.l.b16 %v65
  %v194 = vunpack.c.l.b16 %v66
  %v195 = vunpack.c.l.b16 %v67
  %v196 = vunpack.c.l.b16 %v68
  %v197 = vunpack.c.l.b16 %v69
  %v198 = vunpack.c.l.b16 %v70
  %v199 = vunpack.c.l.b16 %v71
  %v200 = vunpack.c.l.b16 %v72
  %v201 = vunpack.c.l.b16 %v73
  %v202 = vunpack.c.l.b16 %v74
  %v203 = vunpack.c.l.b16 %v75
  %v204 = vunpack.c.l.b16 %v76
  %v205 = vunpack.c.l.b16 %v77
  %v206 = vunpack.c.l.b16 %v78
  %v207 = vunpack.c.l.b16 %v79
  %v208 = vunpack.c.l.b16 %v80
  %v209 = vunpack.c.l.b16 %v81
  %v210 = vunpack.c.l.b16 %v82
  %v211 = vpack.c.b16 %v164, %v163
  %v212 = vpack.c.b16 %v166, %v165
  %v213 = vpack.c.b16 %v168, %v167
  %v214 = vpack.c.b16 %v170, %v169
  %v215 = vpack.c.b16 %v172, %v171
  %v216 = vpack.c.b16 %v174, %v173
  %v217 = vpack.c.b16 %v176, %v175
  %v218 = vpack.c.b16 %v178, %v177
  %v219 = vpack.c.b16 %v180, %v179
  %v220 = vpack.c.b16 %v182, %v181
  %v221 = vpack.c.b16 %v184, %v183
  %v222 = vpack.c.b16 %v186, %v185
  %v223 = vpack.c.b16 %v188, %v187
  %v224 = vpack.c.b16 %v190, %v189
  %v225 = vpack.c.b16 %v192, %v191
  %v226 = vpack.c.b16 %v194, %v193
  %v227 = vpack.c.b16 %v196, %v195
  %v228 = vpack.c.b16 %v198, %v197
  %v229 = vpack.c.b16 %v200, %v199
  %v230 = vpack.c.b16 %v202, %v201
  %v231 = vpack.c.b16 %v204, %v203
  %v232 = vpack.c.b16 %v206, %v205
  %v233 = vpack.c.b16 %v208, %v207
  %v234 = vpack.c.b16 %v210, %v209
  %259 = vmatprep.subr.bf16.mxu0 0
  %260 = vmatpush1.bf16.msra.mxu0 %v211
  %261 = vmatprep.subr.bf16.mxu0 0
  %262 = vmatpush1.bf16.msra.mxu0 %v212
  %263 = vmatprep.subr.bf16.mxu0 0
  %264 = vmatpush1.bf16.msra.mxu0 %v213
  %265 = vmatprep.subr.bf16.mxu0 0
  %266 = vmatpush1.bf16.msra.mxu0 %v214
  %267 = vmatprep.subr.bf16.mxu0 0
  %268 = vmatpush1.bf16.msra.mxu0 %v215
  %269 = vmatprep.subr.bf16.mxu0 0
  %270 = vmatpush1.bf16.msra.mxu0 %v216
  %271 = vmatprep.subr.bf16.mxu0 0
  %272 = vmatpush1.bf16.msra.mxu0 %v217
  %273 = vmatprep.subr.bf16.mxu0 0
  %274 = vmatpush1.bf16.msra.mxu0 %v218
  %275 = vmatprep.subr.bf16.mxu0 0
  %276 = vmatpush1.bf16.msra.mxu0 %v219
  %277 = vmatprep.subr.bf16.mxu0 0
  %278 = vmatpush1.bf16.msra.mxu0 %v220
  %279 = vmatprep.subr.bf16.mxu0 0
  %280 = vmatpush1.bf16.msra.mxu0 %v221
  %281 = vmatprep.subr.bf16.mxu0 0
  %282 = vmatpush1.bf16.msra.mxu0 %v222
  %283 = vmatprep.subr.bf16.mxu0 0
  %284 = vmatpush1.bf16.msra.mxu0 %v223
  %285 = vmatprep.subr.bf16.mxu0 0
  %286 = vmatpush1.bf16.msra.mxu0 %v224
  %287 = vmatprep.subr.bf16.mxu0 0
  %288 = vmatpush1.bf16.msra.mxu0 %v225
  %289 = vmatprep.subr.bf16.mxu0 0
  %290 = vmatpush1.bf16.msra.mxu0 %v226
  %291 = vmatprep.mubr.bf16.mxu0 %v104
  %292 = vmatmul.mubr.bf16.gmra.mrb[0].mxu0 %v103
  %v293 = vpop.f32.mrb[0].mxu0
  %v294 = vadd.f32 0.0, %v293
  %v295 = vpop.f32.mrb[0].mxu0
  %v296 = vpop.f32.mrb[0].mxu0
  %v297 = vadd.f32 0.0, %v296
  %v298 = vpop.f32.mrb[0].mxu0
  %299 = vmatprep.mubr.bf16.mxu0 %v107
  %300 = vmatmul.mubr.bf16.gmra.mrb[0].mxu0 %v106
  %v301 = vpop.f32.mrb[0].mxu0
  %v302 = vadd.f32 0.0, %v301
  %v303 = vpop.f32.mrb[0].mxu0
  %v304 = vpop.f32.mrb[0].mxu0
  %v305 = vadd.f32 0.0, %v304
  %v306 = vpop.f32.mrb[0].mxu0
  %307 = vdwg.mxu0
  %308 = vmatprep.subr.bf16.mxu0 0
  %309 = vmatpush1.bf16.msra.mxu0 %v227
  %310 = vmatprep.subr.bf16.mxu0 0
  %311 = vmatpush1.bf16.msra.mxu0 %v228
  %312 = vmatprep.subr.bf16.mxu0 0
  %313 = vmatpush1.bf16.msra.mxu0 %v229
  %314 = vmatprep.subr.bf16.mxu0 0
  %315 = vmatpush1.bf16.msra.mxu0 %v230
  %316 = vmatprep.subr.bf16.mxu0 0
  %317 = vmatpush1.bf16.msra.mxu0 %v231
  %318 = vmatprep.subr.bf16.mxu0 0
  %319 = vmatpush1.bf16.msra.mxu0 %v232
  %320 = vmatprep.subr.bf16.mxu0 0
  %321 = vmatpush1.bf16.msra.mxu0 %v233
  %322 = vmatprep.subr.bf16.mxu0 0
  %323 = vmatpush1.bf16.msra.mxu0 %v234
  %324 = vmatprep.subr.bf16.mxu0 0
  %325 = vmatpush1.bf16.msra.mxu0 0
  %326 = vmatprep.subr.bf16.mxu0 0
  %327 = vmatpush1.bf16.msra.mxu0 0
  %328 = vmatprep.subr.bf16.mxu0 0
  %329 = vmatpush1.bf16.msra.mxu0 0
  %330 = vmatprep.subr.bf16.mxu0 0
  %331 = vmatpush1.bf16.msra.mxu0 0
  %332 = vmatprep.subr.bf16.mxu0 0
  %333 = vmatpush1.bf16.msra.mxu0 0
  %334 = vmatprep.subr.bf16.mxu0 0
  %335 = vmatpush1.bf16.msra.mxu0 0
  %336 = vmatprep.subr.bf16.mxu0 0
  %337 = vmatpush1.bf16.msra.mxu0 0
  %338 = vmatprep.subr.bf16.mxu0 0
  %339 = vmatpush1.bf16.msra.mxu0 0
  %340 = vmatprep.mubr.bf16.mxu0 0
  %341 = vmatmul.mubr.bf16.gmra.mrb[0].mxu0 %v105
  %v342 = vpop.f32.mrb[0].mxu0
  %v343 = vadd.f32 %v294, %v342
  %v344 = vpop.f32.mrb[0].mxu0
  %v345 = vpop.f32.mrb[0].mxu0
  %v346 = vadd.f32 %v297, %v345
  %v347 = vpop.f32.mrb[0].mxu0
  %348 = vmatprep.mubr.bf16.mxu0 0
  %349 = vmatmul.mubr.bf16.gmra.mrb[0].mxu0 %v108
  %v350 = vpop.f32.mrb[0].mxu0
  %v351 = vadd.f32 %v302, %v350
  %v352 = vpop.f32.mrb[0].mxu0
  %v353 = vpop.f32.mrb[0].mxu0
  %v354 = vadd.f32 %v305, %v353
  %v355 = vpop.f32.mrb[0].mxu0
  %356 = vdwg.mxu0
  %v357 = vadd.f32 %v23, %v343
  %v358 = vadd.f32 %v24, %v346
  %v359 = vadd.f32 %v25, %v351
  %v360 = vadd.f32 %v26, %v354
  %361 = vst [vmem:[#allocation2] sm:$0xff] %v357
  %362 = vst [vmem:[#allocation2 + $0x8] sm:$0xff] %v358
  %363 = vst [vmem:[#allocation2 + $0x10] sm:$0xff] %v359
  %364 = vst [vmem:[#allocation2 + $0x18] sm:$0xff] %v360
  // Predicated region
  $region18: #{block_forward.17} parent=0 // pred_check
    %p365 = pneg %p15
  $region19: #{block_forward.17} parent=0 // pred_check_branch
    %367 = sbr.rel (%p365) target = $region21
  $region20: #{block_forward.17} parent=0 // pred_region
    %v368 = vld [vmem:[#allocation2] sm:$0xff]
    %v369 = vld [vmem:[#allocation2 + $0x8] sm:$0xff]
    %v370 = vld [vmem:[#allocation2 + $0x10] sm:$0xff]
    %v371 = vld [vmem:[#allocation2 + $0x18] sm:$0xff]
    %v372 = vld [vmem:[%s2] sm:$0x1]
    %v374 = vlaneseq
    %v375 = vshrl.u32 %v374, 7
    %v376 = vsub.s32 0, %v375
    %v377 = vrot.slane %v372, %v376
    %v379 = vadd.f32 %v368, %v377
    %v380 = vadd.f32 %v369, %v377
    %v381 = vadd.f32 %v370, %v377
    %v382 = vadd.f32 %v371, %v377
    %v383 = vpack.c.bf16 %v380, %v379
    %v384 = vpack.c.bf16 %v382, %v381
    %v387 = vunpack.c.l.b16 %v383
    %v388 = vunpack.c.h.b16 %v383
    %v389 = vunpack.c.l.b16 %v384
    %v390 = vunpack.c.h.b16 %v384
    %v391 = vpack.c.b16 %v387, %v387
    %v392 = vpack.c.b16 %v388, %v388
    %v393 = vpack.c.b16 %v389, %v389
    %v394 = vpack.c.b16 %v390, %v390
    %399 = vst [vmem:[%s3] sm:$0xf] %v391
    %400 = vst [vmem:[%s3 + $0x4] sm:$0xf] %v392
    %401 = vst [vmem:[%s3 + $0x8] sm:$0xf] %v393
    %402 = vst [vmem:[%s3 + $0xc] sm:$0xf] %v394
  $region21: #{block_forward.17} parent=0 // pred_fallthru
    _
  // Predicated region
  $region22: #{block_forward.17} parent=0 // pred_check
    _
  $region23: #{block_forward.17} parent=0 // pred_check_branch
    %404 = sbr.rel (0) target = $region25
  $region24: #{block_forward.17} parent=0 // pred_region
    _
  $region25: #{block_forward.17} parent=0 // pred_fallthru
    _
  // Predicated region
  $region26: #{block_forward.17} parent=0 // pred_check
    _
  $region27: #{block_forward.17} parent=0 // pred_check_branch
    %406 = sbr.rel (0) target = $region29
  $region28: #{block_forward.17} parent=0 // pred_region
    _
  $region29: #{block_forward.17} parent=0 // pred_fallthru
    _

// kernel: block_forward.20
$region0: #{block_forward.20}
  #allocation0 [shape = 'u32[]', space=smem, size = 0x4, offset = 0x4, fixed_abs, tag = 'smem constant byte address 0x4 - core index']
  #allocation1 [shape = 'u32[144,128]{1,0:T(1,128)}', space=vmem, size = 0x12000, scoped, tag = 'internal scratch']
  %s0 = inlined_call_operand.vmem [shape: bf16[2,64,32], index: 0, kind: input, shape index: {}]
  %s1 = inlined_call_operand.vmem [shape: bf16[2,16,32], index: 1, kind: input, shape index: {}]
  %s2 = inlined_call_operand.vmem [shape: bf16[2,16,32], index: 2, kind: input, shape index: {}]
  %s3 = inlined_call_operand.vmem [shape: f32[2,64,32], index: 3, kind: output, shape index: {}]
  %s4 = sld [smem:[#allocation0]]
  $region45: #{block_forward.20} parent=0
    _
  %s6 = ssub.s32 1, %s4
  %s7 = scalar_select 0, %s6, %s4
  loop: start=0, step=1, limit=4
  $region2: #{block_forward.20} parent=0 // loop_pre_header
    _
  $region3: #{block_forward.20} parent=0 // loop_header
    %s9 = sphi 0, %s13
    %p10 = scmp.ge.s32.totalorder %s9, 4
    %s19 = sphi 0, %s21
    %s22 = sphi 0, %s19
    %s23 = sphi 0, %s22
    %s39 = sphi 0, %s23
    %s45 = sphi 0, %s47
    %s48 = sphi 0, %s45
    %s49 = sphi 0, %s48
    %s65 = sphi 0, %s49
    %s71 = sphi 0, %s73
    %s74 = sphi 0, %s71
    %s75 = sphi 0, %s74
    %s91 = sphi 0, %s75
    %s97 = sphi 0, %s99
    %s100 = sphi 0, %s97
    %s101 = sphi 0, %s100
    %s117 = sphi 0, %s101
  $region4: #{block_forward.20} parent=0 // loop_header_branch
    %12 = sbr.rel (%p10) target = $region8
  $region5: #{block_forward.20} parent=0 // loop_body
    %s14 = ssub.s32 %s9, 1
    %s15 = ssub.s32 %s9, 2
    %s16 = sadd.s32 %s9, 1
    %s17 = ssub.s32 %s9, %s16
    %p18 = scmp.eq.s32.totalorder %s17, 0
    %s20 = sadd.s32 %s19, 1
    %s21 = scalar_select %p18, %s19, %s20
    %p24 = pneg %p18
    %p25 = scmp.eq.s32.totalorder %s9, 1
    %p26 = por %p24, %p25
    %p27 = scmp.ne.s32.totalorder %s19, %s22
    %p28 = scmp.eq.s32.totalorder %s9, 0
    %p29 = por %p27, %p28
    %p30 = scmp.ne.s32.totalorder %s19, %s22
    %p31 = scmp.eq.s32.totalorder %s14, 1
    %p32 = por %p30, %p31
    %p33 = scmp.ne.s32.totalorder %s22, %s23
    %p34 = scmp.eq.s32.totalorder %s14, 0
    %p35 = por %p33, %p34
    %p36 = scmp.ne.s32.totalorder %s22, %s23
    %p37 = scmp.eq.s32.totalorder %s15, 1
    %p38 = por %p36, %p37
    %p40 = scmp.ne.s32.totalorder %s23, %s39
    %p41 = scmp.eq.s32.totalorder %s15, 0
    %p42 = por %p40, %p41
    %s43 = ssub.s32 %s9, %s16
    %p44 = scmp.eq.s32.totalorder %s43, 0
    %s46 = sadd.s32 %s45, 1
    %s47 = scalar_select %p44, %s45, %s46
    %p50 = pneg %p44
    %p51 = scmp.eq.s32.totalorder %s9, 1
    %p52 = por %p50, %p51
    %p53 = scmp.ne.s32.totalorder %s45, %s48
    %p54 = scmp.eq.s32.totalorder %s9, 0
    %p55 = por %p53, %p54
    %p56 = scmp.ne.s32.totalorder %s45, %s48
    %p57 = scmp.eq.s32.totalorder %s14, 1
    %p58 = por %p56, %p57
    %p59 = scmp.ne.s32.totalorder %s48, %s49
    %p60 = scmp.eq.s32.totalorder %s14, 0
    %p61 = por %p59, %p60
    %p62 = scmp.ne.s32.totalorder %s48, %s49
    %p63 = scmp.eq.s32.totalorder %s15, 1
    %p64 = por %p62, %p63
    %p66 = scmp.ne.s32.totalorder %s49, %s65
    %p67 = scmp.eq.s32.totalorder %s15, 0
    %p68 = por %p66, %p67
    %s69 = ssub.s32 %s9, %s16
    %p70 = scmp.eq.s32.totalorder %s69, 0
    %s72 = sadd.s32 %s71, 1
    %s73 = scalar_select %p70, %s71, %s72
    %p76 = pneg %p70
    %p77 = scmp.eq.s32.totalorder %s9, 1
    %p78 = por %p76, %p77
    %p79 = scmp.ne.s32.totalorder %s71, %s74
    %p80 = scmp.eq.s32.totalorder %s9, 0
    %p81 = por %p79, %p80
    %p82 = scmp.ne.s32.totalorder %s71, %s74
    %p83 = scmp.eq.s32.totalorder %s14, 1
    %p84 = por %p82, %p83
    %p85 = scmp.ne.s32.totalorder %s74, %s75
    %p86 = scmp.eq.s32.totalorder %s14, 0
    %p87 = por %p85, %p86
    %p88 = scmp.ne.s32.totalorder %s74, %s75
    %p89 = scmp.eq.s32.totalorder %s15, 1
    %p90 = por %p88, %p89
    %p92 = scmp.ne.s32.totalorder %s75, %s91
    %p93 = scmp.eq.s32.totalorder %s15, 0
    %p94 = por %p92, %p93
    %s95 = ssub.s32 %s9, %s16
    %p96 = scmp.eq.s32.totalorder %s95, 0
    %s98 = sadd.s32 %s97, 1
    %s99 = scalar_select %p96, %s97, %s98
    %p102 = pneg %p96
    %p103 = scmp.eq.s32.totalorder %s9, 1
    %p104 = por %p102, %p103
    %p105 = scmp.ne.s32.totalorder %s97, %s100
    %p106 = scmp.eq.s32.totalorder %s9, 0
    %p107 = por %p105, %p106
    %p108 = scmp.ne.s32.totalorder %s97, %s100
    %p109 = scmp.eq.s32.totalorder %s14, 1
    %p110 = por %p108, %p109
    %p111 = scmp.ne.s32.totalorder %s100, %s101
    %p112 = scmp.eq.s32.totalorder %s14, 0
    %p113 = por %p111, %p112
    %p114 = scmp.ne.s32.totalorder %s100, %s101
    %p115 = scmp.eq.s32.totalorder %s15, 1
    %p116 = por %p114, %p115
    %p118 = scmp.ne.s32.totalorder %s101, %s117
    %p119 = scmp.eq.s32.totalorder %s15, 0
    %p120 = por %p118, %p119
    %p121 = scmp.le.s32.totalorder 1, %s9
    %p122 = scmp.lt.s32.totalorder %s9, 3
    %p123 = pnand %p121, %p122
    %p124 = pneg %p123
    // Predicated region
    $region9: #{block_forward.20} parent=5 // pred_check
      _
    $region10: #{block_forward.20} parent=5 // pred_check_branch
      %126 = sbr.rel (%p123) target = $region12
    $region11: #{block_forward.20} parent=5 // pred_region
      %s127 = ssub.s32 %s9, 1
    $region12: #{block_forward.20} parent=5 // pred_fallthru
      _
    %p128 = scmp.lt.s32.totalorder %s9, 2
    // Predicated region
    $region13: #{block_forward.20} parent=5 // pred_check
      %p129 = pneg %p128
    $region14: #{block_forward.20} parent=5 // pred_check_branch
      %131 = sbr.rel (%p129) target = $region16
    $region15: #{block_forward.20} parent=5 // pred_region
      // Predicated region
      $region17: #{block_forward.20} parent=15 // pred_check
        %p132 = pneg %p29
      $region18: #{block_forward.20} parent=15 // pred_check_branch
        %134 = sbr.rel (%p132) target = $region20
      $region19: #{block_forward.20} parent=15 // pred_region
        %p135 = scmp.lt.s32.totalorder %s9, 1
        %s136 = scalar_select %p135, %s9, 1
        %s137 = smul.addr %s136, 8
        %s138 = smul.addr %s137, 4
        %s139 = scalar_lea.vmem %s0, %s138
      $region20: #{block_forward.20} parent=15 // pred_fallthru
        _
      // Predicated region
      $region21: #{block_forward.20} parent=15 // pred_check
        %p140 = pneg %p55
      $region22: #{block_forward.20} parent=15 // pred_check_branch
        %142 = sbr.rel (%p140) target = $region24
      $region23: #{block_forward.20} parent=15 // pred_region
        %p143 = scmp.lt.s32.totalorder %s9, 1
        %s144 = scalar_select %p143, %s9, 1
        %s145 = smul.addr %s144, 2
        %s146 = smul.addr %s145, 4
        %s147 = scalar_lea.vmem %s1, %s146
      $region24: #{block_forward.20} parent=15 // pred_fallthru
        _
      // Predicated region
      $region25: #{block_forward.20} parent=15 // pred_check
        %p148 = pneg %p81
      $region26: #{block_forward.20} parent=15 // pred_check_branch
        %150 = sbr.rel (%p148) target = $region28
      $region27: #{block_forward.20} parent=15 // pred_region
        %p151 = scmp.lt.s32.totalorder %s9, 1
        %s152 = scalar_select %p151, %s9, 1
        %s153 = smul.addr %s152, 2
        %s154 = smul.addr %s153, 4
        %s155 = scalar_lea.vmem %s2, %s154
      $region28: #{block_forward.20} parent=15 // pred_fallthru
        _
    $region16: #{block_forward.20} parent=5 // pred_fallthru
      _
    %p156 = scmp.le.s32.totalorder 1, %s9
    %p157 = scmp.lt.s32.totalorder %s9, 3
    %p158 = pnand %p156, %p157
    %p159 = pneg %p158
    // Predicated region
    $region29: #{block_forward.20} parent=5 // pred_check
      _
    $region30: #{block_forward.20} parent=5 // pred_check_branch
      %161 = sbr.rel (%p158) target = $region32
    $region31: #{block_forward.20} parent=5 // pred_region
      %s162 = ssub.s32 %s9, 1
      %p163 = scmp.lt.s32.totalorder %s14, 1
      %s164 = scalar_select %p163, %s14, 1
      %s165 = smul.addr %s164, 8
      %s166 = smul.addr %s165, 4
      %s167 = scalar_lea.vmem %s0, %s166
      %p168 = pneg %p35
      %p169 = pneg %p32
      %p170 = scmp.lt.s32.totalorder %s14, 1
      %s171 = scalar_select %p170, %s14, 1
      %s172 = smul.addr %s171, 2
      %s173 = smul.addr %s172, 4
      %s174 = scalar_lea.vmem %s1, %s173
      %p175 = pneg %p61
      %p176 = pneg %p58
      %p177 = scmp.lt.s32.totalorder %s14, 1
      %s178 = scalar_select %p177, %s14, 1
      %s179 = smul.addr %s178, 2
      %s180 = smul.addr %s179, 4
      %s181 = scalar_lea.vmem %s2, %s180
      %p182 = pneg %p87
      %p183 = pneg %p84
      %p184 = pneg %p113
      %p185 = pneg %p110
      %p186 = scmp.lt.s32.totalorder %s14, 1
      %s187 = scalar_select %p186, %s14, 1
      %s188 = smul.addr %s187, 8
      %s189 = smul.addr %s188, 8
      %s190 = scalar_lea.vmem %s3, %s189
      %p191 = scmp.lt.s32.totalorder %s14, 1
      %s192 = scalar_select %p191, %s14, 1
      %s193 = smul.addr %s192, 8
      %s194 = smul.addr %s193, 4
      %s195 = scalar_lea.vmem %s0, %s194
      %p196 = scmp.lt.s32.totalorder %s14, 1
      %s197 = scalar_select %p196, %s14, 1
      %s198 = smul.addr %s197, 2
      %s199 = smul.addr %s198, 4
      %s200 = scalar_lea.vmem %s1, %s199
      %p201 = scmp.lt.s32.totalorder %s14, 1
      %s202 = scalar_select %p201, %s14, 1
      %s203 = smul.addr %s202, 2
      %s204 = smul.addr %s203, 4
      %s205 = scalar_lea.vmem %s2, %s204
      %p206 = scmp.lt.s32.totalorder %s14, 1
      %s207 = scalar_select %p206, %s14, 1
      %s208 = smul.addr %s207, 8
      %s209 = smul.addr %s208, 8
      %s210 = scalar_lea.vmem %s3, %s209
      %v212 = vld [vmem:[%s195] sm:$0xf]
      %v213 = vld [vmem:[%s195 + $0x4] sm:$0xf]
      %v214 = vld [vmem:[%s195 + $0x8] sm:$0xf]
      %v215 = vld [vmem:[%s195 + $0xc] sm:$0xf]
      %v216 = vld [vmem:[%s195 + $0x10] sm:$0xf]
      %v217 = vld [vmem:[%s195 + $0x14] sm:$0xf]
      %v218 = vld [vmem:[%s195 + $0x18] sm:$0xf]
      %v219 = vld [vmem:[%s195 + $0x1c] sm:$0xf]
      %v220 = vld [vmem:[%s200] sm:$0xf]
      %v221 = vld [vmem:[%s200 + $0x4] sm:$0xf]
      %v222 = vld [vmem:[%s205] sm:$0xf]
      %v223 = vld [vmem:[%s205 + $0x4] sm:$0xf]
      %v224 = vunpack.c.l.bf16 %v212
      %v225 = vunpack.c.l.bf16 %v213
      %v226 = vunpack.c.l.bf16 %v214
      %v227 = vunpack.c.l.bf16 %v215
      %v228 = vunpack.c.l.bf16 %v216
      %v229 = vunpack.c.l.bf16 %v217
      %v230 = vunpack.c.l.bf16 %v218
      %v231 = vunpack.c.l.bf16 %v219
      %v232 = vmul.f32 %v224, 0.17677669
      %v233 = vmul.f32 %v225, 0.17677669
      %v234 = vmul.f32 %v226, 0.17677669
      %v235 = vmul.f32 %v227, 0.17677669
      %v236 = vmul.f32 %v228, 0.17677669
      %v237 = vmul.f32 %v229, 0.17677669
      %v238 = vmul.f32 %v230, 0.17677669
      %v239 = vmul.f32 %v231, 0.17677669
      %v240 = vpack.c.bf16 %v233, %v232
      %v241 = vpack.c.bf16 %v235, %v234
      %v242 = vpack.c.bf16 %v237, %v236
      %v243 = vpack.c.bf16 %v239, %v238
      %v246 = vunpack.c.l.b16 %v220
      %v247 = vunpack.c.l.b16 %v221
      %v248 = vpack.c.b16 %v247, %v246
      %vm249 = vcmask 64512
      %v251 = vsel %vm249, %v240, 0
      %v254 = vsel %vm249, %v241, 0
      %v257 = vsel %vm249, %v242, 0
      %v260 = vsel %vm249, %v243, 0
      %v263 = vsel %vm249, %v248, 0
      %265 = vmatprep.subr.bf16.mxu0 0
      %266 = vmatpush1.bf16.xpose.msra.mxu0 %v263
      %267 = vmatprep.subr.bf16.mxu0 0
      %268 = vmatpush1.bf16.xpose.msra.mxu0 0
      %269 = vmatprep.subr.bf16.mxu0 0
      %270 = vmatpush1.bf16.xpose.msra.mxu0 0
      %271 = vmatprep.subr.bf16.mxu0 0
      %272 = vmatpush1.bf16.xpose.msra.mxu0 0
      %273 = vmatprep.subr.bf16.mxu0 0
      %274 = vmatpush1.bf16.xpose.msra.mxu0 0
      %275 = vmatprep.subr.bf16.mxu0 0
      %276 = vmatpush1.bf16.xpose.msra.mxu0 0
      %277 = vmatprep.subr.bf16.mxu0 0
      %278 = vmatpush1.bf16.xpose.msra.mxu0 0
      %279 = vmatprep.subr.bf16.mxu0 0
      %280 = vmatpush1.bf16.xpose.msra.mxu0 0
      %281 = vmatprep.subr.bf16.mxu0 0
      %282 = vmatpush1.bf16.xpose.msra.mxu0 0
      %283 = vmatprep.subr.bf16.mxu0 0
      %284 = vmatpush1.bf16.xpose.msra.mxu0 0
      %285 = vmatprep.subr.bf16.mxu0 0
      %286 = vmatpush1.bf16.xpose.msra.mxu0 0
      %287 = vmatprep.subr.bf16.mxu0 0
      %288 = vmatpush1.bf16.xpose.msra.mxu0 0
      %289 = vmatprep.subr.bf16.mxu0 0
      %290 = vmatpush1.bf16.xpose.msra.mxu0 0
      %291 = vmatprep.subr.bf16.mxu0 0
      %292 = vmatpush1.bf16.xpose.msra.mxu0 0
      %293 = vmatprep.subr.bf16.mxu0 0
      %294 = vmatpush1.bf16.xpose.msra.mxu0 0
      %295 = vmatprep.subr.bf16.mxu0 0
      %296 = vmatpush1.bf16.xpose.msra.mxu0 0
      %297 = vmatprep.mubr.bf16.mxu0 0
      %298 = vmatmul.mubr.bf16.gmra.mrb[0].mxu0 %v251
      %v299 = vpop.f32.mrb[0].mxu0
      %v300 = vadd.f32 0.0, %v299
      %v301 = vpop.f32.mrb[0].mxu0
      %v302 = vpop.f32.mrb[0].mxu0
      %v303 = vadd.f32 0.0, %v302
      %v304 = vpop.f32.mrb[0].mxu0
      %305 = vmatprep.mubr.bf16.mxu0 0
      %306 = vmatmul.mubr.bf16.gmra.mrb[0].mxu0 %v254
      %v307 = vpop.f32.mrb[0].mxu0
      %v308 = vadd.f32 0.0, %v307
      %v309 = vpop.f32.mrb[0].mxu0
      %v310 = vpop.f32.mrb[0].mxu0
      %v311 = vadd.f32 0.0, %v310
      %v312 = vpop.f32.mrb[0].mxu0
      %313 = vmatprep.mubr.bf16.mxu0 0
      %314 = vmatmul.mubr.bf16.gmra.mrb[0].mxu0 %v257
      %v315 = vpop.f32.mrb[0].mxu0
      %v316 = vadd.f32 0.0, %v315
      %v317 = vpop.f32.mrb[0].mxu0
      %v318 = vpop.f32.mrb[0].mxu0
      %v319 = vadd.f32 0.0, %v318
      %v320 = vpop.f32.mrb[0].mxu0
      %321 = vmatprep.mubr.bf16.mxu0 0
      %322 = vmatmul.mubr.bf16.gmra.mrb[0].mxu0 %v260
      %v323 = vpop.f32.mrb[0].mxu0
      %v324 = vadd.f32 0.0, %v323
      %v325 = vpop.f32.mrb[0].mxu0
      %v326 = vpop.f32.mrb[0].mxu0
      %v327 = vadd.f32 0.0, %v326
      %v328 = vpop.f32.mrb[0].mxu0
      %329 = vdwg.mxu0
      %vm330 = vcmask 130048
      %v331 = vsel %vm330, %v300, -inf
      %332 = vmax.xlane.f32.xlu0 %v331
      %v333 = vpop.xlane.xlu0 %332
      %v334 = vsel %vm330, %v303, -inf
      %335 = vmax.xlane.f32.xlu0 %v334
      %v336 = vpop.xlane.xlu0 %335
      %v337 = vsel %vm330, %v308, -inf
      %338 = vmax.xlane.f32.xlu0 %v337
      %v339 = vpop.xlane.xlu0 %338
      %v340 = vsel %vm330, %v311, -inf
      %341 = vmax.xlane.f32.xlu0 %v340
      %v342 = vpop.xlane.xlu0 %341
      %v343 = vsel %vm330, %v316, -inf
      %344 = vmax.xlane.f32.xlu0 %v343
      %v345 = vpop.xlane.xlu0 %344
      %v346 = vsel %vm330, %v319, -inf
      %347 = vmax.xlane.f32.xlu0 %v346
      %v348 = vpop.xlane.xlu0 %347
      %v349 = vsel %vm330, %v324, -inf
      %350 = vmax.xlane.f32.xlu0 %v349
      %v351 = vpop.xlane.xlu0 %350
      %v352 = vsel %vm330, %v327, -inf
      %353 = vmax.xlane.f32.xlu0 %v352
      %v354 = vpop.xlane.xlu0 %353
      %v355 = vsub.f32 %v300, %v333
      %v356 = vsub.f32 %v303, %v336
      %v357 = vsub.f32 %v308, %v339
      %v358 = vsub.f32 %v311, %v342
      %v359 = vsub.f32 %v316, %v345
      %v360 = vsub.f32 %v319, %v348
      %v361 = vsub.f32 %v324, %v351
      %v362 = vsub.f32 %v327, %v354
      %v363 = vmul.f32 %v355, 1.442695
      %v364 = vpow.pop %v363
      %v365 = vmul.f32 %v356, 1.442695
      %v366 = vpow.pop %v365
      %v367 = vmul.f32 %v357, 1.442695
      %v368 = vpow.pop %v367
      %v369 = vmul.f32 %v358, 1.442695
      %v370 = vpow.pop %v369
      %v371 = vmul.f32 %v359, 1.442695
      %v372 = vpow.pop %v371
      %v373 = vmul.f32 %v360, 1.442695
      %v374 = vpow.pop %v373
      %v375 = vmul.f32 %v361, 1.442695
      %v376 = vpow.pop %v375
      %v377 = vmul.f32 %v362, 1.442695
      %v378 = vpow.pop %v377
      %v379 = vsel %vm330, %v364, 0.0
      %380 = vadd.xlane.f32.xlu0 %v379
      %v381 = vpop.xlane.xlu0 %380
      %v382 = vsel %vm330, %v366, 0.0
      %383 = vadd.xlane.f32.xlu0 %v382
      %v384 = vpop.xlane.xlu0 %383
      %v385 = vsel %vm330, %v368, 0.0
      %386 = vadd.xlane.f32.xlu0 %v385
      %v387 = vpop.xlane.xlu0 %386
      %v388 = vsel %vm330, %v370, 0.0
      %389 = vadd.xlane.f32.xlu0 %v388
      %v390 = vpop.xlane.xlu0 %389
      %v391 = vsel %vm330, %v372, 0.0
      %392 = vadd.xlane.f32.xlu0 %v391
      %v393 = vpop.xlane.xlu0 %392
      %v394 = vsel %vm330, %v374, 0.0
      %395 = vadd.xlane.f32.xlu0 %v394
      %v396 = vpop.xlane.xlu0 %395
      %v397 = vsel %vm330, %v376, 0.0
      %398 = vadd.xlane.f32.xlu0 %v397
      %v399 = vpop.xlane.xlu0 %398
      %v400 = vsel %vm330, %v378, 0.0
      %401 = vadd.xlane.f32.xlu0 %v400
      %v402 = vpop.xlane.xlu0 %401
      %v403 = vrcp.pop %v381
      %v404 = vrcp.pop %v384
      %v405 = vrcp.pop %v387
      %v406 = vrcp.pop %v390
      %v407 = vrcp.pop %v393
      %v408 = vrcp.pop %v396
      %v409 = vrcp.pop %v399
      %v410 = vrcp.pop %v402
      %v411 = vmul.f32 %v364, %v403
      %v412 = vmul.f32 %v366, %v404
      %v413 = vmul.f32 %v368, %v405
      %v414 = vmul.f32 %v370, %v406
      %v415 = vmul.f32 %v372, %v407
      %v416 = vmul.f32 %v374, %v408
      %v417 = vmul.f32 %v376, %v409
      %v418 = vmul.f32 %v378, %v410
      %v419 = vpack.c.bf16 %v412, %v411
      %v420 = vpack.c.bf16 %v414, %v413
      %v421 = vpack.c.bf16 %v416, %v415
      %v422 = vpack.c.bf16 %v418, %v417
      %v425 = vunpack.c.l.b16 %v222
      %v426 = vunpack.c.l.b16 %v223
      %v427 = vpack.c.b16 %v426, %v425
      %v430 = vsel %vm330, %v419, 0
      %v433 = vsel %vm330, %v420, 0
      %v436 = vsel %vm330, %v421, 0
      %v439 = vsel %vm330, %v422, 0
      %441 = vmatprep.subr.bf16.mxu0 0
      %442 = vmatpush1.bf16.msra.mxu0 %v427
      %443 = vmatprep.subr.bf16.mxu0 0
      %444 = vmatpush1.bf16.msra.mxu0 0
      %445 = vmatprep.subr.bf16.mxu0 0
      %446 = vmatpush1.bf16.msra.mxu0 0
      %447 = vmatprep.subr.bf16.mxu0 0
      %448 = vmatpush1.bf16.msra.mxu0 0
      %449 = vmatprep.subr.bf16.mxu0 0
      %450 = vmatpush1.bf16.msra.mxu0 0
      %451 = vmatprep.subr.bf16.mxu0 0
      %452 = vmatpush1.bf16.msra.mxu0 0
      %453 = vmatprep.subr.bf16.mxu0 0
      %454 = vmatpush1.bf16.msra.mxu0 0
      %455 = vmatprep.subr.bf16.mxu0 0
      %456 = vmatpush1.bf16.msra.mxu0 0
      %457 = vmatprep.subr.bf16.mxu0 0
      %458 = vmatpush1.bf16.msra.mxu0 0
      %459 = vmatprep.subr.bf16.mxu0 0
      %460 = vmatpush1.bf16.msra.mxu0 0
      %461 = vmatprep.subr.bf16.mxu0 0
      %462 = vmatpush1.bf16.msra.mxu0 0
      %463 = vmatprep.subr.bf16.mxu0 0
      %464 = vmatpush1.bf16.msra.mxu0 0
      %465 = vmatprep.subr.bf16.mxu0 0
      %466 = vmatpush1.bf16.msra.mxu0 0
      %467 = vmatprep.subr.bf16.mxu0 0
      %468 = vmatpush1.bf16.msra.mxu0 0
      %469 = vmatprep.subr.bf16.mxu0 0
      %470 = vmatpush1.bf16.msra.mxu0 0
      %471 = vmatprep.subr.bf16.mxu0 0
      %472 = vmatpush1.bf16.msra.mxu0 0
      %473 = vmatprep.mubr.bf16.mxu0 0
      %474 = vmatmul.mubr.bf16.gmra.mrb[0].mxu0 %v430
      %v475 = vpop.f32.mrb[0].mxu0
      %v476 = vadd.f32 0.0, %v475
      %v477 = vpop.f32.mrb[0].mxu0
      %v478 = vpop.f32.mrb[0].mxu0
      %v479 = vadd.f32 0.0, %v478
      %v480 = vpop.f32.mrb[0].mxu0
      %481 = vmatprep.mubr.bf16.mxu0 0
      %482 = vmatmul.mubr.bf16.gmra.mrb[0].mxu0 %v433
      %v483 = vpop.f32.mrb[0].mxu0
      %v484 = vadd.f32 0.0, %v483
      %v485 = vpop.f32.mrb[0].mxu0
      %v486 = vpop.f32.mrb[0].mxu0
      %v487 = vadd.f32 0.0, %v486
      %v488 = vpop.f32.mrb[0].mxu0
      %489 = vmatprep.mubr.bf16.mxu0 0
      %490 = vmatmul.mubr.bf16.gmra.mrb[0].mxu0 %v436
      %v491 = vpop.f32.mrb[0].mxu0
      %v492 = vadd.f32 0.0, %v491
      %v493 = vpop.f32.mrb[0].mxu0
      %v494 = vpop.f32.mrb[0].mxu0
      %v495 = vadd.f32 0.0, %v494
      %v496 = vpop.f32.mrb[0].mxu0
      %497 = vmatprep.mubr.bf16.mxu0 0
      %498 = vmatmul.mubr.bf16.gmra.mrb[0].mxu0 %v439
      %v499 = vpop.f32.mrb[0].mxu0
      %v500 = vadd.f32 0.0, %v499
      %v501 = vpop.f32.mrb[0].mxu0
      %v502 = vpop.f32.mrb[0].mxu0
      %v503 = vadd.f32 0.0, %v502
      %v504 = vpop.f32.mrb[0].mxu0
      %505 = vdwg.mxu0
      %510 = vrot.lane.b32.xlu0 %v240, 120
      %v511 = vpop.permute.xlu0 %510
      %512 = vrot.lane.b32.xlu0 %v241, 120
      %v513 = vpop.permute.xlu0 %512
      %514 = vrot.lane.b32.xlu0 %v242, 120
      %v515 = vpop.permute.xlu0 %514
      %516 = vrot.lane.b32.xlu0 %v243, 120
      %v517 = vpop.permute.xlu0 %516
      %518 = vrot.lane.b32.xlu0 %v248, 120
      %v519 = vpop.permute.xlu0 %518
      %v521 = vsel %vm249, %v511, 0
      %v524 = vsel %vm249, %v513, 0
      %v527 = vsel %vm249, %v515, 0
      %v530 = vsel %vm249, %v517, 0
      %v533 = vsel %vm249, %v519, 0
      %535 = vmatprep.subr.bf16.mxu0 0
      %536 = vmatpush1.bf16.xpose.msra.mxu0 %v533
      %537 = vmatprep.subr.bf16.mxu0 0
      %538 = vmatpush1.bf16.xpose.msra.mxu0 0
      %539 = vmatprep.subr.bf16.mxu0 0
      %540 = vmatpush1.bf16.xpose.msra.mxu0 0
      %541 = vmatprep.subr.bf16.mxu0 0
      %542 = vmatpush1.bf16.xpose.msra.mxu0 0
      %543 = vmatprep.subr.bf16.mxu0 0
      %544 = vmatpush1.bf16.xpose.msra.mxu0 0
      %545 = vmatprep.subr.bf16.mxu0 0
      %546 = vmatpush1.bf16.xpose.msra.mxu0 0
      %547 = vmatprep.subr.bf16.mxu0 0
      %548 = vmatpush1.bf16.xpose.msra.mxu0 0
      %549 = vmatprep.subr.bf16.mxu0 0
      %550 = vmatpush1.bf16.xpose.msra.mxu0 0
      %551 = vmatprep.subr.bf16.mxu0 0
      %552 = vmatpush1.bf16.xpose.msra.mxu0 0
      %553 = vmatprep.subr.bf16.mxu0 0
      %554 = vmatpush1.bf16.xpose.msra.mxu0 0
      %555 = vmatprep.subr.bf16.mxu0 0
      %556 = vmatpush1.bf16.xpose.msra.mxu0 0
      %557 = vmatprep.subr.bf16.mxu0 0
      %558 = vmatpush1.bf16.xpose.msra.mxu0 0
      %559 = vmatprep.subr.bf16.mxu0 0
      %560 = vmatpush1.bf16.xpose.msra.mxu0 0
      %561 = vmatprep.subr.bf16.mxu0 0
      %562 = vmatpush1.bf16.xpose.msra.mxu0 0
      %563 = vmatprep.subr.bf16.mxu0 0
      %564 = vmatpush1.bf16.xpose.msra.mxu0 0
      %565 = vmatprep.subr.bf16.mxu0 0
      %566 = vmatpush1.bf16.xpose.msra.mxu0 0
      %567 = vmatprep.mubr.bf16.mxu0 0
      %568 = vmatmul.mubr.bf16.gmra.mrb[0].mxu0 %v521
      %v569 = vpop.f32.mrb[0].mxu0
      %v570 = vadd.f32 0.0, %v569
      %v571 = vpop.f32.mrb[0].mxu0
      %v572 = vpop.f32.mrb[0].mxu0
      %v573 = vadd.f32 0.0, %v572
      %v574 = vpop.f32.mrb[0].mxu0
      %575 = vmatprep.mubr.bf16.mxu0 0
      %576 = vmatmul.mubr.bf16.gmra.mrb[0].mxu0 %v524
      %v577 = vpop.f32.mrb[0].mxu0
      %v578 = vadd.f32 0.0, %v577
      %v579 = vpop.f32.mrb[0].mxu0
      %v580 = vpop.f32.mrb[0].mxu0
      %v581 = vadd.f32 0.0, %v580
      %v582 = vpop.f32.mrb[0].mxu0
      %583 = vmatprep.mubr.bf16.mxu0 0
      %584 = vmatmul.mubr.bf16.gmra.mrb[0].mxu0 %v527
      %v585 = vpop.f32.mrb[0].mxu0
      %v586 = vadd.f32 0.0, %v585
      %v587 = vpop.f32.mrb[0].mxu0
      %v588 = vpop.f32.mrb[0].mxu0
      %v589 = vadd.f32 0.0, %v588
      %v590 = vpop.f32.mrb[0].mxu0
      %591 = vmatprep.mubr.bf16.mxu0 0
      %592 = vmatmul.mubr.bf16.gmra.mrb[0].mxu0 %v530
      %v593 = vpop.f32.mrb[0].mxu0
      %v594 = vadd.f32 0.0, %v593
      %v595 = vpop.f32.mrb[0].mxu0
      %v596 = vpop.f32.mrb[0].mxu0
      %v597 = vadd.f32 0.0, %v596
      %v598 = vpop.f32.mrb[0].mxu0
      %599 = vdwg.mxu0
      %v600 = vsel %vm330, %v570, -inf
      %601 = vmax.xlane.f32.xlu0 %v600
      %v602 = vpop.xlane.xlu0 %601
      %v603 = vsel %vm330, %v573, -inf
      %604 = vmax.xlane.f32.xlu0 %v603
      %v605 = vpop.xlane.xlu0 %604
      %v606 = vsel %vm330, %v578, -inf
      %607 = vmax.xlane.f32.xlu0 %v606
      %v608 = vpop.xlane.xlu0 %607
      %v609 = vsel %vm330, %v581, -inf
      %610 = vmax.xlane.f32.xlu0 %v609
      %v611 = vpop.xlane.xlu0 %610
      %v612 = vsel %vm330, %v586, -inf
      %613 = vmax.xlane.f32.xlu0 %v612
      %v614 = vpop.xlane.xlu0 %613
      %v615 = vsel %vm330, %v589, -inf
      %616 = vmax.xlane.f32.xlu0 %v615
      %v617 = vpop.xlane.xlu0 %616
      %v618 = vsel %vm330, %v594, -inf
      %619 = vmax.xlane.f32.xlu0 %v618
      %v620 = vpop.xlane.xlu0 %619
      %v621 = vsel %vm330, %v597, -inf
      %622 = vmax.xlane.f32.xlu0 %v621
      %v623 = vpop.xlane.xlu0 %622
      %v624 = vsub.f32 %v570, %v602
      %v625 = vsub.f32 %v573, %v605
      %v626 = vsub.f32 %v578, %v608
      %v627 = vsub.f32 %v581, %v611
      %v628 = vsub.f32 %v586, %v614
      %v629 = vsub.f32 %v589, %v617
      %v630 = vsub.f32 %v594, %v620
      %v631 = vsub.f32 %v597, %v623
      %v632 = vmul.f32 %v624, 1.442695
      %v633 = vpow.pop %v632
      %v634 = vmul.f32 %v625, 1.442695
      %v635 = vpow.pop %v634
      %v636 = vmul.f32 %v626, 1.442695
      %v637 = vpow.pop %v636
      %v638 = vmul.f32 %v627, 1.442695
      %v639 = vpow.pop %v638
      %v640 = vmul.f32 %v628, 1.442695
      %v641 = vpow.pop %v640
      %v642 = vmul.f32 %v629, 1.442695
      %v643 = vpow.pop %v642
      %v644 = vmul.f32 %v630, 1.442695
      %v645 = vpow.pop %v644
      %v646 = vmul.f32 %v631, 1.442695
      %v647 = vpow.pop %v646
      %v648 = vsel %vm330, %v633, 0.0
      %649 = vadd.xlane.f32.xlu0 %v648
      %v650 = vpop.xlane.xlu0 %649
      %v651 = vsel %vm330, %v635, 0.0
      %652 = vadd.xlane.f32.xlu0 %v651
      %v653 = vpop.xlane.xlu0 %652
      %v654 = vsel %vm330, %v637, 0.0
      %655 = vadd.xlane.f32.xlu0 %v654
      %v656 = vpop.xlane.xlu0 %655
      %v657 = vsel %vm330, %v639, 0.0
      %658 = vadd.xlane.f32.xlu0 %v657
      %v659 = vpop.xlane.xlu0 %658
      %v660 = vsel %vm330, %v641, 0.0
      %661 = vadd.xlane.f32.xlu0 %v660
      %v662 = vpop.xlane.xlu0 %661
      %v663 = vsel %vm330, %v643, 0.0
      %664 = vadd.xlane.f32.xlu0 %v663
      %v665 = vpop.xlane.xlu0 %664
      %v666 = vsel %vm330, %v645, 0.0
      %667 = vadd.xlane.f32.xlu0 %v666
      %v668 = vpop.xlane.xlu0 %667
      %v669 = vsel %vm330, %v647, 0.0
      %670 = vadd.xlane.f32.xlu0 %v669
      %v671 = vpop.xlane.xlu0 %670
      %v672 = vrcp.pop %v650
      %v673 = vrcp.pop %v653
      %v674 = vrcp.pop %v656
      %v675 = vrcp.pop %v659
      %v676 = vrcp.pop %v662
      %v677 = vrcp.pop %v665
      %v678 = vrcp.pop %v668
      %v679 = vrcp.pop %v671
      %v680 = vmul.f32 %v633, %v672
      %v681 = vmul.f32 %v635, %v673
      %v682 = vmul.f32 %v637, %v674
      %v683 = vmul.f32 %v639, %v675
      %v684 = vmul.f32 %v641, %v676
      %v685 = vmul.f32 %v643, %v677
      %v686 = vmul.f32 %v645, %v678
      %v687 = vmul.f32 %v647, %v679
      %v688 = vpack.c.bf16 %v681, %v680
      %v689 = vpack.c.bf16 %v683, %v682
      %v690 = vpack.c.bf16 %v685, %v684
      %v691 = vpack.c.bf16 %v687, %v686
      %692 = vrot.lane.b32.xlu0 %v427, 120
      %v693 = vpop.permute.xlu0 %692
      %v696 = vsel %vm330, %v688, 0
      %v699 = vsel %vm330, %v689, 0
      %v702 = vsel %vm330, %v690, 0
      %v705 = vsel %vm330, %v691, 0
      %707 = vmatprep.subr.bf16.mxu0 0
      %708 = vmatpush1.bf16.msra.mxu0 %v693
      %709 = vmatprep.subr.bf16.mxu0 0
      %710 = vmatpush1.bf16.msra.mxu0 0
      %711 = vmatprep.subr.bf16.mxu0 0
      %712 = vmatpush1.bf16.msra.mxu0 0
      %713 = vmatprep.subr.bf16.mxu0 0
      %714 = vmatpush1.bf16.msra.mxu0 0
      %715 = vmatprep.subr.bf16.mxu0 0
      %716 = vmatpush1.bf16.msra.mxu0 0
      %717 = vmatprep.subr.bf16.mxu0 0
      %718 = vmatpush1.bf16.msra.mxu0 0
      %719 = vmatprep.subr.bf16.mxu0 0
      %720 = vmatpush1.bf16.msra.mxu0 0
      %721 = vmatprep.subr.bf16.mxu0 0
      %722 = vmatpush1.bf16.msra.mxu0 0
      %723 = vmatprep.subr.bf16.mxu0 0
      %724 = vmatpush1.bf16.msra.mxu0 0
      %725 = vmatprep.subr.bf16.mxu0 0
      %726 = vmatpush1.bf16.msra.mxu0 0
      %727 = vmatprep.subr.bf16.mxu0 0
      %728 = vmatpush1.bf16.msra.mxu0 0
      %729 = vmatprep.subr.bf16.mxu0 0
      %730 = vmatpush1.bf16.msra.mxu0 0
      %731 = vmatprep.subr.bf16.mxu0 0
      %732 = vmatpush1.bf16.msra.mxu0 0
      %733 = vmatprep.subr.bf16.mxu0 0
      %734 = vmatpush1.bf16.msra.mxu0 0
      %735 = vmatprep.subr.bf16.mxu0 0
      %736 = vmatpush1.bf16.msra.mxu0 0
      %737 = vmatprep.subr.bf16.mxu0 0
      %738 = vmatpush1.bf16.msra.mxu0 0
      %739 = vmatprep.mubr.bf16.mxu0 0
      %740 = vmatmul.mubr.bf16.gmra.mrb[0].mxu0 %v696
      %v741 = vpop.f32.mrb[0].mxu0
      %v742 = vadd.f32 0.0, %v741
      %v743 = vpop.f32.mrb[0].mxu0
      %v744 = vpop.f32.mrb[0].mxu0
      %v745 = vadd.f32 0.0, %v744
      %v746 = vpop.f32.mrb[0].mxu0
      %747 = vmatprep.mubr.bf16.mxu0 0
      %748 = vmatmul.mubr.bf16.gmra.mrb[0].mxu0 %v699
      %v749 = vpop.f32.mrb[0].mxu0
      %v750 = vadd.f32 0.0, %v749
      %v751 = vpop.f32.mrb[0].mxu0
      %v752 = vpop.f32.mrb[0].mxu0
      %v753 = vadd.f32 0.0, %v752
      %v754 = vpop.f32.mrb[0].mxu0
      %755 = vmatprep.mubr.bf16.mxu0 0
      %756 = vmatmul.mubr.bf16.gmra.mrb[0].mxu0 %v702
      %v757 = vpop.f32.mrb[0].mxu0
      %v758 = vadd.f32 0.0, %v757
      %v759 = vpop.f32.mrb[0].mxu0
      %v760 = vpop.f32.mrb[0].mxu0
      %v761 = vadd.f32 0.0, %v760
      %v762 = vpop.f32.mrb[0].mxu0
      %763 = vmatprep.mubr.bf16.mxu0 0
      %764 = vmatmul.mubr.bf16.gmra.mrb[0].mxu0 %v705
      %v765 = vpop.f32.mrb[0].mxu0
      %v766 = vadd.f32 0.0, %v765
      %v767 = vpop.f32.mrb[0].mxu0
      %v768 = vpop.f32.mrb[0].mxu0
      %v769 = vadd.f32 0.0, %v768
      %v770 = vpop.f32.mrb[0].mxu0
      %771 = vdwg.mxu0
      %772 = vrot.lane.b32.xlu0 %v240, 112
      %v773 = vpop.permute.xlu0 %772
      %774 = vrot.lane.b32.xlu0 %v241, 112
      %v775 = vpop.permute.xlu0 %774
      %776 = vrot.lane.b32.xlu0 %v242, 112
      %v777 = vpop.permute.xlu0 %776
      %778 = vrot.lane.b32.xlu0 %v243, 112
      %v779 = vpop.permute.xlu0 %778
      %780 = vrot.lane.b32.xlu0 %v248, 112
      %v781 = vpop.permute.xlu0 %780
      %v783 = vsel %vm249, %v773, 0
      %v786 = vsel %vm249, %v775, 0
      %v789 = vsel %vm249, %v777, 0
      %v792 = vsel %vm249, %v779, 0
      %v795 = vsel %vm249, %v781, 0
      %797 = vmatprep.subr.bf16.mxu0 0
      %798 = vmatpush1.bf16.xpose.msra.mxu0 %v795
      %799 = vmatprep.subr.bf16.mxu0 0
      %800 = vmatpush1.bf16.xpose.msra.mxu0 0
      %801 = vmatprep.subr.bf16.mxu0 0
      %802 = vmatpush1.bf16.xpose.msra.mxu0 0
      %803 = vmatprep.subr.bf16.mxu0 0
      %804 = vmatpush1.bf16.xpose.msra.mxu0 0
      %805 = vmatprep.subr.bf16.mxu0 0
      %806 = vmatpush1.bf16.xpose.msra.mxu0 0
      %807 = vmatprep.subr.bf16.mxu0 0
      %808 = vmatpush1.bf16.xpose.msra.mxu0 0
      %809 = vmatprep.subr.bf16.mxu0 0
      %810 = vmatpush1.bf16.xpose.msra.mxu0 0
      %811 = vmatprep.subr.bf16.mxu0 0
      %812 = vmatpush1.bf16.xpose.msra.mxu0 0
      %813 = vmatprep.subr.bf16.mxu0 0
      %814 = vmatpush1.bf16.xpose.msra.mxu0 0
      %815 = vmatprep.subr.bf16.mxu0 0
      %816 = vmatpush1.bf16.xpose.msra.mxu0 0
      %817 = vmatprep.subr.bf16.mxu0 0
      %818 = vmatpush1.bf16.xpose.msra.mxu0 0
      %819 = vmatprep.subr.bf16.mxu0 0
      %820 = vmatpush1.bf16.xpose.msra.mxu0 0
      %821 = vmatprep.subr.bf16.mxu0 0
      %822 = vmatpush1.bf16.xpose.msra.mxu0 0
      %823 = vmatprep.subr.bf16.mxu0 0
      %824 = vmatpush1.bf16.xpose.msra.mxu0 0
      %825 = vmatprep.subr.bf16.mxu0 0
      %826 = vmatpush1.bf16.xpose.msra.mxu0 0
      %827 = vmatprep.subr.bf16.mxu0 0
      %828 = vmatpush1.bf16.xpose.msra.mxu0 0
      %829 = vmatprep.mubr.bf16.mxu0 0
      %830 = vmatmul.mubr.bf16.gmra.mrb[0].mxu0 %v783
      %v831 = vpop.f32.mrb[0].mxu0
      %v832 = vadd.f32 0.0, %v831
      %v833 = vpop.f32.mrb[0].mxu0
      %v834 = vpop.f32.mrb[0].mxu0
      %v835 = vadd.f32 0.0, %v834
      %v836 = vpop.f32.mrb[0].mxu0
      %837 = vmatprep.mubr.bf16.mxu0 0
      %838 = vmatmul.mubr.bf16.gmra.mrb[0].mxu0 %v786
      %v839 = vpop.f32.mrb[0].mxu0
      %v840 = vadd.f32 0.0, %v839
      %v841 = vpop.f32.mrb[0].mxu0
      %v842 = vpop.f32.mrb[0].mxu0
      %v843 = vadd.f32 0.0, %v842
      %v844 = vpop.f32.mrb[0].mxu0
      %845 = vmatprep.mubr.bf16.mxu0 0
      %846 = vmatmul.mubr.bf16.gmra.mrb[0].mxu0 %v789
      %v847 = vpop.f32.mrb[0].mxu0
      %v848 = vadd.f32 0.0, %v847
      %v849 = vpop.f32.mrb[0].mxu0
      %v850 = vpop.f32.mrb[0].mxu0
      %v851 = vadd.f32 0.0, %v850
      %v852 = vpop.f32.mrb[0].mxu0
      %853 = vmatprep.mubr.bf16.mxu0 0
      %854 = vmatmul.mubr.bf16.gmra.mrb[0].mxu0 %v792
      %v855 = vpop.f32.mrb[0].mxu0
      %v856 = vadd.f32 0.0, %v855
      %v857 = vpop.f32.mrb[0].mxu0
      %v858 = vpop.f32.mrb[0].mxu0
      %v859 = vadd.f32 0.0, %v858
      %v860 = vpop.f32.mrb[0].mxu0
      %861 = vdwg.mxu0
      %v862 = vsel %vm330, %v832, -inf
      %863 = vmax.xlane.f32.xlu0 %v862
      %v864 = vpop.xlane.xlu0 %863
      %v865 = vsel %vm330, %v835, -inf
      %866 = vmax.xlane.f32.xlu0 %v865
      %v867 = vpop.xlane.xlu0 %866
      %v868 = vsel %vm330, %v840, -inf
      %869 = vmax.xlane.f32.xlu0 %v868
      %v870 = vpop.xlane.xlu0 %869
      %v871 = vsel %vm330, %v843, -inf
      %872 = vmax.xlane.f32.xlu0 %v871
      %v873 = vpop.xlane.xlu0 %872
      %v874 = vsel %vm330, %v848, -inf
      %875 = vmax.xlane.f32.xlu0 %v874
      %v876 = vpop.xlane.xlu0 %875
      %v877 = vsel %vm330, %v851, -inf
      %878 = vmax.xlane.f32.xlu0 %v877
      %v879 = vpop.xlane.xlu0 %878
      %v880 = vsel %vm330, %v856, -inf
      %881 = vmax.xlane.f32.xlu0 %v880
      %v882 = vpop.xlane.xlu0 %881
      %v883 = vsel %vm330, %v859, -inf
      %884 = vmax.xlane.f32.xlu0 %v883
      %v885 = vpop.xlane.xlu0 %884
      %v886 = vsub.f32 %v832, %v864
      %v887 = vsub.f32 %v835, %v867
      %v888 = vsub.f32 %v840, %v870
      %v889 = vsub.f32 %v843, %v873
      %v890 = vsub.f32 %v848, %v876
      %v891 = vsub.f32 %v851, %v879
      %v892 = vsub.f32 %v856, %v882
      %v893 = vsub.f32 %v859, %v885
      %v894 = vmul.f32 %v886, 1.442695
      %v895 = vpow.pop %v894
      %v896 = vmul.f32 %v887, 1.442695
      %v897 = vpow.pop %v896
      %v898 = vmul.f32 %v888, 1.442695
      %v899 = vpow.pop %v898
      %v900 = vmul.f32 %v889, 1.442695
      %v901 = vpow.pop %v900
      %v902 = vmul.f32 %v890, 1.442695
      %v903 = vpow.pop %v902
      %v904 = vmul.f32 %v891, 1.442695
      %v905 = vpow.pop %v904
      %v906 = vmul.f32 %v892, 1.442695
      %v907 = vpow.pop %v906
      %v908 = vmul.f32 %v893, 1.442695
      %v909 = vpow.pop %v908
      %v910 = vsel %vm330, %v895, 0.0
      %911 = vadd.xlane.f32.xlu0 %v910
      %v912 = vpop.xlane.xlu0 %911
      %v913 = vsel %vm330, %v897, 0.0
      %914 = vadd.xlane.f32.xlu0 %v913
      %v915 = vpop.xlane.xlu0 %914
      %v916 = vsel %vm330, %v899, 0.0
      %917 = vadd.xlane.f32.xlu0 %v916
      %v918 = vpop.xlane.xlu0 %917
      %v919 = vsel %vm330, %v901, 0.0
      %920 = vadd.xlane.f32.xlu0 %v919
      %v921 = vpop.xlane.xlu0 %920
      %v922 = vsel %vm330, %v903, 0.0
      %923 = vadd.xlane.f32.xlu0 %v922
      %v924 = vpop.xlane.xlu0 %923
      %v925 = vsel %vm330, %v905, 0.0
      %926 = vadd.xlane.f32.xlu0 %v925
      %v927 = vpop.xlane.xlu0 %926
      %v928 = vsel %vm330, %v907, 0.0
      %929 = vadd.xlane.f32.xlu0 %v928
      %v930 = vpop.xlane.xlu0 %929
      %v931 = vsel %vm330, %v909, 0.0
      %932 = vadd.xlane.f32.xlu0 %v931
      %v933 = vpop.xlane.xlu0 %932
      %v934 = vrcp.pop %v912
      %v935 = vrcp.pop %v915
      %v936 = vrcp.pop %v918
      %v937 = vrcp.pop %v921
      %v938 = vrcp.pop %v924
      %v939 = vrcp.pop %v927
      %v940 = vrcp.pop %v930
      %v941 = vrcp.pop %v933
      %v942 = vmul.f32 %v895, %v934
      %v943 = vmul.f32 %v897, %v935
      %v944 = vmul.f32 %v899, %v936
      %v945 = vmul.f32 %v901, %v937
      %v946 = vmul.f32 %v903, %v938
      %v947 = vmul.f32 %v905, %v939
      %v948 = vmul.f32 %v907, %v940
      %v949 = vmul.f32 %v909, %v941
      %v950 = vpack.c.bf16 %v943, %v942
      %v951 = vpack.c.bf16 %v945, %v944
      %v952 = vpack.c.bf16 %v947, %v946
      %v953 = vpack.c.bf16 %v949, %v948
      %954 = vrot.lane.b32.xlu0 %v427, 112
      %v955 = vpop.permute.xlu0 %954
      %v958 = vsel %vm330, %v950, 0
      %v961 = vsel %vm330, %v951, 0
      %v964 = vsel %vm330, %v952, 0
      %v967 = vsel %vm330, %v953, 0
      %969 = vmatprep.subr.bf16.mxu0 0
      %970 = vmatpush1.bf16.msra.mxu0 %v955
      %971 = vmatprep.subr.bf16.mxu0 0
      %972 = vmatpush1.bf16.msra.mxu0 0
      %973 = vmatprep.subr.bf16.mxu0 0
      %974 = vmatpush1.bf16.msra.mxu0 0
      %975 = vmatprep.subr.bf16.mxu0 0
      %976 = vmatpush1.bf16.msra.mxu0 0
      %977 = vmatprep.subr.bf16.mxu0 0
      %978 = vmatpush1.bf16.msra.mxu0 0
      %979 = vmatprep.subr.bf16.mxu0 0
      %980 = vmatpush1.bf16.msra.mxu0 0
      %981 = vmatprep.subr.bf16.mxu0 0
      %982 = vmatpush1.bf16.msra.mxu0 0
      %983 = vmatprep.subr.bf16.mxu0 0
      %984 = vmatpush1.bf16.msra.mxu0 0
      %985 = vmatprep.subr.bf16.mxu0 0
      %986 = vmatpush1.bf16.msra.mxu0 0
      %987 = vmatprep.subr.bf16.mxu0 0
      %988 = vmatpush1.bf16.msra.mxu0 0
      %989 = vmatprep.subr.bf16.mxu0 0
      %990 = vmatpush1.bf16.msra.mxu0 0
      %991 = vmatprep.subr.bf16.mxu0 0
      %992 = vmatpush1.bf16.msra.mxu0 0
      %993 = vmatprep.subr.bf16.mxu0 0
      %994 = vmatpush1.bf16.msra.mxu0 0
      %995 = vmatprep.subr.bf16.mxu0 0
      %996 = vmatpush1.bf16.msra.mxu0 0
      %997 = vmatprep.subr.bf16.mxu0 0
      %998 = vmatpush1.bf16.msra.mxu0 0
      %999 = vmatprep.subr.bf16.mxu0 0
      %1000 = vmatpush1.bf16.msra.mxu0 0
      %1001 = vmatprep.mubr.bf16.mxu0 0
      %1002 = vmatmul.mubr.bf16.gmra.mrb[0].mxu0 %v958
      %v1003 = vpop.f32.mrb[0].mxu0
      %v1004 = vadd.f32 0.0, %v1003
      %v1005 = vpop.f32.mrb[0].mxu0
      %v1006 = vpop.f32.mrb[0].mxu0
      %v1007 = vadd.f32 0.0, %v1006
      %v1008 = vpop.f32.mrb[0].mxu0
      %1009 = vmatprep.mubr.bf16.mxu0 0
      %1010 = vmatmul.mubr.bf16.gmra.mrb[0].mxu0 %v961
      %v1011 = vpop.f32.mrb[0].mxu0
      %v1012 = vadd.f32 0.0, %v1011
      %v1013 = vpop.f32.mrb[0].mxu0
      %v1014 = vpop.f32.mrb[0].mxu0
      %v1015 = vadd.f32 0.0, %v1014
      %v1016 = vpop.f32.mrb[0].mxu0
      %1017 = vmatprep.mubr.bf16.mxu0 0
      %1018 = vmatmul.mubr.bf16.gmra.mrb[0].mxu0 %v964
      %v1019 = vpop.f32.mrb[0].mxu0
      %v1020 = vadd.f32 0.0, %v1019
      %v1021 = vpop.f32.mrb[0].mxu0
      %v1022 = vpop.f32.mrb[0].mxu0
      %v1023 = vadd.f32 0.0, %v1022
      %v1024 = vpop.f32.mrb[0].mxu0
      %1025 = vmatprep.mubr.bf16.mxu0 0
      %1026 = vmatmul.mubr.bf16.gmra.mrb[0].mxu0 %v967
      %v1027 = vpop.f32.mrb[0].mxu0
      %v1028 = vadd.f32 0.0, %v1027
      %v1029 = vpop.f32.mrb[0].mxu0
      %v1030 = vpop.f32.mrb[0].mxu0
      %v1031 = vadd.f32 0.0, %v1030
      %v1032 = vpop.f32.mrb[0].mxu0
      %1033 = vdwg.mxu0
      %1034 = vrot.lane.b32.xlu0 %v240, 104
      %v1035 = vpop.permute.xlu0 %1034
      %1036 = vrot.lane.b32.xlu0 %v241, 104
      %v1037 = vpop.permute.xlu0 %1036
      %1038 = vrot.lane.b32.xlu0 %v242, 104
      %v1039 = vpop.permute.xlu0 %1038
      %1040 = vrot.lane.b32.xlu0 %v243, 104
      %v1041 = vpop.permute.xlu0 %1040
      %1042 = vrot.lane.b32.xlu0 %v248, 104
      %v1043 = vpop.permute.xlu0 %1042
      %v1045 = vsel %vm249, %v1035, 0
      %v1048 = vsel %vm249, %v1037, 0
      %v1051 = vsel %vm249, %v1039, 0
      %v1054 = vsel %vm249, %v1041, 0
      %v1057 = vsel %vm249, %v1043, 0
      %1059 = vmatprep.subr.bf16.mxu0 0
      %1060 = vmatpush1.bf16.xpose.msra.mxu0 %v1057
      %1061 = vmatprep.subr.bf16.mxu0 0
      %1062 = vmatpush1.bf16.xpose.msra.mxu0 0
      %1063 = vmatprep.subr.bf16.mxu0 0
      %1064 = vmatpush1.bf16.xpose.msra.mxu0 0
      %1065 = vmatprep.subr.bf16.mxu0 0
      %1066 = vmatpush1.bf16.xpose.msra.mxu0 0
      %1067 = vmatprep.subr.bf16.mxu0 0
      %1068 = vmatpush1.bf16.xpose.msra.mxu0 0
      %1069 = vmatprep.subr.bf16.mxu0 0
      %1070 = vmatpush1.bf16.xpose.msra.mxu0 0
      %1071 = vmatprep.subr.bf16.mxu0 0
      %1072 = vmatpush1.bf16.xpose.msra.mxu0 0
      %1073 = vmatprep.subr.bf16.mxu0 0
      %1074 = vmatpush1.bf16.xpose.msra.mxu0 0
      %1075 = vmatprep.subr.bf16.mxu0 0
      %1076 = vmatpush1.bf16.xpose.msra.mxu0 0
      %1077 = vmatprep.subr.bf16.mxu0 0
      %1078 = vmatpush1.bf16.xpose.msra.mxu0 0
      %1079 = vmatprep.subr.bf16.mxu0 0
      %1080 = vmatpush1.bf16.xpose.msra.mxu0 0
      %1081 = vmatprep.subr.bf16.mxu0 0
      %1082 = vmatpush1.bf16.xpose.msra.mxu0 0
      %1083 = vmatprep.subr.bf16.mxu0 0
      %1084 = vmatpush1.bf16.xpose.msra.mxu0 0
      %1085 = vmatprep.subr.bf16.mxu0 0
      %1086 = vmatpush1.bf16.xpose.msra.mxu0 0
      %1087 = vmatprep.subr.bf16.mxu0 0
      %1088 = vmatpush1.bf16.xpose.msra.mxu0 0
      %1089 = vmatprep.subr.bf16.mxu0 0
      %1090 = vmatpush1.bf16.xpose.msra.mxu0 0
      %1091 = vmatprep.mubr.bf16.mxu0 0
      %1092 = vmatmul.mubr.bf16.gmra.mrb[0].mxu0 %v1045
      %v1093 = vpop.f32.mrb[0].mxu0
      %v1094 = vadd.f32 0.0, %v1093
      %v1095 = vpop.f32.mrb[0].mxu0
      %v1096 = vpop.f32.mrb[0].mxu0
      %v1097 = vadd.f32 0.0, %v1096
      %v1098 = vpop.f32.mrb[0].mxu0
      %1099 = vmatprep.mubr.bf16.mxu0 0
      %1100 = vmatmul.mubr.bf16.gmra.mrb[0].mxu0 %v1048
      %v1101 = vpop.f32.mrb[0].mxu0
      %v1102 = vadd.f32 0.0, %v1101
      %v1103 = vpop.f32.mrb[0].mxu0
      %v1104 = vpop.f32.mrb[0].mxu0
      %v1105 = vadd.f32 0.0, %v1104
      %v1106 = vpop.f32.mrb[0].mxu0
      %1107 = vmatprep.mubr.bf16.mxu0 0
      %1108 = vmatmul.mubr.bf16.gmra.mrb[0].mxu0 %v1051
      %v1109 = vpop.f32.mrb[0].mxu0
      %v1110 = vadd.f32 0.0, %v1109
      %v1111 = vpop.f32.mrb[0].mxu0
      %v1112 = vpop.f32.mrb[0].mxu0
      %v1113 = vadd.f32 0.0, %v1112
      %v1114 = vpop.f32.mrb[0].mxu0
      %1115 = vmatprep.mubr.bf16.mxu0 0
      %1116 = vmatmul.mubr.bf16.gmra.mrb[0].mxu0 %v1054
      %v1117 = vpop.f32.mrb[0].mxu0
      %v1118 = vadd.f32 0.0, %v1117
      %v1119 = vpop.f32.mrb[0].mxu0
      %v1120 = vpop.f32.mrb[0].mxu0
      %v1121 = vadd.f32 0.0, %v1120
      %v1122 = vpop.f32.mrb[0].mxu0
      %1123 = vdwg.mxu0
      %v1124 = vsel %vm330, %v1094, -inf
      %1125 = vmax.xlane.f32.xlu0 %v1124
      %v1126 = vpop.xlane.xlu0 %1125
      %v1127 = vsel %vm330, %v1097, -inf
      %1128 = vmax.xlane.f32.xlu0 %v1127
      %v1129 = vpop.xlane.xlu0 %1128
      %v1130 = vsel %vm330, %v1102, -inf
      %1131 = vmax.xlane.f32.xlu0 %v1130
      %v1132 = vpop.xlane.xlu0 %1131
      %v1133 = vsel %vm330, %v1105, -inf
      %1134 = vmax.xlane.f32.xlu0 %v1133
      %v1135 = vpop.xlane.xlu0 %1134
      %v1136 = vsel %vm330, %v1110, -inf
      %1137 = vmax.xlane.f32.xlu0 %v1136
      %v1138 = vpop.xlane.xlu0 %1137
      %v1139 = vsel %vm330, %v1113, -inf
      %1140 = vmax.xlane.f32.xlu0 %v1139
      %v1141 = vpop.xlane.xlu0 %1140
      %v1142 = vsel %vm330, %v1118, -inf
      %1143 = vmax.xlane.f32.xlu0 %v1142
      %v1144 = vpop.xlane.xlu0 %1143
      %v1145 = vsel %vm330, %v1121, -inf
      %1146 = vmax.xlane.f32.xlu0 %v1145
      %v1147 = vpop.xlane.xlu0 %1146
      %v1148 = vsub.f32 %v1094, %v1126
      %v1149 = vsub.f32 %v1097, %v1129
      %v1150 = vsub.f32 %v1102, %v1132
      %v1151 = vsub.f32 %v1105, %v1135
      %v1152 = vsub.f32 %v1110, %v1138
      %v1153 = vsub.f32 %v1113, %v1141
      %v1154 = vsub.f32 %v1118, %v1144
      %v1155 = vsub.f32 %v1121, %v1147
      %v1156 = vmul.f32 %v1148, 1.442695
      %v1157 = vpow.pop %v1156
      %v1158 = vmul.f32 %v1149, 1.442695
      %v1159 = vpow.pop %v1158
      %v1160 = vmul.f32 %v1150, 1.442695
      %v1161 = vpow.pop %v1160
      %v1162 = vmul.f32 %v1151, 1.442695
      %v1163 = vpow.pop %v1162
      %v1164 = vmul.f32 %v1152, 1.442695
      %v1165 = vpow.pop %v1164
      %v1166 = vmul.f32 %v1153, 1.442695
      %v1167 = vpow.pop %v1166
      %v1168 = vmul.f32 %v1154, 1.442695
      %v1169 = vpow.pop %v1168
      %v1170 = vmul.f32 %v1155, 1.442695
      %v1171 = vpow.pop %v1170
      %v1172 = vsel %vm330, %v1157, 0.0
      %1173 = vadd.xlane.f32.xlu0 %v1172
      %v1174 = vpop.xlane.xlu0 %1173
      %v1175 = vsel %vm330, %v1159, 0.0
      %1176 = vadd.xlane.f32.xlu0 %v1175
      %v1177 = vpop.xlane.xlu0 %1176
      %v1178 = vsel %vm330, %v1161, 0.0
      %1179 = vadd.xlane.f32.xlu0 %v1178
      %v1180 = vpop.xlane.xlu0 %1179
      %v1181 = vsel %vm330, %v1163, 0.0
      %1182 = vadd.xlane.f32.xlu0 %v1181
      %v1183 = vpop.xlane.xlu0 %1182
      %v1184 = vsel %vm330, %v1165, 0.0
      %1185 = vadd.xlane.f32.xlu0 %v1184
      %v1186 = vpop.xlane.xlu0 %1185
      %v1187 = vsel %vm330, %v1167, 0.0
      %1188 = vadd.xlane.f32.xlu0 %v1187
      %v1189 = vpop.xlane.xlu0 %1188
      %v1190 = vsel %vm330, %v1169, 0.0
      %1191 = vadd.xlane.f32.xlu0 %v1190
      %v1192 = vpop.xlane.xlu0 %1191
      %v1193 = vsel %vm330, %v1171, 0.0
      %1194 = vadd.xlane.f32.xlu0 %v1193
      %v1195 = vpop.xlane.xlu0 %1194
      %v1196 = vrcp.pop %v1174
      %v1197 = vrcp.pop %v1177
      %v1198 = vrcp.pop %v1180
      %v1199 = vrcp.pop %v1183
      %v1200 = vrcp.pop %v1186
      %v1201 = vrcp.pop %v1189
      %v1202 = vrcp.pop %v1192
      %v1203 = vrcp.pop %v1195
      %v1204 = vmul.f32 %v1157, %v1196
      %v1205 = vmul.f32 %v1159, %v1197
      %v1206 = vmul.f32 %v1161, %v1198
      %v1207 = vmul.f32 %v1163, %v1199
      %v1208 = vmul.f32 %v1165, %v1200
      %v1209 = vmul.f32 %v1167, %v1201
      %v1210 = vmul.f32 %v1169, %v1202
      %v1211 = vmul.f32 %v1171, %v1203
      %v1212 = vpack.c.bf16 %v1205, %v1204
      %v1213 = vpack.c.bf16 %v1207, %v1206
      %v1214 = vpack.c.bf16 %v1209, %v1208
      %v1215 = vpack.c.bf16 %v1211, %v1210
      %1216 = vrot.lane.b32.xlu0 %v427, 104
      %v1217 = vpop.permute.xlu0 %1216
      %v1220 = vsel %vm330, %v1212, 0
      %v1223 = vsel %vm330, %v1213, 0
      %v1226 = vsel %vm330, %v1214, 0
      %v1229 = vsel %vm330, %v1215, 0
      %1231 = vmatprep.subr.bf16.mxu0 0
      %1232 = vmatpush1.bf16.msra.mxu0 %v1217
      %1233 = vmatprep.subr.bf16.mxu0 0
      %1234 = vmatpush1.bf16.msra.mxu0 0
      %1235 = vmatprep.subr.bf16.mxu0 0
      %1236 = vmatpush1.bf16.msra.mxu0 0
      %1237 = vmatprep.subr.bf16.mxu0 0
      %1238 = vmatpush1.bf16.msra.mxu0 0
      %1239 = vmatprep.subr.bf16.mxu0 0
      %1240 = vmatpush1.bf16.msra.mxu0 0
      %1241 = vmatprep.subr.bf16.mxu0 0
      %1242 = vmatpush1.bf16.msra.mxu0 0
      %1243 = vmatprep.subr.bf16.mxu0 0
      %1244 = vmatpush1.bf16.msra.mxu0 0
      %1245 = vmatprep.subr.bf16.mxu0 0
      %1246 = vmatpush1.bf16.msra.mxu0 0
      %1247 = vmatprep.subr.bf16.mxu0 0
      %1248 = vmatpush1.bf16.msra.mxu0 0
      %1249 = vmatprep.subr.bf16.mxu0 0
      %1250 = vmatpush1.bf16.msra.mxu0 0
      %1251 = vmatprep.subr.bf16.mxu0 0
      %1252 = vmatpush1.bf16.msra.mxu0 0
      %1253 = vmatprep.subr.bf16.mxu0 0
      %1254 = vmatpush1.bf16.msra.mxu0 0
      %1255 = vmatprep.subr.bf16.mxu0 0
      %1256 = vmatpush1.bf16.msra.mxu0 0
      %1257 = vmatprep.subr.bf16.mxu0 0
      %1258 = vmatpush1.bf16.msra.mxu0 0
      %1259 = vmatprep.subr.bf16.mxu0 0
      %1260 = vmatpush1.bf16.msra.mxu0 0
      %1261 = vmatprep.subr.bf16.mxu0 0
      %1262 = vmatpush1.bf16.msra.mxu0 0
      %1263 = vmatprep.mubr.bf16.mxu0 0
      %1264 = vmatmul.mubr.bf16.gmra.mrb[0].mxu0 %v1220
      %v1265 = vpop.f32.mrb[0].mxu0
      %v1266 = vadd.f32 0.0, %v1265
      %v1267 = vpop.f32.mrb[0].mxu0
      %v1268 = vpop.f32.mrb[0].mxu0
      %v1269 = vadd.f32 0.0, %v1268
      %v1270 = vpop.f32.mrb[0].mxu0
      %1271 = vmatprep.mubr.bf16.mxu0 0
      %1272 = vmatmul.mubr.bf16.gmra.mrb[0].mxu0 %v1223
      %v1273 = vpop.f32.mrb[0].mxu0
      %v1274 = vadd.f32 0.0, %v1273
      %v1275 = vpop.f32.mrb[0].mxu0
      %v1276 = vpop.f32.mrb[0].mxu0
      %v1277 = vadd.f32 0.0, %v1276
      %v1278 = vpop.f32.mrb[0].mxu0
      %1279 = vmatprep.mubr.bf16.mxu0 0
      %1280 = vmatmul.mubr.bf16.gmra.mrb[0].mxu0 %v1226
      %v1281 = vpop.f32.mrb[0].mxu0
      %v1282 = vadd.f32 0.0, %v1281
      %v1283 = vpop.f32.mrb[0].mxu0
      %v1284 = vpop.f32.mrb[0].mxu0
      %v1285 = vadd.f32 0.0, %v1284
      %v1286 = vpop.f32.mrb[0].mxu0
      %1287 = vmatprep.mubr.bf16.mxu0 0
      %1288 = vmatmul.mubr.bf16.gmra.mrb[0].mxu0 %v1229
      %v1289 = vpop.f32.mrb[0].mxu0
      %v1290 = vadd.f32 0.0, %v1289
      %v1291 = vpop.f32.mrb[0].mxu0
      %v1292 = vpop.f32.mrb[0].mxu0
      %v1293 = vadd.f32 0.0, %v1292
      %v1294 = vpop.f32.mrb[0].mxu0
      %1295 = vdwg.mxu0
      %1304 = vrot.lane.b32.xlu0 %v742, 8
      %v1305 = vpop.permute.xlu0 %1304
      %1306 = vrot.lane.b32.xlu0 %v745, 8
      %v1307 = vpop.permute.xlu0 %1306
      %1308 = vrot.lane.b32.xlu0 %v750, 8
      %v1309 = vpop.permute.xlu0 %1308
      %1310 = vrot.lane.b32.xlu0 %v753, 8
      %v1311 = vpop.permute.xlu0 %1310
      %1312 = vrot.lane.b32.xlu0 %v758, 8
      %v1313 = vpop.permute.xlu0 %1312
      %1314 = vrot.lane.b32.xlu0 %v761, 8
      %v1315 = vpop.permute.xlu0 %1314
      %1316 = vrot.lane.b32.xlu0 %v766, 8
      %v1317 = vpop.permute.xlu0 %1316
      %1318 = vrot.lane.b32.xlu0 %v769, 8
      %v1319 = vpop.permute.xlu0 %1318
      %1336 = vrot.lane.b32.xlu0 %v1004, 16
      %v1337 = vpop.permute.xlu0 %1336
      %1338 = vrot.lane.b32.xlu0 %v1007, 16
      %v1339 = vpop.permute.xlu0 %1338
      %1340 = vrot.lane.b32.xlu0 %v1012, 16
      %v1341 = vpop.permute.xlu0 %1340
      %1342 = vrot.lane.b32.xlu0 %v1015, 16
      %v1343 = vpop.permute.xlu0 %1342
      %1344 = vrot.lane.b32.xlu0 %v1020, 16
      %v1345 = vpop.permute.xlu0 %1344
      %1346 = vrot.lane.b32.xlu0 %v1023, 16
      %v1347 = vpop.permute.xlu0 %1346
      %1348 = vrot.lane.b32.xlu0 %v1028, 16
      %v1349 = vpop.permute.xlu0 %1348
      %1350 = vrot.lane.b32.xlu0 %v1031, 16
      %v1351 = vpop.permute.xlu0 %1350
      %1368 = vrot.lane.b32.xlu0 %v1266, 24
      %v1369 = vpop.permute.xlu0 %1368
      %1370 = vrot.lane.b32.xlu0 %v1269, 24
      %v1371 = vpop.permute.xlu0 %1370
      %1372 = vrot.lane.b32.xlu0 %v1274, 24
      %v1373 = vpop.permute.xlu0 %1372
      %1374 = vrot.lane.b32.xlu0 %v1277, 24
      %v1375 = vpop.permute.xlu0 %1374
      %1376 = vrot.lane.b32.xlu0 %v1282, 24
      %v1377 = vpop.permute.xlu0 %1376
      %1378 = vrot.lane.b32.xlu0 %v1285, 24
      %v1379 = vpop.permute.xlu0 %1378
      %1380 = vrot.lane.b32.xlu0 %v1290, 24
      %v1381 = vpop.permute.xlu0 %1380
      %1382 = vrot.lane.b32.xlu0 %v1293, 24
      %v1383 = vpop.permute.xlu0 %1382
      %v1392 = vsel %vm249, %v476, %v1305
      %v1393 = vsel %vm249, %v479, %v1307
      %v1394 = vsel %vm249, %v484, %v1309
      %v1395 = vsel %vm249, %v487, %v1311
      %v1396 = vsel %vm249, %v492, %v1313
      %v1397 = vsel %vm249, %v495, %v1315
      %v1398 = vsel %vm249, %v500, %v1317
      %v1399 = vsel %vm249, %v503, %v1319
      %v1400 = vsel %vm330, %v1392, %v1337
      %v1401 = vsel %vm330, %v1393, %v1339
      %v1402 = vsel %vm330, %v1394, %v1341
      %v1403 = vsel %vm330, %v1395, %v1343
      %v1404 = vsel %vm330, %v1396, %v1345
      %v1405 = vsel %vm330, %v1397, %v1347
      %v1406 = vsel %vm330, %v1398, %v1349
      %v1407 = vsel %vm330, %v1399, %v1351
      %vm1408 = vcmask 195584
      %v1409 = vsel %vm1408, %v1400, %v1369
      %v1410 = vsel %vm1408, %v1401, %v1371
      %v1411 = vsel %vm1408, %v1402, %v1373
      %v1412 = vsel %vm1408, %v1403, %v1375
      %v1413 = vsel %vm1408, %v1404, %v1377
      %v1414 = vsel %vm1408, %v1405, %v1379
      %v1415 = vsel %vm1408, %v1406, %v1381
      %v1416 = vsel %vm1408, %v1407, %v1383
      %vm1417 = vcmask 261120
      %1418 = vst.msk [vmem:[%s210] sm:$0xff] %vm1417, %v1409
      %1419 = vst.msk [vmem:[%s210 + $0x8] sm:$0xff] %vm1417, %v1410
      %1420 = vst.msk [vmem:[%s210 + $0x10] sm:$0xff] %vm1417, %v1411
      %1421 = vst.msk [vmem:[%s210 + $0x18] sm:$0xff] %vm1417, %v1412
      %1422 = vst.msk [vmem:[%s210 + $0x20] sm:$0xff] %vm1417, %v1413
      %1423 = vst.msk [vmem:[%s210 + $0x28] sm:$0xff] %vm1417, %v1414
      %1424 = vst.msk [vmem:[%s210 + $0x30] sm:$0xff] %vm1417, %v1415
      %1425 = vst.msk [vmem:[%s210 + $0x38] sm:$0xff] %vm1417, %v1416
      %p1426 = scmp.lt.s32.totalorder %s14, 1
      %s1427 = scalar_select %p1426, %s14, 1
      %s1428 = smul.addr %s1427, 8
      %s1429 = smul.addr %s1428, 8
      %s1430 = scalar_lea.vmem %s3, %s1429
      // Predicated region
      $region33: #{block_forward.20} parent=31 // pred_check
        %p1431 = pneg %p110
      $region34: #{block_forward.20} parent=31 // pred_check_branch
        %1433 = sbr.rel (%p1431) target = $region36
      $region35: #{block_forward.20} parent=31 // pred_region
        _
      $region36: #{block_forward.20} parent=31 // pred_fallthru
        _
    $region32: #{block_forward.20} parent=5 // pred_fallthru
      _
    %p1434 = scmp.le.s32.totalorder 2, %s9
    // Predicated region
    $region37: #{block_forward.20} parent=5 // pred_check
      %p1435 = pneg %p1434
    $region38: #{block_forward.20} parent=5 // pred_check_branch
      %1437 = sbr.rel (%p1435) target = $region40
    $region39: #{block_forward.20} parent=5 // pred_region
      %s1438 = ssub.s32 %s9, 2
      // Predicated region
      $region41: #{block_forward.20} parent=39 // pred_check
        %p1439 = pneg %p116
      $region42: #{block_forward.20} parent=39 // pred_check_branch
        %1441 = sbr.rel (%p1439) target = $region44
      $region43: #{block_forward.20} parent=39 // pred_region
        %p1442 = scmp.lt.s32.totalorder %s15, 1
        %s1443 = scalar_select %p1442, %s15, 1
        %s1444 = smul.addr %s1443, 8
        %s1445 = smul.addr %s1444, 8
        %s1446 = scalar_lea.vmem %s3, %s1445
      $region44: #{block_forward.20} parent=39 // pred_fallthru
        _
    $region40: #{block_forward.20} parent=5 // pred_fallthru
      _
  $region6: #{block_forward.20} parent=0 // loop_footer
    %s13 = sadd.s32 1, %s9
  $region7: #{block_forward.20} parent=0 // loop_footer_branch
    %8 = sbr.rel target = $region3
  $region8: #{block_forward.20} parent=0 // loop_exit
    _

// kernel: block_forward.22
$region0: #{block_forward.22}
  #allocation0 [shape = 'u32[]', space=smem, size = 0x4, offset = 0x4, fixed_abs, tag = 'smem constant byte address 0x4 - core index']
  #allocation1 [shape = 'u32[144,128]{1,0:T(1,128)}', space=vmem, size = 0x12000, scoped, tag = 'internal scratch']
  #allocation2 [shape = 'f32[128,128]{1,0:T(8,128)}', space=vmem, size = 0x10000, scoped, tag = 'scratch operand']
  %s0 = inlined_call_operand.vmem [shape: bf16[128,128], index: 0, kind: input, shape index: {}]
  %s1 = inlined_call_operand.vmem [shape: bf16[128,128], index: 1, kind: input, shape index: {}]
  %s2 = inlined_call_operand.vmem [shape: f32[1,128], index: 2, kind: input, shape index: {}]
  %s3 = inlined_call_operand.vmem [shape: f32[128,128], index: 3, kind: input, shape index: {}]
  %s4 = inlined_call_operand.vmem [shape: f32[128,128], index: 4, kind: output, shape index: {}]
  %s5 = sld [smem:[#allocation0]]
  $region34: #{block_forward.22} parent=0
    _
  %s7 = ssub.s32 1, %s5
  %s8 = scalar_select 0, %s7, %s5
  // Predicated region
  $region2: #{block_forward.22} parent=0 // pred_check
    _
  $region3: #{block_forward.22} parent=0 // pred_check_branch
    %10 = sbr.rel (0) target = $region5
  $region4: #{block_forward.22} parent=0 // pred_region
    _
  $region5: #{block_forward.22} parent=0 // pred_fallthru
    _
  // Predicated region
  $region6: #{block_forward.22} parent=0 // pred_check
    _
  $region7: #{block_forward.22} parent=0 // pred_check_branch
    %12 = sbr.rel (0) target = $region9
  $region8: #{block_forward.22} parent=0 // pred_region
    _
  $region9: #{block_forward.22} parent=0 // pred_fallthru
    _
  // Predicated region
  $region10: #{block_forward.22} parent=0 // pred_check
    _
  $region11: #{block_forward.22} parent=0 // pred_check_branch
    %14 = sbr.rel (0) target = $region13
  $region12: #{block_forward.22} parent=0 // pred_region
    _
  $region13: #{block_forward.22} parent=0 // pred_fallthru
    _
  // Predicated region
  $region14: #{block_forward.22} parent=0 // pred_check
    _
  $region15: #{block_forward.22} parent=0 // pred_check_branch
    %16 = sbr.rel (0) target = $region17
  $region16: #{block_forward.22} parent=0 // pred_region
    _
  $region17: #{block_forward.22} parent=0 // pred_fallthru
    _
  %p18 = scmp.eq.s32.totalorder 0, 0
  // Predicated region
  $region18: #{block_forward.22} parent=0 // pred_check
    %p19 = pneg %p18
  $region19: #{block_forward.22} parent=0 // pred_check_branch
    %21 = sbr.rel (%p19) target = $region21
  $region20: #{block_forward.22} parent=0 // pred_region
    %22 = vst [vmem:[#allocation2] sm:$0xff] 0.0
    %23 = vst [vmem:[#allocation2 + $0x8] sm:$0xff] 0.0
    %24 = vst [vmem:[#allocation2 + $0x10] sm:$0xff] 0.0
    %25 = vst [vmem:[#allocation2 + $0x18] sm:$0xff] 0.0
    %26 = vst [vmem:[#allocation2 + $0x20] sm:$0xff] 0.0
    %27 = vst [vmem:[#allocation2 + $0x28] sm:$0xff] 0.0
    %28 = vst [vmem:[#allocation2 + $0x30] sm:$0xff] 0.0
    %29 = vst [vmem:[#allocation2 + $0x38] sm:$0xff] 0.0
    %30 = vst [vmem:[#allocation2 + $0x40] sm:$0xff] 0.0
    %31 = vst [vmem:[#allocation2 + $0x48] sm:$0xff] 0.0
    %32 = vst [vmem:[#allocation2 + $0x50] sm:$0xff] 0.0
    %33 = vst [vmem:[#allocation2 + $0x58] sm:$0xff] 0.0
    %34 = vst [vmem:[#allocation2 + $0x60] sm:$0xff] 0.0
    %35 = vst [vmem:[#allocation2 + $0x68] sm:$0xff] 0.0
    %36 = vst [vmem:[#allocation2 + $0x70] sm:$0xff] 0.0
    %37 = vst [vmem:[#allocation2 + $0x78] sm:$0xff] 0.0
  $region21: #{block_forward.22} parent=0 // pred_fallthru
    _
  %v38 = vld [vmem:[#allocation2] sm:$0xff]
  %v39 = vld [vmem:[#allocation2 + $0x8] sm:$0xff]
  %v40 = vld [vmem:[#allocation2 + $0x10] sm:$0xff]
  %v41 = vld [vmem:[#allocation2 + $0x18] sm:$0xff]
  %v42 = vld [vmem:[#allocation2 + $0x20] sm:$0xff]
  %v43 = vld [vmem:[#allocation2 + $0x28] sm:$0xff]
  %v44 = vld [vmem:[#allocation2 + $0x30] sm:$0xff]
  %v45 = vld [vmem:[#allocation2 + $0x38] sm:$0xff]
  %v46 = vld [vmem:[#allocation2 + $0x40] sm:$0xff]
  %v47 = vld [vmem:[#allocation2 + $0x48] sm:$0xff]
  %v48 = vld [vmem:[#allocation2 + $0x50] sm:$0xff]
  %v49 = vld [vmem:[#allocation2 + $0x58] sm:$0xff]
  %v50 = vld [vmem:[#allocation2 + $0x60] sm:$0xff]
  %v51 = vld [vmem:[#allocation2 + $0x68] sm:$0xff]
  %v52 = vld [vmem:[#allocation2 + $0x70] sm:$0xff]
  %v53 = vld [vmem:[#allocation2 + $0x78] sm:$0xff]
  %v54 = vld [vmem:[%s0] sm:$0xf]
  %v55 = vld [vmem:[%s0 + $0x4] sm:$0xf]
  %v56 = vld [vmem:[%s0 + $0x8] sm:$0xf]
  %v57 = vld [vmem:[%s0 + $0xc] sm:$0xf]
  %v58 = vld [vmem:[%s0 + $0x10] sm:$0xf]
  %v59 = vld [vmem:[%s0 + $0x14] sm:$0xf]
  %v60 = vld [vmem:[%s0 + $0x18] sm:$0xf]
  %v61 = vld [vmem:[%s0 + $0x1c] sm:$0xf]
  %v62 = vld [vmem:[%s0 + $0x20] sm:$0xf]
  %v63 = vld [vmem:[%s0 + $0x24] sm:$0xf]
  %v64 = vld [vmem:[%s0 + $0x28] sm:$0xf]
  %v65 = vld [vmem:[%s0 + $0x2c] sm:$0xf]
  %v66 = vld [vmem:[%s0 + $0x30] sm:$0xf]
  %v67 = vld [vmem:[%s0 + $0x34] sm:$0xf]
  %v68 = vld [vmem:[%s0 + $0x38] sm:$0xf]
  %v69 = vld [vmem:[%s0 + $0x3c] sm:$0xf]
  %v70 = vld [vmem:[%s1] sm:$0xf]
  %v71 = vld [vmem:[%s1 + $0x4] sm:$0xf]
  %v72 = vld [vmem:[%s1 + $0x8] sm:$0xf]
  %v73 = vld [vmem:[%s1 + $0xc] sm:$0xf]
  %v74 = vld [vmem:[%s1 + $0x10] sm:$0xf]
  %v75 = vld [vmem:[%s1 + $0x14] sm:$0xf]
  %v76 = vld [vmem:[%s1 + $0x18] sm:$0xf]
  %v77 = vld [vmem:[%s1 + $0x1c] sm:$0xf]
  %v78 = vld [vmem:[%s1 + $0x20] sm:$0xf]
  %v79 = vld [vmem:[%s1 + $0x24] sm:$0xf]
  %v80 = vld [vmem:[%s1 + $0x28] sm:$0xf]
  %v81 = vld [vmem:[%s1 + $0x2c] sm:$0xf]
  %v82 = vld [vmem:[%s1 + $0x30] sm:$0xf]
  %v83 = vld [vmem:[%s1 + $0x34] sm:$0xf]
  %v84 = vld [vmem:[%s1 + $0x38] sm:$0xf]
  %v85 = vld [vmem:[%s1 + $0x3c] sm:$0xf]
  %v102 = vunpack.c.l.b16 %v54
  %v103 = vunpack.c.l.b16 %v55
  %v104 = vunpack.c.l.b16 %v56
  %v105 = vunpack.c.l.b16 %v57
  %v106 = vunpack.c.l.b16 %v58
  %v107 = vunpack.c.l.b16 %v59
  %v108 = vunpack.c.l.b16 %v60
  %v109 = vunpack.c.l.b16 %v61
  %v110 = vunpack.c.l.b16 %v62
  %v111 = vunpack.c.l.b16 %v63
  %v112 = vunpack.c.l.b16 %v64
  %v113 = vunpack.c.l.b16 %v65
  %v114 = vunpack.c.l.b16 %v66
  %v115 = vunpack.c.l.b16 %v67
  %v116 = vunpack.c.l.b16 %v68
  %v117 = vunpack.c.l.b16 %v69
  %v118 = vpack.c.b16 %v103, %v102
  %v119 = vpack.c.b16 %v105, %v104
  %v120 = vpack.c.b16 %v107, %v106
  %v121 = vpack.c.b16 %v109, %v108
  %v122 = vpack.c.b16 %v111, %v110
  %v123 = vpack.c.b16 %v113, %v112
  %v124 = vpack.c.b16 %v115, %v114
  %v125 = vpack.c.b16 %v117, %v116
  %v150 = vunpack.c.l.b16 %v70
  %v151 = vunpack.c.l.b16 %v71
  %v152 = vunpack.c.l.b16 %v72
  %v153 = vunpack.c.l.b16 %v73
  %v154 = vunpack.c.l.b16 %v74
  %v155 = vunpack.c.l.b16 %v75
  %v156 = vunpack.c.l.b16 %v76
  %v157 = vunpack.c.l.b16 %v77
  %v158 = vunpack.c.l.b16 %v78
  %v159 = vunpack.c.l.b16 %v79
  %v160 = vunpack.c.l.b16 %v80
  %v161 = vunpack.c.l.b16 %v81
  %v162 = vunpack.c.l.b16 %v82
  %v163 = vunpack.c.l.b16 %v83
  %v164 = vunpack.c.l.b16 %v84
  %v165 = vunpack.c.l.b16 %v85
  %v166 = vpack.c.b16 %v151, %v150
  %v167 = vpack.c.b16 %v153, %v152
  %v168 = vpack.c.b16 %v155, %v154
  %v169 = vpack.c.b16 %v157, %v156
  %v170 = vpack.c.b16 %v159, %v158
  %v171 = vpack.c.b16 %v161, %v160
  %v172 = vpack.c.b16 %v163, %v162
  %v173 = vpack.c.b16 %v165, %v164
  %182 = vmatprep.subr.bf16.mxu0 0
  %183 = vmatpush1.bf16.msra.mxu0 %v166
  %184 = vmatprep.subr.bf16.mxu0 0
  %185 = vmatpush1.bf16.msra.mxu0 %v167
  %186 = vmatprep.subr.bf16.mxu0 0
  %187 = vmatpush1.bf16.msra.mxu0 %v168
  %188 = vmatprep.subr.bf16.mxu0 0
  %189 = vmatpush1.bf16.msra.mxu0 %v169
  %190 = vmatprep.subr.bf16.mxu0 0
  %191 = vmatpush1.bf16.msra.mxu0 %v170
  %192 = vmatprep.subr.bf16.mxu0 0
  %193 = vmatpush1.bf16.msra.mxu0 %v171
  %194 = vmatprep.subr.bf16.mxu0 0
  %195 = vmatpush1.bf16.msra.mxu0 %v172
  %196 = vmatprep.subr.bf16.mxu0 0
  %197 = vmatpush1.bf16.msra.mxu0 %v173
  %198 = vmatprep.subr.bf16.mxu0 0
  %199 = vmatpush1.bf16.msra.mxu0 0
  %200 = vmatprep.subr.bf16.mxu0 0
  %201 = vmatpush1.bf16.msra.mxu0 0
  %202 = vmatprep.subr.bf16.mxu0 0
  %203 = vmatpush1.bf16.msra.mxu0 0
  %204 = vmatprep.subr.bf16.mxu0 0
  %205 = vmatpush1.bf16.msra.mxu0 0
  %206 = vmatprep.subr.bf16.mxu0 0
  %207 = vmatpush1.bf16.msra.mxu0 0
  %208 = vmatprep.subr.bf16.mxu0 0
  %209 = vmatpush1.bf16.msra.mxu0 0
  %210 = vmatprep.subr.bf16.mxu0 0
  %211 = vmatpush1.bf16.msra.mxu0 0
  %212 = vmatprep.subr.bf16.mxu0 0
  %213 = vmatpush1.bf16.msra.mxu0 0
  %214 = vmatprep.mubr.bf16.mxu0 0
  %215 = vmatmul.mubr.bf16.gmra.mrb[0].mxu0 %v118
  %v216 = vpop.f32.mrb[0].mxu0
  %v217 = vadd.f32 0.0, %v216
  %v218 = vpop.f32.mrb[0].mxu0
  %v219 = vpop.f32.mrb[0].mxu0
  %v220 = vadd.f32 0.0, %v219
  %v221 = vpop.f32.mrb[0].mxu0
  %222 = vmatprep.mubr.bf16.mxu0 0
  %223 = vmatmul.mubr.bf16.gmra.mrb[0].mxu0 %v119
  %v224 = vpop.f32.mrb[0].mxu0
  %v225 = vadd.f32 0.0, %v224
  %v226 = vpop.f32.mrb[0].mxu0
  %v227 = vpop.f32.mrb[0].mxu0
  %v228 = vadd.f32 0.0, %v227
  %v229 = vpop.f32.mrb[0].mxu0
  %230 = vmatprep.mubr.bf16.mxu0 0
  %231 = vmatmul.mubr.bf16.gmra.mrb[0].mxu0 %v120
  %v232 = vpop.f32.mrb[0].mxu0
  %v233 = vadd.f32 0.0, %v232
  %v234 = vpop.f32.mrb[0].mxu0
  %v235 = vpop.f32.mrb[0].mxu0
  %v236 = vadd.f32 0.0, %v235
  %v237 = vpop.f32.mrb[0].mxu0
  %238 = vmatprep.mubr.bf16.mxu0 0
  %239 = vmatmul.mubr.bf16.gmra.mrb[0].mxu0 %v121
  %v240 = vpop.f32.mrb[0].mxu0
  %v241 = vadd.f32 0.0, %v240
  %v242 = vpop.f32.mrb[0].mxu0
  %v243 = vpop.f32.mrb[0].mxu0
  %v244 = vadd.f32 0.0, %v243
  %v245 = vpop.f32.mrb[0].mxu0
  %246 = vmatprep.mubr.bf16.mxu0 0
  %247 = vmatmul.mubr.bf16.gmra.mrb[0].mxu0 %v122
  %v248 = vpop.f32.mrb[0].mxu0
  %v249 = vadd.f32 0.0, %v248
  %v250 = vpop.f32.mrb[0].mxu0
  %v251 = vpop.f32.mrb[0].mxu0
  %v252 = vadd.f32 0.0, %v251
  %v253 = vpop.f32.mrb[0].mxu0
  %254 = vmatprep.mubr.bf16.mxu0 0
  %255 = vmatmul.mubr.bf16.gmra.mrb[0].mxu0 %v123
  %v256 = vpop.f32.mrb[0].mxu0
  %v257 = vadd.f32 0.0, %v256
  %v258 = vpop.f32.mrb[0].mxu0
  %v259 = vpop.f32.mrb[0].mxu0
  %v260 = vadd.f32 0.0, %v259
  %v261 = vpop.f32.mrb[0].mxu0
  %262 = vmatprep.mubr.bf16.mxu0 0
  %263 = vmatmul.mubr.bf16.gmra.mrb[0].mxu0 %v124
  %v264 = vpop.f32.mrb[0].mxu0
  %v265 = vadd.f32 0.0, %v264
  %v266 = vpop.f32.mrb[0].mxu0
  %v267 = vpop.f32.mrb[0].mxu0
  %v268 = vadd.f32 0.0, %v267
  %v269 = vpop.f32.mrb[0].mxu0
  %270 = vmatprep.mubr.bf16.mxu0 0
  %271 = vmatmul.mubr.bf16.gmra.mrb[0].mxu0 %v125
  %v272 = vpop.f32.mrb[0].mxu0
  %v273 = vadd.f32 0.0, %v272
  %v274 = vpop.f32.mrb[0].mxu0
  %v275 = vpop.f32.mrb[0].mxu0
  %v276 = vadd.f32 0.0, %v275
  %v277 = vpop.f32.mrb[0].mxu0
  %278 = vdwg.mxu0
  %v279 = vadd.f32 %v38, %v217
  %v280 = vadd.f32 %v39, %v220
  %v281 = vadd.f32 %v40, %v225
  %v282 = vadd.f32 %v41, %v228
  %v283 = vadd.f32 %v42, %v233
  %v284 = vadd.f32 %v43, %v236
  %v285 = vadd.f32 %v44, %v241
  %v286 = vadd.f32 %v45, %v244
  %v287 = vadd.f32 %v46, %v249
  %v288 = vadd.f32 %v47, %v252
  %v289 = vadd.f32 %v48, %v257
  %v290 = vadd.f32 %v49, %v260
  %v291 = vadd.f32 %v50, %v265
  %v292 = vadd.f32 %v51, %v268
  %v293 = vadd.f32 %v52, %v273
  %v294 = vadd.f32 %v53, %v276
  %295 = vst [vmem:[#allocation2] sm:$0xff] %v279
  %296 = vst [vmem:[#allocation2 + $0x8] sm:$0xff] %v280
  %297 = vst [vmem:[#allocation2 + $0x10] sm:$0xff] %v281
  %298 = vst [vmem:[#allocation2 + $0x18] sm:$0xff] %v282
  %299 = vst [vmem:[#allocation2 + $0x20] sm:$0xff] %v283
  %300 = vst [vmem:[#allocation2 + $0x28] sm:$0xff] %v284
  %301 = vst [vmem:[#allocation2 + $0x30] sm:$0xff] %v285
  %302 = vst [vmem:[#allocation2 + $0x38] sm:$0xff] %v286
  %303 = vst [vmem:[#allocation2 + $0x40] sm:$0xff] %v287
  %304 = vst [vmem:[#allocation2 + $0x48] sm:$0xff] %v288
  %305 = vst [vmem:[#allocation2 + $0x50] sm:$0xff] %v289
  %306 = vst [vmem:[#allocation2 + $0x58] sm:$0xff] %v290
  %307 = vst [vmem:[#allocation2 + $0x60] sm:$0xff] %v291
  %308 = vst [vmem:[#allocation2 + $0x68] sm:$0xff] %v292
  %309 = vst [vmem:[#allocation2 + $0x70] sm:$0xff] %v293
  %310 = vst [vmem:[#allocation2 + $0x78] sm:$0xff] %v294
  // Predicated region
  $region22: #{block_forward.22} parent=0 // pred_check
    %p311 = pneg %p18
  $region23: #{block_forward.22} parent=0 // pred_check_branch
    %313 = sbr.rel (%p311) target = $region25
  $region24: #{block_forward.22} parent=0 // pred_region
    %v314 = vld [vmem:[#allocation2] sm:$0xff]
    %v315 = vld [vmem:[#allocation2 + $0x8] sm:$0xff]
    %v316 = vld [vmem:[#allocation2 + $0x10] sm:$0xff]
    %v317 = vld [vmem:[#allocation2 + $0x18] sm:$0xff]
    %v318 = vld [vmem:[#allocation2 + $0x20] sm:$0xff]
    %v319 = vld [vmem:[#allocation2 + $0x28] sm:$0xff]
    %v320 = vld [vmem:[#allocation2 + $0x30] sm:$0xff]
    %v321 = vld [vmem:[#allocation2 + $0x38] sm:$0xff]
    %v322 = vld [vmem:[#allocation2 + $0x40] sm:$0xff]
    %v323 = vld [vmem:[#allocation2 + $0x48] sm:$0xff]
    %v324 = vld [vmem:[#allocation2 + $0x50] sm:$0xff]
    %v325 = vld [vmem:[#allocation2 + $0x58] sm:$0xff]
    %v326 = vld [vmem:[#allocation2 + $0x60] sm:$0xff]
    %v327 = vld [vmem:[#allocation2 + $0x68] sm:$0xff]
    %v328 = vld [vmem:[#allocation2 + $0x70] sm:$0xff]
    %v329 = vld [vmem:[#allocation2 + $0x78] sm:$0xff]
    %v330 = vld [vmem:[%s2] sm:$0x1]
    %v332 = vlaneseq
    %v333 = vshrl.u32 %v332, 7
    %v334 = vsub.s32 0, %v333
    %v335 = vrot.slane %v330, %v334
    %v337 = vadd.f32 %v314, %v335
    %v338 = vadd.f32 %v315, %v335
    %v339 = vadd.f32 %v316, %v335
    %v340 = vadd.f32 %v317, %v335
    %v341 = vadd.f32 %v318, %v335
    %v342 = vadd.f32 %v319, %v335
    %v343 = vadd.f32 %v320, %v335
    %v344 = vadd.f32 %v321, %v335
    %v345 = vadd.f32 %v322, %v335
    %v346 = vadd.f32 %v323, %v335
    %v347 = vadd.f32 %v324, %v335
    %v348 = vadd.f32 %v325, %v335
    %v349 = vadd.f32 %v326, %v335
    %v350 = vadd.f32 %v327, %v335
    %v351 = vadd.f32 %v328, %v335
    %v352 = vadd.f32 %v329, %v335
    %v353 = vld [vmem:[%s3] sm:$0xff]
    %v354 = vld [vmem:[%s3 + $0x8] sm:$0xff]
    %v355 = vld [vmem:[%s3 + $0x10] sm:$0xff]
    %v356 = vld [vmem:[%s3 + $0x18] sm:$0xff]
    %v357 = vld [vmem:[%s3 + $0x20] sm:$0xff]
    %v358 = vld [vmem:[%s3 + $0x28] sm:$0xff]
    %v359 = vld [vmem:[%s3 + $0x30] sm:$0xff]
    %v360 = vld [vmem:[%s3 + $0x38] sm:$0xff]
    %v361 = vld [vmem:[%s3 + $0x40] sm:$0xff]
    %v362 = vld [vmem:[%s3 + $0x48] sm:$0xff]
    %v363 = vld [vmem:[%s3 + $0x50] sm:$0xff]
    %v364 = vld [vmem:[%s3 + $0x58] sm:$0xff]
    %v365 = vld [vmem:[%s3 + $0x60] sm:$0xff]
    %v366 = vld [vmem:[%s3 + $0x68] sm:$0xff]
    %v367 = vld [vmem:[%s3 + $0x70] sm:$0xff]
    %v368 = vld [vmem:[%s3 + $0x78] sm:$0xff]
    %v369 = vadd.f32 %v337, %v353
    %v370 = vadd.f32 %v338, %v354
    %v371 = vadd.f32 %v339, %v355
    %v372 = vadd.f32 %v340, %v356
    %v373 = vadd.f32 %v341, %v357
    %v374 = vadd.f32 %v342, %v358
    %v375 = vadd.f32 %v343, %v359
    %v376 = vadd.f32 %v344, %v360
    %v377 = vadd.f32 %v345, %v361
    %v378 = vadd.f32 %v346, %v362
    %v379 = vadd.f32 %v347, %v363
    %v380 = vadd.f32 %v348, %v364
    %v381 = vadd.f32 %v349, %v365
    %v382 = vadd.f32 %v350, %v366
    %v383 = vadd.f32 %v351, %v367
    %v384 = vadd.f32 %v352, %v368
    %385 = vst [vmem:[%s4] sm:$0xff] %v369
    %386 = vst [vmem:[%s4 + $0x8] sm:$0xff] %v370
    %387 = vst [vmem:[%s4 + $0x10] sm:$0xff] %v371
    %388 = vst [vmem:[%s4 + $0x18] sm:$0xff] %v372
    %389 = vst [vmem:[%s4 + $0x20] sm:$0xff] %v373
    %390 = vst [vmem:[%s4 + $0x28] sm:$0xff] %v374
    %391 = vst [vmem:[%s4 + $0x30] sm:$0xff] %v375
    %392 = vst [vmem:[%s4 + $0x38] sm:$0xff] %v376
    %393 = vst [vmem:[%s4 + $0x40] sm:$0xff] %v377
    %394 = vst [vmem:[%s4 + $0x48] sm:$0xff] %v378
    %395 = vst [vmem:[%s4 + $0x50] sm:$0xff] %v379
    %396 = vst [vmem:[%s4 + $0x58] sm:$0xff] %v380
    %397 = vst [vmem:[%s4 + $0x60] sm:$0xff] %v381
    %398 = vst [vmem:[%s4 + $0x68] sm:$0xff] %v382
    %399 = vst [vmem:[%s4 + $0x70] sm:$0xff] %v383
    %400 = vst [vmem:[%s4 + $0x78] sm:$0xff] %v384
  $region25: #{block_forward.22} parent=0 // pred_fallthru
    _
  // Predicated region
  $region26: #{block_forward.22} parent=0 // pred_check
    _
  $region27: #{block_forward.22} parent=0 // pred_check_branch
    %402 = sbr.rel (0) target = $region29
  $region28: #{block_forward.22} parent=0 // pred_region
    _
  $region29: #{block_forward.22} parent=0 // pred_fallthru
    _
  // Predicated region
  $region30: #{block_forward.22} parent=0 // pred_check
    _
  $region31: #{block_forward.22} parent=0 // pred_check_branch
    %404 = sbr.rel (0) target = $region33
  $region32: #{block_forward.22} parent=0 // pred_region
    _
  $region33: #{block_forward.22} parent=0 // pred_fallthru
    _

// kernel: block_forward.24
$region0: #{block_forward.24}
  #allocation0 [shape = 'u32[]', space=smem, size = 0x4, offset = 0x4, fixed_abs, tag = 'smem constant byte address 0x4 - core index']
  #allocation1 [shape = 'u32[144,128]{1,0:T(1,128)}', space=vmem, size = 0x12000, scoped, tag = 'internal scratch']
  %s0 = inlined_call_operand.vmem [shape: f32[128,32], index: 0, kind: input, shape index: {}]
  %s1 = inlined_call_operand.vmem [shape: f32[1,32], index: 1, kind: input, shape index: {}]
  %s2 = inlined_call_operand.vmem [shape: f32[1,32], index: 2, kind: input, shape index: {}]
  %s3 = inlined_call_operand.vmem [shape: bf16[32,128], index: 3, kind: input, shape index: {}]
  %s4 = inlined_call_operand.vmem [shape: f32[1,128], index: 4, kind: input, shape index: {}]
  %s5 = inlined_call_operand.vmem [shape: bf16[128,128], index: 5, kind: output, shape index: {}]
  %s6 = sld [smem:[#allocation0]]
  $region30: #{block_forward.24} parent=0
    _
  %s8 = ssub.s32 1, %s6
  %s9 = scalar_select 0, %s8, %s6
  // Predicated region
  $region2: #{block_forward.24} parent=0 // pred_check
    _
  $region3: #{block_forward.24} parent=0 // pred_check_branch
    %11 = sbr.rel (0) target = $region5
  $region4: #{block_forward.24} parent=0 // pred_region
    _
  $region5: #{block_forward.24} parent=0 // pred_fallthru
    _
  // Predicated region
  $region6: #{block_forward.24} parent=0 // pred_check
    _
  $region7: #{block_forward.24} parent=0 // pred_check_branch
    %13 = sbr.rel (0) target = $region9
  $region8: #{block_forward.24} parent=0 // pred_region
    _
  $region9: #{block_forward.24} parent=0 // pred_fallthru
    _
  // Predicated region
  $region10: #{block_forward.24} parent=0 // pred_check
    _
  $region11: #{block_forward.24} parent=0 // pred_check_branch
    %15 = sbr.rel (0) target = $region13
  $region12: #{block_forward.24} parent=0 // pred_region
    _
  $region13: #{block_forward.24} parent=0 // pred_fallthru
    _
  // Predicated region
  $region14: #{block_forward.24} parent=0 // pred_check
    _
  $region15: #{block_forward.24} parent=0 // pred_check_branch
    %17 = sbr.rel (0) target = $region17
  $region16: #{block_forward.24} parent=0 // pred_region
    _
  $region17: #{block_forward.24} parent=0 // pred_fallthru
    _
  // Predicated region
  $region18: #{block_forward.24} parent=0 // pred_check
    _
  $region19: #{block_forward.24} parent=0 // pred_check_branch
    %19 = sbr.rel (0) target = $region21
  $region20: #{block_forward.24} parent=0 // pred_region
    _
  $region21: #{block_forward.24} parent=0 // pred_fallthru
    _
  %v21 = vld [vmem:[%s0] sm:$0xff]
  %v22 = vld [vmem:[%s0 + $0x8] sm:$0xff]
  %v23 = vld [vmem:[%s0 + $0x10] sm:$0xff]
  %v24 = vld [vmem:[%s0 + $0x18] sm:$0xff]
  %v25 = vld [vmem:[%s0 + $0x20] sm:$0xff]
  %v26 = vld [vmem:[%s0 + $0x28] sm:$0xff]
  %v27 = vld [vmem:[%s0 + $0x30] sm:$0xff]
  %v28 = vld [vmem:[%s0 + $0x38] sm:$0xff]
  %v29 = vld [vmem:[%s0 + $0x40] sm:$0xff]
  %v30 = vld [vmem:[%s0 + $0x48] sm:$0xff]
  %v31 = vld [vmem:[%s0 + $0x50] sm:$0xff]
  %v32 = vld [vmem:[%s0 + $0x58] sm:$0xff]
  %v33 = vld [vmem:[%s0 + $0x60] sm:$0xff]
  %v34 = vld [vmem:[%s0 + $0x68] sm:$0xff]
  %v35 = vld [vmem:[%s0 + $0x70] sm:$0xff]
  %v36 = vld [vmem:[%s0 + $0x78] sm:$0xff]
  %vm37 = vcmask 261120
  %v38 = vsel %vm37, %v21, 0.0
  %39 = vadd.xlane.f32.xlu0 %v38
  %v40 = vpop.xlane.xlu0 %39
  %v41 = vsel %vm37, %v22, 0.0
  %42 = vadd.xlane.f32.xlu0 %v41
  %v43 = vpop.xlane.xlu0 %42
  %v44 = vsel %vm37, %v23, 0.0
  %45 = vadd.xlane.f32.xlu0 %v44
  %v46 = vpop.xlane.xlu0 %45
  %v47 = vsel %vm37, %v24, 0.0
  %48 = vadd.xlane.f32.xlu0 %v47
  %v49 = vpop.xlane.xlu0 %48
  %v50 = vsel %vm37, %v25, 0.0
  %51 = vadd.xlane.f32.xlu0 %v50
  %v52 = vpop.xlane.xlu0 %51
  %v53 = vsel %vm37, %v26, 0.0
  %54 = vadd.xlane.f32.xlu0 %v53
  %v55 = vpop.xlane.xlu0 %54
  %v56 = vsel %vm37, %v27, 0.0
  %57 = vadd.xlane.f32.xlu0 %v56
  %v58 = vpop.xlane.xlu0 %57
  %v59 = vsel %vm37, %v28, 0.0
  %60 = vadd.xlane.f32.xlu0 %v59
  %v61 = vpop.xlane.xlu0 %60
  %v62 = vsel %vm37, %v29, 0.0
  %63 = vadd.xlane.f32.xlu0 %v62
  %v64 = vpop.xlane.xlu0 %63
  %v65 = vsel %vm37, %v30, 0.0
  %66 = vadd.xlane.f32.xlu0 %v65
  %v67 = vpop.xlane.xlu0 %66
  %v68 = vsel %vm37, %v31, 0.0
  %69 = vadd.xlane.f32.xlu0 %v68
  %v70 = vpop.xlane.xlu0 %69
  %v71 = vsel %vm37, %v32, 0.0
  %72 = vadd.xlane.f32.xlu0 %v71
  %v73 = vpop.xlane.xlu0 %72
  %v74 = vsel %vm37, %v33, 0.0
  %75 = vadd.xlane.f32.xlu0 %v74
  %v76 = vpop.xlane.xlu0 %75
  %v77 = vsel %vm37, %v34, 0.0
  %78 = vadd.xlane.f32.xlu0 %v77
  %v79 = vpop.xlane.xlu0 %78
  %v80 = vsel %vm37, %v35, 0.0
  %81 = vadd.xlane.f32.xlu0 %v80
  %v82 = vpop.xlane.xlu0 %81
  %v83 = vsel %vm37, %v36, 0.0
  %84 = vadd.xlane.f32.xlu0 %v83
  %v85 = vpop.xlane.xlu0 %84
  %v86 = vrcp.pop 32.0
  %v87 = vmul.f32 %v40, %v86
  %v88 = vmul.f32 %v43, %v86
  %v89 = vmul.f32 %v46, %v86
  %v90 = vmul.f32 %v49, %v86
  %v91 = vmul.f32 %v52, %v86
  %v92 = vmul.f32 %v55, %v86
  %v93 = vmul.f32 %v58, %v86
  %v94 = vmul.f32 %v61, %v86
  %v95 = vmul.f32 %v64, %v86
  %v96 = vmul.f32 %v67, %v86
  %v97 = vmul.f32 %v70, %v86
  %v98 = vmul.f32 %v73, %v86
  %v99 = vmul.f32 %v76, %v86
  %v100 = vmul.f32 %v79, %v86
  %v101 = vmul.f32 %v82, %v86
  %v102 = vmul.f32 %v85, %v86
  %v103 = vsub.f32 %v21, %v87
  %v104 = vsub.f32 %v22, %v88
  %v105 = vsub.f32 %v23, %v89
  %v106 = vsub.f32 %v24, %v90
  %v107 = vsub.f32 %v25, %v91
  %v108 = vsub.f32 %v26, %v92
  %v109 = vsub.f32 %v27, %v93
  %v110 = vsub.f32 %v28, %v94
  %v111 = vsub.f32 %v29, %v95
  %v112 = vsub.f32 %v30, %v96
  %v113 = vsub.f32 %v31, %v97
  %v114 = vsub.f32 %v32, %v98
  %v115 = vsub.f32 %v33, %v99
  %v116 = vsub.f32 %v34, %v100
  %v117 = vsub.f32 %v35, %v101
  %v118 = vsub.f32 %v36, %v102
  %v119 = vmul.f32 %v103, %v103
  %v120 = vmul.f32 %v104, %v104
  %v121 = vmul.f32 %v105, %v105
  %v122 = vmul.f32 %v106, %v106
  %v123 = vmul.f32 %v107, %v107
  %v124 = vmul.f32 %v108, %v108
  %v125 = vmul.f32 %v109, %v109
  %v126 = vmul.f32 %v110, %v110
  %v127 = vmul.f32 %v111, %v111
  %v128 = vmul.f32 %v112, %v112
  %v129 = vmul.f32 %v113, %v113
  %v130 = vmul.f32 %v114, %v114
  %v131 = vmul.f32 %v115, %v115
  %v132 = vmul.f32 %v116, %v116
  %v133 = vmul.f32 %v117, %v117
  %v134 = vmul.f32 %v118, %v118
  %v135 = vsel %vm37, %v119, 0.0
  %136 = vadd.xlane.f32.xlu0 %v135
  %v137 = vpop.xlane.xlu0 %136
  %v138 = vsel %vm37, %v120, 0.0
  %139 = vadd.xlane.f32.xlu0 %v138
  %v140 = vpop.xlane.xlu0 %139
  %v141 = vsel %vm37, %v121, 0.0
  %142 = vadd.xlane.f32.xlu0 %v141
  %v143 = vpop.xlane.xlu0 %142
  %v144 = vsel %vm37, %v122, 0.0
  %145 = vadd.xlane.f32.xlu0 %v144
  %v146 = vpop.xlane.xlu0 %145
  %v147 = vsel %vm37, %v123, 0.0
  %148 = vadd.xlane.f32.xlu0 %v147
  %v149 = vpop.xlane.xlu0 %148
  %v150 = vsel %vm37, %v124, 0.0
  %151 = vadd.xlane.f32.xlu0 %v150
  %v152 = vpop.xlane.xlu0 %151
  %v153 = vsel %vm37, %v125, 0.0
  %154 = vadd.xlane.f32.xlu0 %v153
  %v155 = vpop.xlane.xlu0 %154
  %v156 = vsel %vm37, %v126, 0.0
  %157 = vadd.xlane.f32.xlu0 %v156
  %v158 = vpop.xlane.xlu0 %157
  %v159 = vsel %vm37, %v127, 0.0
  %160 = vadd.xlane.f32.xlu0 %v159
  %v161 = vpop.xlane.xlu0 %160
  %v162 = vsel %vm37, %v128, 0.0
  %163 = vadd.xlane.f32.xlu0 %v162
  %v164 = vpop.xlane.xlu0 %163
  %v165 = vsel %vm37, %v129, 0.0
  %166 = vadd.xlane.f32.xlu0 %v165
  %v167 = vpop.xlane.xlu0 %166
  %v168 = vsel %vm37, %v130, 0.0
  %169 = vadd.xlane.f32.xlu0 %v168
  %v170 = vpop.xlane.xlu0 %169
  %v171 = vsel %vm37, %v131, 0.0
  %172 = vadd.xlane.f32.xlu0 %v171
  %v173 = vpop.xlane.xlu0 %172
  %v174 = vsel %vm37, %v132, 0.0
  %175 = vadd.xlane.f32.xlu0 %v174
  %v176 = vpop.xlane.xlu0 %175
  %v177 = vsel %vm37, %v133, 0.0
  %178 = vadd.xlane.f32.xlu0 %v177
  %v179 = vpop.xlane.xlu0 %178
  %v180 = vsel %vm37, %v134, 0.0
  %181 = vadd.xlane.f32.xlu0 %v180
  %v182 = vpop.xlane.xlu0 %181
  %v183 = vmul.f32 %v137, %v86
  %v184 = vmul.f32 %v140, %v86
  %v185 = vmul.f32 %v143, %v86
  %v186 = vmul.f32 %v146, %v86
  %v187 = vmul.f32 %v149, %v86
  %v188 = vmul.f32 %v152, %v86
  %v189 = vmul.f32 %v155, %v86
  %v190 = vmul.f32 %v158, %v86
  %v191 = vmul.f32 %v161, %v86
  %v192 = vmul.f32 %v164, %v86
  %v193 = vmul.f32 %v167, %v86
  %v194 = vmul.f32 %v170, %v86
  %v195 = vmul.f32 %v173, %v86
  %v196 = vmul.f32 %v176, %v86
  %v197 = vmul.f32 %v179, %v86
  %v198 = vmul.f32 %v182, %v86
  %v199 = vadd.f32 %v183, 1e-05
  %v200 = vadd.f32 %v184, 1e-05
  %v201 = vadd.f32 %v185, 1e-05
  %v202 = vadd.f32 %v186, 1e-05
  %v203 = vadd.f32 %v187, 1e-05
  %v204 = vadd.f32 %v188, 1e-05
  %v205 = vadd.f32 %v189, 1e-05
  %v206 = vadd.f32 %v190, 1e-05
  %v207 = vadd.f32 %v191, 1e-05
  %v208 = vadd.f32 %v192, 1e-05
  %v209 = vadd.f32 %v193, 1e-05
  %v210 = vadd.f32 %v194, 1e-05
  %v211 = vadd.f32 %v195, 1e-05
  %v212 = vadd.f32 %v196, 1e-05
  %v213 = vadd.f32 %v197, 1e-05
  %v214 = vadd.f32 %v198, 1e-05
  %v215 = vrsqrt.pop %v199
  %v216 = vrsqrt.pop %v200
  %v217 = vrsqrt.pop %v201
  %v218 = vrsqrt.pop %v202
  %v219 = vrsqrt.pop %v203
  %v220 = vrsqrt.pop %v204
  %v221 = vrsqrt.pop %v205
  %v222 = vrsqrt.pop %v206
  %v223 = vrsqrt.pop %v207
  %v224 = vrsqrt.pop %v208
  %v225 = vrsqrt.pop %v209
  %v226 = vrsqrt.pop %v210
  %v227 = vrsqrt.pop %v211
  %v228 = vrsqrt.pop %v212
  %v229 = vrsqrt.pop %v213
  %v230 = vrsqrt.pop %v214
  %v231 = vmul.f32 %v103, %v215
  %v232 = vmul.f32 %v104, %v216
  %v233 = vmul.f32 %v105, %v217
  %v234 = vmul.f32 %v106, %v218
  %v235 = vmul.f32 %v107, %v219
  %v236 = vmul.f32 %v108, %v220
  %v237 = vmul.f32 %v109, %v221
  %v238 = vmul.f32 %v110, %v222
  %v239 = vmul.f32 %v111, %v223
  %v240 = vmul.f32 %v112, %v224
  %v241 = vmul.f32 %v113, %v225
  %v242 = vmul.f32 %v114, %v226
  %v243 = vmul.f32 %v115, %v227
  %v244 = vmul.f32 %v116, %v228
  %v245 = vmul.f32 %v117, %v229
  %v246 = vmul.f32 %v118, %v230
  %v247 = vld [vmem:[%s1] sm:$0x1]
  %v249 = vlaneseq
  %v250 = vshrl.u32 %v249, 7
  %v251 = vsub.s32 0, %v250
  %v252 = vrot.slane %v247, %v251
  %v254 = vmul.f32 %v231, %v252
  %v255 = vmul.f32 %v232, %v252
  %v256 = vmul.f32 %v233, %v252
  %v257 = vmul.f32 %v234, %v252
  %v258 = vmul.f32 %v235, %v252
  %v259 = vmul.f32 %v236, %v252
  %v260 = vmul.f32 %v237, %v252
  %v261 = vmul.f32 %v238, %v252
  %v262 = vmul.f32 %v239, %v252
  %v263 = vmul.f32 %v240, %v252
  %v264 = vmul.f32 %v241, %v252
  %v265 = vmul.f32 %v242, %v252
  %v266 = vmul.f32 %v243, %v252
  %v267 = vmul.f32 %v244, %v252
  %v268 = vmul.f32 %v245, %v252
  %v269 = vmul.f32 %v246, %v252
  %v270 = vld [vmem:[%s2] sm:$0x1]
  %v272 = vlaneseq
  %v273 = vshrl.u32 %v272, 7
  %v274 = vsub.s32 0, %v273
  %v275 = vrot.slane %v270, %v274
  %v277 = vadd.f32 %v254, %v275
  %v278 = vadd.f32 %v255, %v275
  %v279 = vadd.f32 %v256, %v275
  %v280 = vadd.f32 %v257, %v275
  %v281 = vadd.f32 %v258, %v275
  %v282 = vadd.f32 %v259, %v275
  %v283 = vadd.f32 %v260, %v275
  %v284 = vadd.f32 %v261, %v275
  %v285 = vadd.f32 %v262, %v275
  %v286 = vadd.f32 %v263, %v275
  %v287 = vadd.f32 %v264, %v275
  %v288 = vadd.f32 %v265, %v275
  %v289 = vadd.f32 %v266, %v275
  %v290 = vadd.f32 %v267, %v275
  %v291 = vadd.f32 %v268, %v275
  %v292 = vadd.f32 %v269, %v275
  %v293 = vpack.c.bf16 %v278, %v277
  %v294 = vpack.c.bf16 %v280, %v279
  %v295 = vpack.c.bf16 %v282, %v281
  %v296 = vpack.c.bf16 %v284, %v283
  %v297 = vpack.c.bf16 %v286, %v285
  %v298 = vpack.c.bf16 %v288, %v287
  %v299 = vpack.c.bf16 %v290, %v289
  %v300 = vpack.c.bf16 %v292, %v291
  %v301 = vld [vmem:[%s3] sm:$0xf]
  %v302 = vld [vmem:[%s3 + $0x4] sm:$0xf]
  %v303 = vld [vmem:[%s3 + $0x8] sm:$0xf]
  %v304 = vld [vmem:[%s3 + $0xc] sm:$0xf]
  %v305 = vld [vmem:[%s4] sm:$0x1]
  %v307 = vlaneseq
  %v308 = vshrl.u32 %v307, 7
  %v309 = vsub.s32 0, %v308
  %v310 = vrot.slane %v305, %v309
  %v316 = vunpack.c.l.b16 %v301
  %v317 = vunpack.c.l.b16 %v302
  %v318 = vunpack.c.l.b16 %v303
  %v319 = vunpack.c.l.b16 %v304
  %v320 = vpack.c.b16 %v317, %v316
  %v321 = vpack.c.b16 %v319, %v318
  %v325 = vsel %vm37, %v293, 0
  %v328 = vsel %vm37, %v294, 0
  %v331 = vsel %vm37, %v295, 0
  %v334 = vsel %vm37, %v296, 0
  %v337 = vsel %vm37, %v297, 0
  %v340 = vsel %vm37, %v298, 0
  %v343 = vsel %vm37, %v299, 0
  %v346 = vsel %vm37, %v300, 0
  %348 = vmatprep.subr.bf16.mxu0 0
  %349 = vmatpush1.bf16.msra.mxu0 %v320
  %350 = vmatprep.subr.bf16.mxu0 0
  %351 = vmatpush1.bf16.msra.mxu0 %v321
  %352 = vmatprep.subr.bf16.mxu0 0
  %353 = vmatpush1.bf16.msra.mxu0 0
  %354 = vmatprep.subr.bf16.mxu0 0
  %355 = vmatpush1.bf16.msra.mxu0 0
  %356 = vmatprep.subr.bf16.mxu0 0
  %357 = vmatpush1.bf16.msra.mxu0 0
  %358 = vmatprep.subr.bf16.mxu0 0
  %359 = vmatpush1.bf16.msra.mxu0 0
  %360 = vmatprep.subr.bf16.mxu0 0
  %361 = vmatpush1.bf16.msra.mxu0 0
  %362 = vmatprep.subr.bf16.mxu0 0
  %363 = vmatpush1.bf16.msra.mxu0 0
  %364 = vmatprep.subr.bf16.mxu0 0
  %365 = vmatpush1.bf16.msra.mxu0 0
  %366 = vmatprep.subr.bf16.mxu0 0
  %367 = vmatpush1.bf16.msra.mxu0 0
  %368 = vmatprep.subr.bf16.mxu0 0
  %369 = vmatpush1.bf16.msra.mxu0 0
  %370 = vmatprep.subr.bf16.mxu0 0
  %371 = vmatpush1.bf16.msra.mxu0 0
  %372 = vmatprep.subr.bf16.mxu0 0
  %373 = vmatpush1.bf16.msra.mxu0 0
  %374 = vmatprep.subr.bf16.mxu0 0
  %375 = vmatpush1.bf16.msra.mxu0 0
  %376 = vmatprep.subr.bf16.mxu0 0
  %377 = vmatpush1.bf16.msra.mxu0 0
  %378 = vmatprep.subr.bf16.mxu0 0
  %379 = vmatpush1.bf16.msra.mxu0 0
  %380 = vmatprep.mubr.bf16.mxu0 0
  %381 = vmatmul.mubr.bf16.gmra.mrb[0].mxu0 %v325
  %v382 = vpop.f32.mrb[0].mxu0
  %v383 = vadd.f32 %v310, %v382
  %v384 = vpop.f32.mrb[0].mxu0
  %v385 = vpop.f32.mrb[0].mxu0
  %v386 = vadd.f32 %v310, %v385
  %v387 = vpop.f32.mrb[0].mxu0
  %388 = vmatprep.mubr.bf16.mxu0 0
  %389 = vmatmul.mubr.bf16.gmra.mrb[0].mxu0 %v328
  %v390 = vpop.f32.mrb[0].mxu0
  %v391 = vadd.f32 %v310, %v390
  %v392 = vpop.f32.mrb[0].mxu0
  %v393 = vpop.f32.mrb[0].mxu0
  %v394 = vadd.f32 %v310, %v393
  %v395 = vpop.f32.mrb[0].mxu0
  %396 = vmatprep.mubr.bf16.mxu0 0
  %397 = vmatmul.mubr.bf16.gmra.mrb[0].mxu0 %v331
  %v398 = vpop.f32.mrb[0].mxu0
  %v399 = vadd.f32 %v310, %v398
  %v400 = vpop.f32.mrb[0].mxu0
  %v401 = vpop.f32.mrb[0].mxu0
  %v402 = vadd.f32 %v310, %v401
  %v403 = vpop.f32.mrb[0].mxu0
  %404 = vmatprep.mubr.bf16.mxu0 0
  %405 = vmatmul.mubr.bf16.gmra.mrb[0].mxu0 %v334
  %v406 = vpop.f32.mrb[0].mxu0
  %v407 = vadd.f32 %v310, %v406
  %v408 = vpop.f32.mrb[0].mxu0
  %v409 = vpop.f32.mrb[0].mxu0
  %v410 = vadd.f32 %v310, %v409
  %v411 = vpop.f32.mrb[0].mxu0
  %412 = vmatprep.mubr.bf16.mxu0 0
  %413 = vmatmul.mubr.bf16.gmra.mrb[0].mxu0 %v337
  %v414 = vpop.f32.mrb[0].mxu0
  %v415 = vadd.f32 %v310, %v414
  %v416 = vpop.f32.mrb[0].mxu0
  %v417 = vpop.f32.mrb[0].mxu0
  %v418 = vadd.f32 %v310, %v417
  %v419 = vpop.f32.mrb[0].mxu0
  %420 = vmatprep.mubr.bf16.mxu0 0
  %421 = vmatmul.mubr.bf16.gmra.mrb[0].mxu0 %v340
  %v422 = vpop.f32.mrb[0].mxu0
  %v423 = vadd.f32 %v310, %v422
  %v424 = vpop.f32.mrb[0].mxu0
  %v425 = vpop.f32.mrb[0].mxu0
  %v426 = vadd.f32 %v310, %v425
  %v427 = vpop.f32.mrb[0].mxu0
  %428 = vmatprep.mubr.bf16.mxu0 0
  %429 = vmatmul.mubr.bf16.gmra.mrb[0].mxu0 %v343
  %v430 = vpop.f32.mrb[0].mxu0
  %v431 = vadd.f32 %v310, %v430
  %v432 = vpop.f32.mrb[0].mxu0
  %v433 = vpop.f32.mrb[0].mxu0
  %v434 = vadd.f32 %v310, %v433
  %v435 = vpop.f32.mrb[0].mxu0
  %436 = vmatprep.mubr.bf16.mxu0 0
  %437 = vmatmul.mubr.bf16.gmra.mrb[0].mxu0 %v346
  %v438 = vpop.f32.mrb[0].mxu0
  %v439 = vadd.f32 %v310, %v438
  %v440 = vpop.f32.mrb[0].mxu0
  %v441 = vpop.f32.mrb[0].mxu0
  %v442 = vadd.f32 %v310, %v441
  %v443 = vpop.f32.mrb[0].mxu0
  %444 = vdwg.mxu0
  %v445 = vmax.f32 %v383, 0.0
  %v446 = vmax.f32 %v386, 0.0
  %v447 = vmax.f32 %v391, 0.0
  %v448 = vmax.f32 %v394, 0.0
  %v449 = vmax.f32 %v399, 0.0
  %v450 = vmax.f32 %v402, 0.0
  %v451 = vmax.f32 %v407, 0.0
  %v452 = vmax.f32 %v410, 0.0
  %v453 = vmax.f32 %v415, 0.0
  %v454 = vmax.f32 %v418, 0.0
  %v455 = vmax.f32 %v423, 0.0
  %v456 = vmax.f32 %v426, 0.0
  %v457 = vmax.f32 %v431, 0.0
  %v458 = vmax.f32 %v434, 0.0
  %v459 = vmax.f32 %v439, 0.0
  %v460 = vmax.f32 %v442, 0.0
  %v461 = vpack.c.bf16 %v446, %v445
  %v462 = vpack.c.bf16 %v448, %v447
  %v463 = vpack.c.bf16 %v450, %v449
  %v464 = vpack.c.bf16 %v452, %v451
  %v465 = vpack.c.bf16 %v454, %v453
  %v466 = vpack.c.bf16 %v456, %v455
  %v467 = vpack.c.bf16 %v458, %v457
  %v468 = vpack.c.bf16 %v460, %v459
  %v477 = vunpack.c.l.b16 %v461
  %v478 = vunpack.c.h.b16 %v461
  %v479 = vunpack.c.l.b16 %v462
  %v480 = vunpack.c.h.b16 %v462
  %v481 = vunpack.c.l.b16 %v463
  %v482 = vunpack.c.h.b16 %v463
  %v483 = vunpack.c.l.b16 %v464
  %v484 = vunpack.c.h.b16 %v464
  %v485 = vunpack.c.l.b16 %v465
  %v486 = vunpack.c.h.b16 %v465
  %v487 = vunpack.c.l.b16 %v466
  %v488 = vunpack.c.h.b16 %v466
  %v489 = vunpack.c.l.b16 %v467
  %v490 = vunpack.c.h.b16 %v467
  %v491 = vunpack.c.l.b16 %v468
  %v492 = vunpack.c.h.b16 %v468
  %v493 = vpack.c.b16 %v477, %v477
  %v494 = vpack.c.b16 %v478, %v478
  %v495 = vpack.c.b16 %v479, %v479
  %v496 = vpack.c.b16 %v480, %v480
  %v497 = vpack.c.b16 %v481, %v481
  %v498 = vpack.c.b16 %v482, %v482
  %v499 = vpack.c.b16 %v483, %v483
  %v500 = vpack.c.b16 %v484, %v484
  %v501 = vpack.c.b16 %v485, %v485
  %v502 = vpack.c.b16 %v486, %v486
  %v503 = vpack.c.b16 %v487, %v487
  %v504 = vpack.c.b16 %v488, %v488
  %v505 = vpack.c.b16 %v489, %v489
  %v506 = vpack.c.b16 %v490, %v490
  %v507 = vpack.c.b16 %v491, %v491
  %v508 = vpack.c.b16 %v492, %v492
  %525 = vst [vmem:[%s5] sm:$0xf] %v493
  %526 = vst [vmem:[%s5 + $0x4] sm:$0xf] %v494
  %527 = vst [vmem:[%s5 + $0x8] sm:$0xf] %v495
  %528 = vst [vmem:[%s5 + $0xc] sm:$0xf] %v496
  %529 = vst [vmem:[%s5 + $0x10] sm:$0xf] %v497
  %530 = vst [vmem:[%s5 + $0x14] sm:$0xf] %v498
  %531 = vst [vmem:[%s5 + $0x18] sm:$0xf] %v499
  %532 = vst [vmem:[%s5 + $0x1c] sm:$0xf] %v500
  %533 = vst [vmem:[%s5 + $0x20] sm:$0xf] %v501
  %534 = vst [vmem:[%s5 + $0x24] sm:$0xf] %v502
  %535 = vst [vmem:[%s5 + $0x28] sm:$0xf] %v503
  %536 = vst [vmem:[%s5 + $0x2c] sm:$0xf] %v504
  %537 = vst [vmem:[%s5 + $0x30] sm:$0xf] %v505
  %538 = vst [vmem:[%s5 + $0x34] sm:$0xf] %v506
  %539 = vst [vmem:[%s5 + $0x38] sm:$0xf] %v507
  %540 = vst [vmem:[%s5 + $0x3c] sm:$0xf] %v508
  // Predicated region
  $region22: #{block_forward.24} parent=0 // pred_check
    _
  $region23: #{block_forward.24} parent=0 // pred_check_branch
    %542 = sbr.rel (0) target = $region25
  $region24: #{block_forward.24} parent=0 // pred_region
    _
  $region25: #{block_forward.24} parent=0 // pred_fallthru
    _
  // Predicated region
  $region26: #{block_forward.24} parent=0 // pred_check
    _
  $region27: #{block_forward.24} parent=0 // pred_check_branch
    %544 = sbr.rel (0) target = $region29
  $region28: #{block_forward.24} parent=0 // pred_region
    _
  $region29: #{block_forward.24} parent=0 // pred_fallthru
    _

</llo_original>
